<compile_context>
chip_gen: v6e
topology: v6e:2x2x1
jax: 0.10.0
libtpu: 0.0.40
codegen_flags: <defaults>
</compile_context>

<pallas_src>
import functools

import jax
import jax.numpy as jnp
from jax.experimental import pallas as pl
from jax.experimental.pallas import tpu as pltpu

# ----------------------------- tiny synthetic config -----------------------------
VOCAB = 512
HIDDEN = 256
NUM_HEADS = 2
HEAD_DIM = HIDDEN // NUM_HEADS          # 128, matches real LLaMA head_dim
INTERMEDIATE = 512
NUM_LAYERS = 2
RMS_EPS = 1e-6
ROPE_THETA = 10000.0

BATCH = 2
SEQ = 16

ACT_DTYPE = jnp.bfloat16                # activations + weights; accumulation in f32


# ----------------------------- in-kernel helpers -----------------------------
def _rmsnorm_f32(x, w, eps):
    var = jnp.mean(x * x, axis=-1, keepdims=True)
    return x * jax.lax.rsqrt(var + eps) * w


# ----------------------------- fused full-forward kernel -----------------------------
def _fused_forward_kernel(h_in_ref, ln1_ref, wqkv_ref, wo_ref, ln2_ref, wgu_ref,
                          wdown_ref, cos_ref, sin_ref, normw_ref, lmhead_ref,
                          k_ref, v_ref, logits_ref, h_scr,
                          *, num_heads, head_dim, intermediate, num_layers, eps):
    layer = pl.program_id(1)                                      # "arbitrary" layer axis
    S = h_in_ref.shape[1]
    H = num_heads * head_dim
    half = head_dim // 2
    scale = 1.0 / float(head_dim) ** 0.5

    # Resident hidden state: initialize from the embedding output at layer 0 only.
    @pl.when(layer == 0)
    def _():
        h_scr[...] = h_in_ref[0].astype(jnp.float32)

    x = h_scr[...]                                                # [S, H] f32

    # ---------------- attention ----------------
    xn = _rmsnorm_f32(x, ln1_ref[0].astype(jnp.float32), eps)     # [S, H]
    qkv = jnp.dot(xn.astype(wqkv_ref.dtype), wqkv_ref[0],
                  preferred_element_type=jnp.float32)             # [S, 3H]

    cos = cos_ref[...].astype(jnp.float32)                        # [S, D]
    sin = sin_ref[...].astype(jnp.float32)
    # rotate_half(x) == roll(x, D/2 lanes) with sign (-1 on first-half lanes).
    # sin_signed hoisted out of the (statically unrolled) head loop.
    lane = jax.lax.broadcasted_iota(jnp.int32, (S, head_dim), 1)
    sin_signed = jnp.where(lane < half, -sin, sin)

    rowi = jax.lax.broadcasted_iota(jnp.int32, (S, S), 0)
    coli = jax.lax.broadcasted_iota(jnp.int32, (S, S), 1)
    causal = coli <= rowi

    ctx_heads, k_heads, v_heads = [], [], []
    for hd in range(num_heads):                                   # static unroll (NH small)
        lo = hd * head_dim
        qh = qkv[:, lo:lo + head_dim]
        kh = qkv[:, H + lo:H + lo + head_dim]
        vh = qkv[:, 2 * H + lo:2 * H + lo + head_dim]

        # RoPE via XLU lane rotation (no concatenation needed)
        qh = qh * cos + pltpu.roll(qh, half, axis=1) * sin_signed
        kh = kh * cos + pltpu.roll(kh, half, axis=1) * sin_signed
        k_heads.append(kh)
        v_heads.append(vh)

        # scores = q @ k^T (bf16 MXU, f32 accumulation), causal softmax in f32
        scores = jax.lax.dot_general(
            qh.astype(jnp.bfloat16), kh.astype(jnp.bfloat16),
            (((1,), (1,)), ((), ())),
            preferred_element_type=jnp.float32) * scale           # [S, S]
        scores = jnp.where(causal, scores, jnp.float32(-1e30))
        m = jnp.max(scores, axis=-1, keepdims=True)
        p = jnp.exp(scores - m)
        denom = jnp.sum(p, axis=-1, keepdims=True)
        p = p * pl.reciprocal(denom, approx=False)                # exact normalization

        ctx_heads.append(jnp.dot(p.astype(jnp.bfloat16), vh.astype(jnp.bfloat16),
                                 preferred_element_type=jnp.float32))  # [S, D]

    # Batched, lane-dense KV-cache stores: one [NH, S, D] store per cache per layer.
    k_ref[0, 0] = jnp.stack(k_heads, axis=0).astype(k_ref.dtype)
    v_ref[0, 0] = jnp.stack(v_heads, axis=0).astype(v_ref.dtype)

    # Single K=H output projection (full-width MXU) instead of NH per-head dots.
    ctx = jnp.concatenate(ctx_heads, axis=-1)                     # [S, H]
    attn_out = jnp.dot(ctx.astype(wo_ref.dtype), wo_ref[0],
                       preferred_element_type=jnp.float32)        # [S, H]
    h1 = x + attn_out                                             # residual

    # ---------------- MLP ----------------
    xn2 = _rmsnorm_f32(h1, ln2_ref[0].astype(jnp.float32), eps)
    gu = jnp.dot(xn2.astype(wgu_ref.dtype), wgu_ref[0],
                 preferred_element_type=jnp.float32)              # [S, 2I]
    g = gu[:, :intermediate]
    u = gu[:, intermediate:]
    act = g * jax.lax.logistic(g) * u                             # SiLU(g) * u
    down = jnp.dot(act.astype(wdown_ref.dtype), wdown_ref[0],
                   preferred_element_type=jnp.float32)            # [S, H]
    h2 = h1 + down                                                # residual

    h_scr[...] = h2                                               # carry to next layer

    # ---------------- final norm + lm_head (last layer step only) ----------------
    @pl.when(layer == num_layers - 1)
    def _():
        xf = _rmsnorm_f32(h2, normw_ref[...].astype(jnp.float32), eps)
        logits_ref[0] = jnp.dot(xf.astype(lmhead_ref.dtype), lmhead_ref[...],
                                preferred_element_type=jnp.float32)   # f32 logits


def fused_forward(h, layer_w, cos, sin, norm_w, lm_head):
    B, S, H = h.shape
    L, NH, D, I = NUM_LAYERS, NUM_HEADS, HEAD_DIM, INTERMEDIATE
    V = lm_head.shape[1]

    kernel = functools.partial(_fused_forward_kernel, num_heads=NH, head_dim=D,
                               intermediate=I, num_layers=L, eps=RMS_EPS)

    layer_map = lambda b, l: (l, 0, 0)     # per-layer stacked weights
    const_map = lambda b, l: (0, 0)        # layer-invariant inputs (fetched once per b)

    return pl.pallas_call(
        kernel,
        out_shape=(
            jax.ShapeDtypeStruct((B, L, NH, S, D), h.dtype),      # K cache
            jax.ShapeDtypeStruct((B, L, NH, S, D), h.dtype),      # V cache
            jax.ShapeDtypeStruct((B, S, V), jnp.float32),         # logits
        ),
        grid=(B, L),
        in_specs=[
            pl.BlockSpec((1, S, H), lambda b, l: (b, 0, 0)),      # embedding output
            pl.BlockSpec((1, 1, H), layer_map),                   # ln1  [L,1,H]
            pl.BlockSpec((1, H, 3 * H), layer_map),               # wqkv [L,H,3H]
            pl.BlockSpec((1, H, H), layer_map),                   # wo   [L,H,H]
            pl.BlockSpec((1, 1, H), layer_map),                   # ln2  [L,1,H]
            pl.BlockSpec((1, H, 2 * I), layer_map),               # wgu  [L,H,2I]
            pl.BlockSpec((1, I, H), layer_map),                   # wdown[L,I,H]
            pl.BlockSpec((S, D), const_map),                      # cos
            pl.BlockSpec((S, D), const_map),                      # sin
            pl.BlockSpec((1, H), const_map),                      # final norm weight
            pl.BlockSpec((H, V), const_map),                      # lm_head
        ],
        out_specs=(
            pl.BlockSpec((1, 1, NH, S, D), lambda b, l: (b, l, 0, 0, 0)),
            pl.BlockSpec((1, 1, NH, S, D), lambda b, l: (b, l, 0, 0, 0)),
            pl.BlockSpec((1, S, V), lambda b, l: (b, 0, 0)),      # resident across l
        ),
        scratch_shapes=[pltpu.VMEM((S, H), jnp.float32)],         # resident hidden state
        compiler_params=pltpu.CompilerParams(
            dimension_semantics=("parallel", "arbitrary")),
    )(h, layer_w["ln1"], layer_w["wqkv"], layer_w["wo"], layer_w["ln2"],
      layer_w["wgu"], layer_w["wdown"], cos, sin, norm_w, lm_head)


# ----------------------------- RoPE table (plain-JAX glue, data-independent) -----------------------------
def rope_cos_sin(seq_len, head_dim, theta=ROPE_THETA):
    inv_freq = 1.0 / (theta ** (jnp.arange(0, head_dim, 2, dtype=jnp.float32) / head_dim))
    pos = jnp.arange(seq_len, dtype=jnp.float32)
    freqs = jnp.outer(pos, inv_freq)                 # [S, D/2]
    emb = jnp.concatenate([freqs, freqs], axis=-1)   # [S, D]
    return jnp.cos(emb), jnp.sin(emb)


# ----------------------------- model params (layer-stacked packed weights) -----------------------------
def init_params(key):
    def dense(k, shape, scale=0.02):
        return (scale * jax.random.normal(k, shape, dtype=jnp.float32)).astype(ACT_DTYPE)

    keys = jax.random.split(key, 2 + NUM_LAYERS)
    wqkv, wo, wgu, wdown = [], [], [], []
    for l in range(NUM_LAYERS):
        lk = jax.random.split(keys[2 + l], 4)
        wqkv.append(dense(lk[0], (HIDDEN, 3 * HIDDEN)))           # packed Q|K|V
        wo.append(dense(lk[1], (HIDDEN, HIDDEN)))
        wgu.append(dense(lk[2], (HIDDEN, 2 * INTERMEDIATE)))      # packed gate|up
        wdown.append(dense(lk[3], (INTERMEDIATE, HIDDEN)))

    return {
        "embed": dense(keys[0], (VOCAB, HIDDEN)),
        "final_norm": jnp.ones((1, HIDDEN), ACT_DTYPE),
        "lm_head": dense(keys[1], (HIDDEN, VOCAB)),
        "layers": {
            "ln1": jnp.ones((NUM_LAYERS, 1, HIDDEN), ACT_DTYPE),
            "ln2": jnp.ones((NUM_LAYERS, 1, HIDDEN), ACT_DTYPE),
            "wqkv": jnp.stack(wqkv),      # [L, H, 3H]
            "wo": jnp.stack(wo),          # [L, H, H]
            "wgu": jnp.stack(wgu),        # [L, H, 2I]
            "wdown": jnp.stack(wdown),    # [L, I, H]
        },
    }


# ----------------------------- forward (== FirstVicuna.forward) -----------------------------
def first_vicuna_forward(params, input_ids):
    """Returns (logits, k_0, v_0, k_1, v_1, ...) exactly like FirstVicuna.forward."""
    B, S = input_ids.shape
    # Embedding gather is data-dependent row gather -> plain-JAX glue.
    h = jnp.take(params["embed"], input_ids, axis=0)              # [B, S, H]
    cos, sin = rope_cos_sin(S, HEAD_DIM)                          # [S, D] f32

    k_all, v_all, logits = fused_forward(h, params["layers"], cos, sin,
                                         params["final_norm"], params["lm_head"])

    return_vals = [logits]
    for l in range(NUM_LAYERS):
        return_vals.append(k_all[:, l])                           # [B, NH, S, D]
        return_vals.append(v_all[:, l])
    return tuple(return_vals)


# ----------------------------- main -----------------------------
if __name__ == "__main__":
    key = jax.random.PRNGKey(0)
    pkey, dkey = jax.random.split(key)
    params = init_params(pkey)
    input_ids = jax.random.randint(dkey, (BATCH, SEQ), 0, VOCAB, dtype=jnp.int32)

    outputs = jax.jit(first_vicuna_forward)(params, input_ids)
    outputs = jax.block_until_ready(outputs)

    logits = outputs[0]
    assert logits.shape == (BATCH, SEQ, VOCAB)
    assert logits.dtype == jnp.float32
    assert len(outputs) == 1 + 2 * NUM_LAYERS
    for i in range(NUM_LAYERS):
        assert outputs[1 + 2 * i].shape == (BATCH, NUM_HEADS, SEQ, HEAD_DIM)
        assert outputs[2 + 2 * i].shape == (BATCH, NUM_HEADS, SEQ, HEAD_DIM)
    assert bool(jnp.all(jnp.isfinite(logits)))

    print("KERNEL_OK")
</pallas_src>

<mosaic_0001>
module attributes {stable_mosaic.version = 11 : i64} {
  func.func @_fused_forward_kernel(%arg0: i32, %arg1: i32, %arg2: memref<1x16x256xbf16, #tpu.memory_space<vmem>>, %arg3: memref<1x1x256xbf16, #tpu.memory_space<vmem>>, %arg4: memref<1x256x768xbf16, #tpu.memory_space<vmem>>, %arg5: memref<1x256x256xbf16, #tpu.memory_space<vmem>>, %arg6: memref<1x1x256xbf16, #tpu.memory_space<vmem>>, %arg7: memref<1x256x1024xbf16, #tpu.memory_space<vmem>>, %arg8: memref<1x512x256xbf16, #tpu.memory_space<vmem>>, %arg9: memref<16x128xf32, #tpu.memory_space<vmem>>, %arg10: memref<16x128xf32, #tpu.memory_space<vmem>>, %arg11: memref<1x256xbf16, #tpu.memory_space<vmem>>, %arg12: memref<256x512xbf16, #tpu.memory_space<vmem>>, %arg13: memref<1x1x2x16x128xbf16, #tpu.memory_space<vmem>>, %arg14: memref<1x1x2x16x128xbf16, #tpu.memory_space<vmem>>, %arg15: memref<1x16x512xf32, #tpu.memory_space<vmem>>, %arg16: memref<16x256xf32, #tpu.memory_space<vmem>>) attributes {dimension_semantics = [#tpu.dimension_semantics<parallel>, #tpu.dimension_semantics<arbitrary>], iteration_bounds = array<i64: 2, 2>, scalar_prefetch = 0 : i64, scratch_operands = 1 : i64, tpu.core_type = #tpu.core_type<tc>, window_params = [{transform_indices = @transform_0, window_bounds = array<i64: 1, 16, 256>}, {transform_indices = @transform_1, window_bounds = array<i64: 1, 1, 256>}, {transform_indices = @transform_2, window_bounds = array<i64: 1, 256, 768>}, {transform_indices = @transform_3, window_bounds = array<i64: 1, 256, 256>}, {transform_indices = @transform_4, window_bounds = array<i64: 1, 1, 256>}, {transform_indices = @transform_5, window_bounds = array<i64: 1, 256, 1024>}, {transform_indices = @transform_6, window_bounds = array<i64: 1, 512, 256>}, {pipeline_mode = #tpu.pipeline_mode<synchronous>, transform_indices = @transform_7, window_bounds = array<i64: 16, 128>}, {pipeline_mode = #tpu.pipeline_mode<synchronous>, transform_indices = @transform_8, window_bounds = array<i64: 16, 128>}, {pipeline_mode = #tpu.pipeline_mode<synchronous>, transform_indices = @transform_9, window_bounds = array<i64: 1, 256>}, {pipeline_mode = #tpu.pipeline_mode<synchronous>, transform_indices = @transform_10, window_bounds = array<i64: 256, 512>}, {transform_indices = @transform_11, window_bounds = array<i64: 1, 1, 2, 16, 128>}, {transform_indices = @transform_12, window_bounds = array<i64: 1, 1, 2, 16, 128>}, {transform_indices = @transform_13, window_bounds = array<i64: 1, 16, 512>}]} {
    %c0_i32 = arith.constant 0 : i32
    %0 = arith.cmpi eq, %arg1, %c0_i32 : i32
    %1 = arith.extui %0 : i1 to i32
    %c0_i32_0 = arith.constant 0 : i32
    %2 = arith.cmpi ne, %1, %c0_i32_0 : i32
    scf.if %2 {
      %c0_64 = arith.constant 0 : index
      %c0_65 = arith.constant 0 : index
      %c0_66 = arith.constant 0 : index
      %153 = vector.load %arg2[%c0_64, %c0_65, %c0_66] : memref<1x16x256xbf16, #tpu.memory_space<vmem>>, vector<1x16x256xbf16>
      %154 = vector.shape_cast %153 : vector<1x16x256xbf16> to vector<16x256xbf16>
      %155 = arith.extf %154 : vector<16x256xbf16> to vector<16x256xf32>
      %c0_67 = arith.constant 0 : index
      %c0_68 = arith.constant 0 : index
      %156 = vector.load %arg16[%c0_67, %c0_68] : memref<16x256xf32, #tpu.memory_space<vmem>>, vector<16x256xf32>
      tpu.vector_store %arg16[%c0_67, %c0_68], %155 {strides = array<i32>} : memref<16x256xf32, #tpu.memory_space<vmem>>, vector<16x256xf32>,
    } else {
    }
    %c0 = arith.constant 0 : index
    %c0_1 = arith.constant 0 : index
    %3 = vector.load %arg16[%c0, %c0_1] : memref<16x256xf32, #tpu.memory_space<vmem>>, vector<16x256xf32>
    %c0_2 = arith.constant 0 : index
    %c0_3 = arith.constant 0 : index
    %c0_4 = arith.constant 0 : index
    %4 = vector.load %arg3[%c0_2, %c0_3, %c0_4] : memref<1x1x256xbf16, #tpu.memory_space<vmem>>, vector<1x1x256xbf16>
    %5 = vector.shape_cast %4 : vector<1x1x256xbf16> to vector<1x256xbf16>
    %6 = arith.extf %5 : vector<1x256xbf16> to vector<1x256xf32>
    %7 = arith.mulf %3, %3 : vector<16x256xf32>
    %cst = arith.constant dense<0.000000e+00> : vector<16xf32>
    %8 = vector.multi_reduction <add>, %7, %cst [1] : vector<16x256xf32> to vector<16xf32>
    %9 = vector.shape_cast %8 : vector<16xf32> to vector<16x1xf32>
    %cst_5 = arith.constant 2.560000e+02 : f32
    %10 = vector.broadcast %cst_5 : f32 to vector<16x1xf32>
    %11 = arith.divf %9, %10 : vector<16x1xf32>
    %cst_6 = arith.constant 9.99999997E-7 : f32
    %12 = vector.broadcast %cst_6 : f32 to vector<16x1xf32>
    %13 = arith.addf %11, %12 : vector<16x1xf32>
    %14 = math.rsqrt %13 : vector<16x1xf32>
    %15 = vector.broadcast %14 : vector<16x1xf32> to vector<16x256xf32>
    %16 = arith.mulf %3, %15 : vector<16x256xf32>
    %17 = vector.broadcast %6 : vector<1x256xf32> to vector<16x256xf32>
    %18 = arith.mulf %16, %17 : vector<16x256xf32>
    %19 = arith.truncf %18 : vector<16x256xf32> to vector<16x256xbf16>
    %c0_7 = arith.constant 0 : index
    %c0_8 = arith.constant 0 : index
    %c0_9 = arith.constant 0 : index
    %20 = vector.load %arg4[%c0_7, %c0_8, %c0_9] : memref<1x256x768xbf16, #tpu.memory_space<vmem>>, vector<1x256x768xbf16>
    %21 = vector.shape_cast %20 : vector<1x256x768xbf16> to vector<256x768xbf16>
    %cst_10 = arith.constant dense<0.000000e+00> : vector<16x768xf32>
    %22 = tpu.matmul %19, %21, %cst_10 {dimension_numbers = #tpu.dot_dimension_numbers<[1], [0], [0], [1], [0, 0, 1, 1], [], []>} : vector<16x256xbf16>, vector<256x768xbf16>, vector<16x768xf32> -> vector<16x768xf32>
    %c0_11 = arith.constant 0 : index
    %c0_12 = arith.constant 0 : index
    %23 = vector.load %arg9[%c0_11, %c0_12] : memref<16x128xf32, #tpu.memory_space<vmem>>, vector<16x128xf32>
    %c0_13 = arith.constant 0 : index
    %c0_14 = arith.constant 0 : index
    %24 = vector.load %arg10[%c0_13, %c0_14] : memref<16x128xf32, #tpu.memory_space<vmem>>, vector<16x128xf32>
    %25 = tpu.iota {dimensions = array<i32: 1>} : vector<16x128xi32>
    %c64_i32 = arith.constant 64 : i32
    %26 = vector.broadcast %c64_i32 : i32 to vector<16x128xi32>
    %27 = arith.cmpi slt, %25, %26 : vector<16x128xi32>
    %cst_15 = arith.constant 0.000000e+00 : f32
    %28 = vector.broadcast %cst_15 : f32 to vector<16x128xf32>
    %29 = arith.subf %28, %24 : vector<16x128xf32>
    %30 = arith.select %27, %29, %24 : vector<16x128xi1>, vector<16x128xf32>
    %31 = tpu.iota {dimensions = array<i32: 0>} : vector<16x16xi32>
    %32 = tpu.iota {dimensions = array<i32: 1>} : vector<16x16xi32>
    %33 = arith.cmpi sle, %32, %31 : vector<16x16xi32>
    %34 = vector.extract_strided_slice %22 {offsets = [0, 0], sizes = [16, 128], strides = [1, 1]} : vector<16x768xf32> to vector<16x128xf32>
    %35 = vector.extract_strided_slice %22 {offsets = [0, 256], sizes = [16, 128], strides = [1, 1]} : vector<16x768xf32> to vector<16x128xf32>
    %36 = vector.extract_strided_slice %22 {offsets = [0, 512], sizes = [16, 128], strides = [1, 1]} : vector<16x768xf32> to vector<16x128xf32>
    %37 = arith.mulf %34, %23 : vector<16x128xf32>
    %c64_i32_16 = arith.constant 64 : i32
    %38 = tpu.dynamic_rotate %34 by %c64_i32_16 dim 1 : vector<16x128xf32>, i32 -> vector<16x128xf32>
    %39 = arith.mulf %38, %30 : vector<16x128xf32>
    %40 = arith.addf %37, %39 : vector<16x128xf32>
    %41 = arith.mulf %35, %23 : vector<16x128xf32>
    %c64_i32_17 = arith.constant 64 : i32
    %42 = tpu.dynamic_rotate %35 by %c64_i32_17 dim 1 : vector<16x128xf32>, i32 -> vector<16x128xf32>
    %43 = arith.mulf %42, %30 : vector<16x128xf32>
    %44 = arith.addf %41, %43 : vector<16x128xf32>
    %45 = arith.truncf %40 : vector<16x128xf32> to vector<16x128xbf16>
    %46 = arith.truncf %44 : vector<16x128xf32> to vector<16x128xbf16>
    %cst_18 = arith.constant dense<0.000000e+00> : vector<16x16xf32>
    %47 = tpu.matmul %45, %46, %cst_18 {dimension_numbers = #tpu.dot_dimension_numbers<[1], [1], [0], [0], [0, 0, 1, 0], [], []>} : vector<16x128xbf16>, vector<16x128xbf16>, vector<16x16xf32> -> vector<16x16xf32>
    %cst_19 = arith.constant 0.0883883461 : f32
    %48 = vector.broadcast %cst_19 : f32 to vector<16x16xf32>
    %49 = arith.mulf %47, %48 : vector<16x16xf32>
    %cst_20 = arith.constant -1.000000e+30 : f32
    %50 = vector.broadcast %cst_20 : f32 to vector<16x16xf32>
    %51 = arith.select %33, %49, %50 : vector<16x16xi1>, vector<16x16xf32>
    %cst_21 = arith.constant dense<0xFF800000> : vector<16xf32>
    %52 = vector.multi_reduction <maximumf>, %51, %cst_21 [1] : vector<16x16xf32> to vector<16xf32>
    %53 = vector.shape_cast %52 : vector<16xf32> to vector<16x1xf32>
    %54 = vector.broadcast %53 : vector<16x1xf32> to vector<16x16xf32>
    %55 = arith.subf %51, %54 : vector<16x16xf32>
    %56 = math.exp %55 : vector<16x16xf32>
    %cst_22 = arith.constant dense<0.000000e+00> : vector<16xf32>
    %57 = vector.multi_reduction <add>, %56, %cst_22 [1] : vector<16x16xf32> to vector<16xf32>
    %58 = vector.shape_cast %57 : vector<16xf32> to vector<16x1xf32>
    %59 = tpu.reciprocal %58 : vector<16x1xf32> -> vector<16x1xf32>
    %60 = vector.broadcast %59 : vector<16x1xf32> to vector<16x16xf32>
    %61 = arith.mulf %56, %60 : vector<16x16xf32>
    %62 = arith.truncf %61 : vector<16x16xf32> to vector<16x16xbf16>
    %63 = arith.truncf %36 : vector<16x128xf32> to vector<16x128xbf16>
    %cst_23 = arith.constant dense<0.000000e+00> : vector<16x128xf32>
    %64 = tpu.matmul %62, %63, %cst_23 {dimension_numbers = #tpu.dot_dimension_numbers<[1], [0], [0], [1], [0, 0, 1, 1], [], []>} : vector<16x16xbf16>, vector<16x128xbf16>, vector<16x128xf32> -> vector<16x128xf32>
    %65 = vector.extract_strided_slice %22 {offsets = [0, 128], sizes = [16, 128], strides = [1, 1]} : vector<16x768xf32> to vector<16x128xf32>
    %66 = vector.extract_strided_slice %22 {offsets = [0, 384], sizes = [16, 128], strides = [1, 1]} : vector<16x768xf32> to vector<16x128xf32>
    %67 = vector.extract_strided_slice %22 {offsets = [0, 640], sizes = [16, 128], strides = [1, 1]} : vector<16x768xf32> to vector<16x128xf32>
    %68 = arith.mulf %65, %23 : vector<16x128xf32>
    %c64_i32_24 = arith.constant 64 : i32
    %69 = tpu.dynamic_rotate %65 by %c64_i32_24 dim 1 : vector<16x128xf32>, i32 -> vector<16x128xf32>
    %70 = arith.mulf %69, %30 : vector<16x128xf32>
    %71 = arith.addf %68, %70 : vector<16x128xf32>
    %72 = arith.mulf %66, %23 : vector<16x128xf32>
    %c64_i32_25 = arith.constant 64 : i32
    %73 = tpu.dynamic_rotate %66 by %c64_i32_25 dim 1 : vector<16x128xf32>, i32 -> vector<16x128xf32>
    %74 = arith.mulf %73, %30 : vector<16x128xf32>
    %75 = arith.addf %72, %74 : vector<16x128xf32>
    %76 = arith.truncf %71 : vector<16x128xf32> to vector<16x128xbf16>
    %77 = arith.truncf %75 : vector<16x128xf32> to vector<16x128xbf16>
    %cst_26 = arith.constant dense<0.000000e+00> : vector<16x16xf32>
    %78 = tpu.matmul %76, %77, %cst_26 {dimension_numbers = #tpu.dot_dimension_numbers<[1], [1], [0], [0], [0, 0, 1, 0], [], []>} : vector<16x128xbf16>, vector<16x128xbf16>, vector<16x16xf32> -> vector<16x16xf32>
    %cst_27 = arith.constant 0.0883883461 : f32
    %79 = vector.broadcast %cst_27 : f32 to vector<16x16xf32>
    %80 = arith.mulf %78, %79 : vector<16x16xf32>
    %cst_28 = arith.constant -1.000000e+30 : f32
    %81 = vector.broadcast %cst_28 : f32 to vector<16x16xf32>
    %82 = arith.select %33, %80, %81 : vector<16x16xi1>, vector<16x16xf32>
    %cst_29 = arith.constant dense<0xFF800000> : vector<16xf32>
    %83 = vector.multi_reduction <maximumf>, %82, %cst_29 [1] : vector<16x16xf32> to vector<16xf32>
    %84 = vector.shape_cast %83 : vector<16xf32> to vector<16x1xf32>
    %85 = vector.broadcast %84 : vector<16x1xf32> to vector<16x16xf32>
    %86 = arith.subf %82, %85 : vector<16x16xf32>
    %87 = math.exp %86 : vector<16x16xf32>
    %cst_30 = arith.constant dense<0.000000e+00> : vector<16xf32>
    %88 = vector.multi_reduction <add>, %87, %cst_30 [1] : vector<16x16xf32> to vector<16xf32>
    %89 = vector.shape_cast %88 : vector<16xf32> to vector<16x1xf32>
    %90 = tpu.reciprocal %89 : vector<16x1xf32> -> vector<16x1xf32>
    %91 = vector.broadcast %90 : vector<16x1xf32> to vector<16x16xf32>
    %92 = arith.mulf %87, %91 : vector<16x16xf32>
    %93 = arith.truncf %92 : vector<16x16xf32> to vector<16x16xbf16>
    %94 = arith.truncf %67 : vector<16x128xf32> to vector<16x128xbf16>
    %cst_31 = arith.constant dense<0.000000e+00> : vector<16x128xf32>
    %95 = tpu.matmul %93, %94, %cst_31 {dimension_numbers = #tpu.dot_dimension_numbers<[1], [0], [0], [1], [0, 0, 1, 1], [], []>} : vector<16x16xbf16>, vector<16x128xbf16>, vector<16x128xf32> -> vector<16x128xf32>
    %96 = vector.shape_cast %44 : vector<16x128xf32> to vector<1x16x128xf32>
    %97 = vector.shape_cast %75 : vector<16x128xf32> to vector<1x16x128xf32>
    %98 = tpu.concatenate %96, %97 in 0 : vector<1x16x128xf32>, vector<1x16x128xf32> -> vector<2x16x128xf32>
    %99 = arith.truncf %98 : vector<2x16x128xf32> to vector<2x16x128xbf16>
    %c0_32 = arith.constant 0 : index
    %c0_33 = arith.constant 0 : index
    %c0_34 = arith.constant 0 : index
    %c0_35 = arith.constant 0 : index
    %c0_36 = arith.constant 0 : index
    %100 = vector.load %arg13[%c0_32, %c0_33, %c0_34, %c0_35, %c0_36] : memref<1x1x2x16x128xbf16, #tpu.memory_space<vmem>>, vector<1x1x2x16x128xbf16>
    %101 = vector.shape_cast %100 : vector<1x1x2x16x128xbf16> to vector<2x16x128xbf16>
    %102 = vector.shape_cast %99 : vector<2x16x128xbf16> to vector<1x1x2x16x128xbf16>
    tpu.vector_store %arg13[%c0_32, %c0_33, %c0_34, %c0_35, %c0_36], %102 {strides = array<i32>} : memref<1x1x2x16x128xbf16, #tpu.memory_space<vmem>>, vector<1x1x2x16x128xbf16>,
    %103 = vector.shape_cast %36 : vector<16x128xf32> to vector<1x16x128xf32>
    %104 = vector.shape_cast %67 : vector<16x128xf32> to vector<1x16x128xf32>
    %105 = tpu.concatenate %103, %104 in 0 : vector<1x16x128xf32>, vector<1x16x128xf32> -> vector<2x16x128xf32>
    %106 = arith.truncf %105 : vector<2x16x128xf32> to vector<2x16x128xbf16>
    %c0_37 = arith.constant 0 : index
    %c0_38 = arith.constant 0 : index
    %c0_39 = arith.constant 0 : index
    %c0_40 = arith.constant 0 : index
    %c0_41 = arith.constant 0 : index
    %107 = vector.load %arg14[%c0_37, %c0_38, %c0_39, %c0_40, %c0_41] : memref<1x1x2x16x128xbf16, #tpu.memory_space<vmem>>, vector<1x1x2x16x128xbf16>
    %108 = vector.shape_cast %107 : vector<1x1x2x16x128xbf16> to vector<2x16x128xbf16>
    %109 = vector.shape_cast %106 : vector<2x16x128xbf16> to vector<1x1x2x16x128xbf16>
    tpu.vector_store %arg14[%c0_37, %c0_38, %c0_39, %c0_40, %c0_41], %109 {strides = array<i32>} : memref<1x1x2x16x128xbf16, #tpu.memory_space<vmem>>, vector<1x1x2x16x128xbf16>,
    %110 = tpu.concatenate %64, %95 in 1 : vector<16x128xf32>, vector<16x128xf32> -> vector<16x256xf32>
    %111 = arith.truncf %110 : vector<16x256xf32> to vector<16x256xbf16>
    %c0_42 = arith.constant 0 : index
    %c0_43 = arith.constant 0 : index
    %c0_44 = arith.constant 0 : index
    %112 = vector.load %arg5[%c0_42, %c0_43, %c0_44] : memref<1x256x256xbf16, #tpu.memory_space<vmem>>, vector<1x256x256xbf16>
    %113 = vector.shape_cast %112 : vector<1x256x256xbf16> to vector<256x256xbf16>
    %cst_45 = arith.constant dense<0.000000e+00> : vector<16x256xf32>
    %114 = tpu.matmul %111, %113, %cst_45 {dimension_numbers = #tpu.dot_dimension_numbers<[1], [0], [0], [1], [0, 0, 1, 1], [], []>} : vector<16x256xbf16>, vector<256x256xbf16>, vector<16x256xf32> -> vector<16x256xf32>
    %115 = arith.addf %3, %114 : vector<16x256xf32>
    %c0_46 = arith.constant 0 : index
    %c0_47 = arith.constant 0 : index
    %c0_48 = arith.constant 0 : index
    %116 = vector.load %arg6[%c0_46, %c0_47, %c0_48] : memref<1x1x256xbf16, #tpu.memory_space<vmem>>, vector<1x1x256xbf16>
    %117 = vector.shape_cast %116 : vector<1x1x256xbf16> to vector<1x256xbf16>
    %118 = arith.extf %117 : vector<1x256xbf16> to vector<1x256xf32>
    %119 = arith.mulf %115, %115 : vector<16x256xf32>
    %cst_49 = arith.constant dense<0.000000e+00> : vector<16xf32>
    %120 = vector.multi_reduction <add>, %119, %cst_49 [1] : vector<16x256xf32> to vector<16xf32>
    %121 = vector.shape_cast %120 : vector<16xf32> to vector<16x1xf32>
    %cst_50 = arith.constant 2.560000e+02 : f32
    %122 = vector.broadcast %cst_50 : f32 to vector<16x1xf32>
    %123 = arith.divf %121, %122 : vector<16x1xf32>
    %cst_51 = arith.constant 9.99999997E-7 : f32
    %124 = vector.broadcast %cst_51 : f32 to vector<16x1xf32>
    %125 = arith.addf %123, %124 : vector<16x1xf32>
    %126 = math.rsqrt %125 : vector<16x1xf32>
    %127 = vector.broadcast %126 : vector<16x1xf32> to vector<16x256xf32>
    %128 = arith.mulf %115, %127 : vector<16x256xf32>
    %129 = vector.broadcast %118 : vector<1x256xf32> to vector<16x256xf32>
    %130 = arith.mulf %128, %129 : vector<16x256xf32>
    %131 = arith.truncf %130 : vector<16x256xf32> to vector<16x256xbf16>
    %c0_52 = arith.constant 0 : index
    %c0_53 = arith.constant 0 : index
    %c0_54 = arith.constant 0 : index
    %132 = vector.load %arg7[%c0_52, %c0_53, %c0_54] : memref<1x256x1024xbf16, #tpu.memory_space<vmem>>, vector<1x256x1024xbf16>
    %133 = vector.shape_cast %132 : vector<1x256x1024xbf16> to vector<256x1024xbf16>
    %cst_55 = arith.constant dense<0.000000e+00> : vector<16x1024xf32>
    %134 = tpu.matmul %131, %133, %cst_55 {dimension_numbers = #tpu.dot_dimension_numbers<[1], [0], [0], [1], [0, 0, 1, 1], [], []>} : vector<16x256xbf16>, vector<256x1024xbf16>, vector<16x1024xf32> -> vector<16x1024xf32>
    %135 = vector.extract_strided_slice %134 {offsets = [0, 0], sizes = [16, 512], strides = [1, 1]} : vector<16x1024xf32> to vector<16x512xf32>
    %136 = vector.extract_strided_slice %134 {offsets = [0, 512], sizes = [16, 512], strides = [1, 1]} : vector<16x1024xf32> to vector<16x512xf32>
    %137 = arith.negf %135 : vector<16x512xf32>
    %138 = math.exp %137 : vector<16x512xf32>
    %cst_56 = arith.constant 1.000000e+00 : f32
    %139 = vector.broadcast %cst_56 : f32 to vector<16x512xf32>
    %140 = arith.addf %139, %138 : vector<16x512xf32>
    %141 = arith.divf %139, %140 : vector<16x512xf32>
    %142 = arith.mulf %135, %141 : vector<16x512xf32>
    %143 = arith.mulf %142, %136 : vector<16x512xf32>
    %144 = arith.truncf %143 : vector<16x512xf32> to vector<16x512xbf16>
    %c0_57 = arith.constant 0 : index
    %c0_58 = arith.constant 0 : index
    %c0_59 = arith.constant 0 : index
    %145 = vector.load %arg8[%c0_57, %c0_58, %c0_59] : memref<1x512x256xbf16, #tpu.memory_space<vmem>>, vector<1x512x256xbf16>
    %146 = vector.shape_cast %145 : vector<1x512x256xbf16> to vector<512x256xbf16>
    %cst_60 = arith.constant dense<0.000000e+00> : vector<16x256xf32>
    %147 = tpu.matmul %144, %146, %cst_60 {dimension_numbers = #tpu.dot_dimension_numbers<[1], [0], [0], [1], [0, 0, 1, 1], [], []>} : vector<16x512xbf16>, vector<512x256xbf16>, vector<16x256xf32> -> vector<16x256xf32>
    %148 = arith.addf %115, %147 : vector<16x256xf32>
    %c0_61 = arith.constant 0 : index
    %c0_62 = arith.constant 0 : index
    %149 = vector.load %arg16[%c0_61, %c0_62] : memref<16x256xf32, #tpu.memory_space<vmem>>, vector<16x256xf32>
    tpu.vector_store %arg16[%c0_61, %c0_62], %148 {strides = array<i32>} : memref<16x256xf32, #tpu.memory_space<vmem>>, vector<16x256xf32>,
    %c1_i32 = arith.constant 1 : i32
    %150 = arith.cmpi eq, %arg1, %c1_i32 : i32
    %151 = arith.extui %150 : i1 to i32
    %c0_i32_63 = arith.constant 0 : i32
    %152 = arith.cmpi ne, %151, %c0_i32_63 : i32
    scf.if %152 {
      %c0_64 = arith.constant 0 : index
      %c0_65 = arith.constant 0 : index
      %153 = vector.load %arg11[%c0_64, %c0_65] : memref<1x256xbf16, #tpu.memory_space<vmem>>, vector<1x256xbf16>
      %154 = arith.extf %153 : vector<1x256xbf16> to vector<1x256xf32>
      %155 = arith.mulf %148, %148 : vector<16x256xf32>
      %cst_66 = arith.constant dense<0.000000e+00> : vector<16xf32>
      %156 = vector.multi_reduction <add>, %155, %cst_66 [1] : vector<16x256xf32> to vector<16xf32>
      %157 = vector.shape_cast %156 : vector<16xf32> to vector<16x1xf32>
      %cst_67 = arith.constant 2.560000e+02 : f32
      %158 = vector.broadcast %cst_67 : f32 to vector<16x1xf32>
      %159 = arith.divf %157, %158 : vector<16x1xf32>
      %cst_68 = arith.constant 9.99999997E-7 : f32
      %160 = vector.broadcast %cst_68 : f32 to vector<16x1xf32>
      %161 = arith.addf %159, %160 : vector<16x1xf32>
      %162 = math.rsqrt %161 : vector<16x1xf32>
      %163 = vector.broadcast %162 : vector<16x1xf32> to vector<16x256xf32>
      %164 = arith.mulf %148, %163 : vector<16x256xf32>
      %165 = vector.broadcast %154 : vector<1x256xf32> to vector<16x256xf32>
      %166 = arith.mulf %164, %165 : vector<16x256xf32>
      %167 = arith.truncf %166 : vector<16x256xf32> to vector<16x256xbf16>
      %c0_69 = arith.constant 0 : index
      %c0_70 = arith.constant 0 : index
      %168 = vector.load %arg12[%c0_69, %c0_70] : memref<256x512xbf16, #tpu.memory_space<vmem>>, vector<256x512xbf16>
      %cst_71 = arith.constant dense<0.000000e+00> : vector<16x512xf32>
      %169 = tpu.matmul %167, %168, %cst_71 {dimension_numbers = #tpu.dot_dimension_numbers<[1], [0], [0], [1], [0, 0, 1, 1], [], []>} : vector<16x256xbf16>, vector<256x512xbf16>, vector<16x512xf32> -> vector<16x512xf32>
      %c0_72 = arith.constant 0 : index
      %c0_73 = arith.constant 0 : index
      %c0_74 = arith.constant 0 : index
      %170 = vector.load %arg15[%c0_72, %c0_73, %c0_74] : memref<1x16x512xf32, #tpu.memory_space<vmem>>, vector<1x16x512xf32>
      %171 = vector.shape_cast %170 : vector<1x16x512xf32> to vector<16x512xf32>
      %172 = vector.shape_cast %169 : vector<16x512xf32> to vector<1x16x512xf32>
      tpu.vector_store %arg15[%c0_72, %c0_73, %c0_74], %172 {strides = array<i32>} : memref<1x16x512xf32, #tpu.memory_space<vmem>>, vector<1x16x512xf32>,
    } else {
    }
    return
  }
  func.func @transform_0(%arg0: i32, %arg1: i32) -> (i32, i32, i32) {
    %c0_i32 = arith.constant 0 : i32
    %c0_i32_0 = arith.constant 0 : i32
    %c0_i32_1 = arith.constant 0 : i32
    return %arg0, %c0_i32, %c0_i32_0 : i32, i32, i32
  }
  func.func @transform_1(%arg0: i32, %arg1: i32) -> (i32, i32, i32) {
    %c0_i32 = arith.constant 0 : i32
    %c0_i32_0 = arith.constant 0 : i32
    %c0_i32_1 = arith.constant 0 : i32
    return %arg1, %c0_i32, %c0_i32_0 : i32, i32, i32
  }
  func.func @transform_2(%arg0: i32, %arg1: i32) -> (i32, i32, i32) {
    %c0_i32 = arith.constant 0 : i32
    %c0_i32_0 = arith.constant 0 : i32
    %c0_i32_1 = arith.constant 0 : i32
    return %arg1, %c0_i32, %c0_i32_0 : i32, i32, i32
  }
  func.func @transform_3(%arg0: i32, %arg1: i32) -> (i32, i32, i32) {
    %c0_i32 = arith.constant 0 : i32
    %c0_i32_0 = arith.constant 0 : i32
    %c0_i32_1 = arith.constant 0 : i32
    return %arg1, %c0_i32, %c0_i32_0 : i32, i32, i32
  }
  func.func @transform_4(%arg0: i32, %arg1: i32) -> (i32, i32, i32) {
    %c0_i32 = arith.constant 0 : i32
    %c0_i32_0 = arith.constant 0 : i32
    %c0_i32_1 = arith.constant 0 : i32
    return %arg1, %c0_i32, %c0_i32_0 : i32, i32, i32
  }
  func.func @transform_5(%arg0: i32, %arg1: i32) -> (i32, i32, i32) {
    %c0_i32 = arith.constant 0 : i32
    %c0_i32_0 = arith.constant 0 : i32
    %c0_i32_1 = arith.constant 0 : i32
    return %arg1, %c0_i32, %c0_i32_0 : i32, i32, i32
  }
  func.func @transform_6(%arg0: i32, %arg1: i32) -> (i32, i32, i32) {
    %c0_i32 = arith.constant 0 : i32
    %c0_i32_0 = arith.constant 0 : i32
    %c0_i32_1 = arith.constant 0 : i32
    return %arg1, %c0_i32, %c0_i32_0 : i32, i32, i32
  }
  func.func @transform_7(%arg0: i32, %arg1: i32) -> (i32, i32) {
    %c0_i32 = arith.constant 0 : i32
    %c0_i32_0 = arith.constant 0 : i32
    %c0_i32_1 = arith.constant 0 : i32
    return %c0_i32, %c0_i32_0 : i32, i32
  }
  func.func @transform_8(%arg0: i32, %arg1: i32) -> (i32, i32) {
    %c0_i32 = arith.constant 0 : i32
    %c0_i32_0 = arith.constant 0 : i32
    %c0_i32_1 = arith.constant 0 : i32
    return %c0_i32, %c0_i32_0 : i32, i32
  }
  func.func @transform_9(%arg0: i32, %arg1: i32) -> (i32, i32) {
    %c0_i32 = arith.constant 0 : i32
    %c0_i32_0 = arith.constant 0 : i32
    %c0_i32_1 = arith.constant 0 : i32
    return %c0_i32, %c0_i32_0 : i32, i32
  }
  func.func @transform_10(%arg0: i32, %arg1: i32) -> (i32, i32) {
    %c0_i32 = arith.constant 0 : i32
    %c0_i32_0 = arith.constant 0 : i32
    %c0_i32_1 = arith.constant 0 : i32
    return %c0_i32, %c0_i32_0 : i32, i32
  }
  func.func @transform_11(%arg0: i32, %arg1: i32) -> (i32, i32, i32, i32, i32) {
    %c0_i32 = arith.constant 0 : i32
    %c0_i32_0 = arith.constant 0 : i32
    %c0_i32_1 = arith.constant 0 : i32
    %c0_i32_2 = arith.constant 0 : i32
    return %arg0, %arg1, %c0_i32, %c0_i32_0, %c0_i32_1 : i32, i32, i32, i32, i32
  }
  func.func @transform_12(%arg0: i32, %arg1: i32) -> (i32, i32, i32, i32, i32) {
    %c0_i32 = arith.constant 0 : i32
    %c0_i32_0 = arith.constant 0 : i32
    %c0_i32_1 = arith.constant 0 : i32
    %c0_i32_2 = arith.constant 0 : i32
    return %arg0, %arg1, %c0_i32, %c0_i32_0, %c0_i32_1 : i32, i32, i32, i32, i32
  }
  func.func @transform_13(%arg0: i32, %arg1: i32) -> (i32, i32, i32) {
    %c0_i32 = arith.constant 0 : i32
    %c0_i32_0 = arith.constant 0 : i32
    %c0_i32_1 = arith.constant 0 : i32
    return %arg0, %c0_i32, %c0_i32_0 : i32, i32, i32
  }
}

</mosaic_0001>

<llo_original>
// kernel: first_vicuna_forward.1
$region0: #{first_vicuna_forward.1}
  #allocation0 [shape = 'u32[]', space=smem, size = 0x4, offset = 0x4, fixed_abs, tag = 'smem constant byte address 0x4 - core index']
  #allocation1 [shape = 'u32[144,128]{1,0:T(1,128)}', space=vmem, size = 0x12000, scoped, tag = 'internal scratch']
  #allocation2 [shape = 'f32[16,256]{1,0:T(8,128)}', space=vmem, size = 0x4000, scoped, tag = 'scratch operand']
  %s0 = inlined_call_operand.vmem [shape: bf16[2,16,256], index: 0, kind: input, shape index: {}]
  %s1 = inlined_call_operand.vmem [shape: bf16[2,1,256], index: 1, kind: input, shape index: {}]
  %s2 = inlined_call_operand.hbm [shape: bf16[2,256,768], index: 2, kind: input, shape index: {}]
  %s3 = inlined_call_operand.hbm [shape: bf16[2,256,256], index: 3, kind: input, shape index: {}]
  %s4 = inlined_call_operand.vmem [shape: bf16[2,1,256], index: 4, kind: input, shape index: {}]
  %s5 = inlined_call_operand.hbm [shape: bf16[2,256,1024], index: 5, kind: input, shape index: {}]
  %s6 = inlined_call_operand.hbm [shape: bf16[2,512,256], index: 6, kind: input, shape index: {}]
  %s7 = inlined_call_operand.vmem [shape: f32[16,128], index: 7, kind: input, shape index: {}]
  %s8 = inlined_call_operand.vmem [shape: f32[16,128], index: 8, kind: input, shape index: {}]
  %s9 = inlined_call_operand.vmem [shape: bf16[1,256], index: 9, kind: input, shape index: {}]
  %s10 = inlined_call_operand.hbm [shape: bf16[256,512], index: 10, kind: input, shape index: {}]
  %s11 = inlined_call_operand.vmem [shape: bf16[2,2,2,16,128], index: 11, kind: output, shape index: {0}]
  %s12 = inlined_call_operand.vmem [shape: bf16[2,2,2,16,128], index: 12, kind: output, shape index: {1}]
  %s13 = inlined_call_operand.hbm [shape: f32[2,16,512], index: 13, kind: output, shape index: {2}]
  %14 = xla_tuple %s11, %s12, %s13
  %s15 = sld [smem:[#allocation0]]
  $region121: #{first_vicuna_forward.1} parent=0
    _
  %s17 = ssub.s32 1, %s15
  %s18 = scalar_select 0, %s17, %s15
  $region1: #{first_vicuna_forward.1} parent=0
    #allocation3 [shape = 'u8[786432]{0}', space=vmem, size = 0xc0000, scoped, tag = 'input window, operand 2']
    #allocation4 [shape = 's32[2]{0}', space=sflag, size = 0x8, scoped, tag = 'scoped memory for first_vicuna_forward.1']
    #allocation5 [shape = 's32[2]{0}', space=sflag, size = 0x8, scoped, tag = 'scoped memory for first_vicuna_forward.1']
    #allocation6 [shape = 'u8[262144]{0}', space=vmem, size = 0x40000, scoped, tag = 'input window, operand 3']
    #allocation7 [shape = 's32[2]{0}', space=sflag, size = 0x8, scoped, tag = 'scoped memory for first_vicuna_forward.1']
    #allocation8 [shape = 'u8[1048576]{0}', space=vmem, size = 0x100000, scoped, tag = 'input window, operand 5']
    #allocation9 [shape = 'u8[524288]{0}', space=vmem, size = 0x80000, scoped, tag = 'input window, operand 6']
    #allocation10 [shape = 's32[2]{0}', space=sflag, size = 0x8, scoped, tag = 'scoped memory for first_vicuna_forward.1']
    #allocation11 [shape = 'u8[262144]{0}', space=vmem, size = 0x40000, scoped, tag = 'input window, operand 10, single buffered']
    #allocation12 [shape = 'u8[65536]{0}', space=vmem, size = 0x10000, scoped, tag = 'output window, operand 2']
    %19 = vsyncpa [#allocation4], 0
    %s20 = scalar_lea.sflag [#allocation4], 1
    %21 = vsyncpa %s20, 0
    %22 = vsyncpa [#allocation7], 0
    %s23 = scalar_lea.sflag [#allocation7], 1
    %24 = vsyncpa %s23, 0
    %25 = vsyncpa [#allocation10], 0
    %s26 = scalar_lea.sflag [#allocation10], 1
    %27 = vsyncpa %s26, 0
    %28 = vsyncpa [#allocation5], 0
    %s29 = scalar_lea.sflag [#allocation5], 1
    %30 = vsyncpa %s29, 0
    loop: start=0, step=1, limit=6
    $region2: #{first_vicuna_forward.1} parent=1 // loop_pre_header
      _
    $region3: #{first_vicuna_forward.1} parent=1 // loop_header
      %s32 = sphi 0, %s36
      %p33 = scmp.ge.s32.totalorder %s32, 6
      %s39 = sphi 0, %s51
      %s40 = sphi 0, %s47
      %s41 = sphi 0, %s39
      %s42 = sphi 0, %s40
      %s43 = sphi 0, %s41
      %s44 = sphi 0, %s42
      %s54 = sphi 0, %s56
      %s57 = sphi 0, %s54
      %s58 = sphi 0, %s57
      %s74 = sphi 0, %s58
      %s80 = sphi 0, %s82
      %s83 = sphi 0, %s80
      %s84 = sphi 0, %s83
      %s100 = sphi 0, %s84
      %s106 = sphi 0, %s108
      %s109 = sphi 0, %s106
      %s110 = sphi 0, %s109
      %s126 = sphi 0, %s110
      %s132 = sphi 0, %s134
      %s135 = sphi 0, %s132
      %s136 = sphi 0, %s135
      %s152 = sphi 0, %s136
      %s158 = sphi 0, %s160
      %s161 = sphi 0, %s158
      %s162 = sphi 0, %s161
      %s178 = sphi 0, %s162
      %s184 = sphi 0, %s186
      %s187 = sphi 0, %s184
      %s188 = sphi 0, %s187
      %s204 = sphi 0, %s188
      %s210 = sphi 0, %s212
      %s213 = sphi 0, %s210
      %s214 = sphi 0, %s213
      %s230 = sphi 0, %s214
      %s234 = sphi 0, %s234
      %s236 = sphi 0, %s234
      %s237 = sphi 0, %s236
      %s251 = sphi 0, %s237
      %s255 = sphi 0, %s255
      %s257 = sphi 0, %s255
      %s258 = sphi 0, %s257
      %s272 = sphi 0, %s258
      %s276 = sphi 0, %s276
      %s278 = sphi 0, %s276
      %s279 = sphi 0, %s278
      %s293 = sphi 0, %s279
      %s297 = sphi 0, %s297
      %s299 = sphi 0, %s297
      %s300 = sphi 0, %s299
      %s314 = sphi 0, %s300
      %s322 = sphi 0, %s324
      %s325 = sphi 0, %s322
      %s326 = sphi 0, %s325
      %s342 = sphi 0, %s326
      %s350 = sphi 0, %s352
      %s353 = sphi 0, %s350
      %s354 = sphi 0, %s353
      %s370 = sphi 0, %s354
      %s376 = sphi 0, %s378
      %s379 = sphi 0, %s376
      %s380 = sphi 0, %s379
      %s396 = sphi 0, %s380
    $region4: #{first_vicuna_forward.1} parent=1 // loop_header_branch
      %35 = sbr.rel (%p33) target = $region8
    $region5: #{first_vicuna_forward.1} parent=1 // loop_body
      %s37 = ssub.s32 %s32, 1
      %s38 = ssub.s32 %s32, 2
      %s45 = sadd.s32 1, %s40
      %p46 = scmp.ge.s32.totalorder %s45, 2
      %s47 = scalar_select %p46, 0, %s45
      %s48 = sadd.s32 1, %s39
      %s49 = scalar_select %p46, %s48, %s39
      %p50 = scmp.ge.s32.totalorder %s49, 2
      %s51 = scalar_select %p50, 0, %s49
      %s52 = ssub.s32 %s39, %s51
      %p53 = scmp.eq.s32.totalorder %s52, 0
      %s55 = sadd.s32 %s54, 1
      %s56 = scalar_select %p53, %s54, %s55
      %p59 = pneg %p53
      %p60 = scmp.eq.s32.totalorder %s32, 3
      %p61 = por %p59, %p60
      %p62 = scmp.ne.s32.totalorder %s54, %s57
      %p63 = scmp.eq.s32.totalorder %s32, 0
      %p64 = por %p62, %p63
      %p65 = scmp.ne.s32.totalorder %s54, %s57
      %p66 = scmp.eq.s32.totalorder %s37, 3
      %p67 = por %p65, %p66
      %p68 = scmp.ne.s32.totalorder %s57, %s58
      %p69 = scmp.eq.s32.totalorder %s37, 0
      %p70 = por %p68, %p69
      %p71 = scmp.ne.s32.totalorder %s57, %s58
      %p72 = scmp.eq.s32.totalorder %s38, 3
      %p73 = por %p71, %p72
      %p75 = scmp.ne.s32.totalorder %s58, %s74
      %p76 = scmp.eq.s32.totalorder %s38, 0
      %p77 = por %p75, %p76
      %s78 = ssub.s32 %s40, %s47
      %p79 = scmp.eq.s32.totalorder %s78, 0
      %s81 = sadd.s32 %s80, 1
      %s82 = scalar_select %p79, %s80, %s81
      %p85 = pneg %p79
      %p86 = scmp.eq.s32.totalorder %s32, 3
      %p87 = por %p85, %p86
      %p88 = scmp.ne.s32.totalorder %s80, %s83
      %p89 = scmp.eq.s32.totalorder %s32, 0
      %p90 = por %p88, %p89
      %p91 = scmp.ne.s32.totalorder %s80, %s83
      %p92 = scmp.eq.s32.totalorder %s37, 3
      %p93 = por %p91, %p92
      %p94 = scmp.ne.s32.totalorder %s83, %s84
      %p95 = scmp.eq.s32.totalorder %s37, 0
      %p96 = por %p94, %p95
      %p97 = scmp.ne.s32.totalorder %s83, %s84
      %p98 = scmp.eq.s32.totalorder %s38, 3
      %p99 = por %p97, %p98
      %p101 = scmp.ne.s32.totalorder %s84, %s100
      %p102 = scmp.eq.s32.totalorder %s38, 0
      %p103 = por %p101, %p102
      %s104 = ssub.s32 %s40, %s47
      %p105 = scmp.eq.s32.totalorder %s104, 0
      %s107 = sadd.s32 %s106, 1
      %s108 = scalar_select %p105, %s106, %s107
      %p111 = pneg %p105
      %p112 = scmp.eq.s32.totalorder %s32, 3
      %p113 = por %p111, %p112
      %p114 = scmp.ne.s32.totalorder %s106, %s109
      %p115 = scmp.eq.s32.totalorder %s32, 0
      %p116 = por %p114, %p115
      %p117 = scmp.ne.s32.totalorder %s106, %s109
      %p118 = scmp.eq.s32.totalorder %s37, 3
      %p119 = por %p117, %p118
      %p120 = scmp.ne.s32.totalorder %s109, %s110
      %p121 = scmp.eq.s32.totalorder %s37, 0
      %p122 = por %p120, %p121
      %p123 = scmp.ne.s32.totalorder %s109, %s110
      %p124 = scmp.eq.s32.totalorder %s38, 3
      %p125 = por %p123, %p124
      %p127 = scmp.ne.s32.totalorder %s110, %s126
      %p128 = scmp.eq.s32.totalorder %s38, 0
      %p129 = por %p127, %p128
      %s130 = ssub.s32 %s40, %s47
      %p131 = scmp.eq.s32.totalorder %s130, 0
      %s133 = sadd.s32 %s132, 1
      %s134 = scalar_select %p131, %s132, %s133
      %p137 = pneg %p131
      %p138 = scmp.eq.s32.totalorder %s32, 3
      %p139 = por %p137, %p138
      %p140 = scmp.ne.s32.totalorder %s132, %s135
      %p141 = scmp.eq.s32.totalorder %s32, 0
      %p142 = por %p140, %p141
      %p143 = scmp.ne.s32.totalorder %s132, %s135
      %p144 = scmp.eq.s32.totalorder %s37, 3
      %p145 = por %p143, %p144
      %p146 = scmp.ne.s32.totalorder %s135, %s136
      %p147 = scmp.eq.s32.totalorder %s37, 0
      %p148 = por %p146, %p147
      %p149 = scmp.ne.s32.totalorder %s135, %s136
      %p150 = scmp.eq.s32.totalorder %s38, 3
      %p151 = por %p149, %p150
      %p153 = scmp.ne.s32.totalorder %s136, %s152
      %p154 = scmp.eq.s32.totalorder %s38, 0
      %p155 = por %p153, %p154
      %s156 = ssub.s32 %s40, %s47
      %p157 = scmp.eq.s32.totalorder %s156, 0
      %s159 = sadd.s32 %s158, 1
      %s160 = scalar_select %p157, %s158, %s159
      %p163 = pneg %p157
      %p164 = scmp.eq.s32.totalorder %s32, 3
      %p165 = por %p163, %p164
      %p166 = scmp.ne.s32.totalorder %s158, %s161
      %p167 = scmp.eq.s32.totalorder %s32, 0
      %p168 = por %p166, %p167
      %p169 = scmp.ne.s32.totalorder %s158, %s161
      %p170 = scmp.eq.s32.totalorder %s37, 3
      %p171 = por %p169, %p170
      %p172 = scmp.ne.s32.totalorder %s161, %s162
      %p173 = scmp.eq.s32.totalorder %s37, 0
      %p174 = por %p172, %p173
      %p175 = scmp.ne.s32.totalorder %s161, %s162
      %p176 = scmp.eq.s32.totalorder %s38, 3
      %p177 = por %p175, %p176
      %p179 = scmp.ne.s32.totalorder %s162, %s178
      %p180 = scmp.eq.s32.totalorder %s38, 0
      %p181 = por %p179, %p180
      %s182 = ssub.s32 %s40, %s47
      %p183 = scmp.eq.s32.totalorder %s182, 0
      %s185 = sadd.s32 %s184, 1
      %s186 = scalar_select %p183, %s184, %s185
      %p189 = pneg %p183
      %p190 = scmp.eq.s32.totalorder %s32, 3
      %p191 = por %p189, %p190
      %p192 = scmp.ne.s32.totalorder %s184, %s187
      %p193 = scmp.eq.s32.totalorder %s32, 0
      %p194 = por %p192, %p193
      %p195 = scmp.ne.s32.totalorder %s184, %s187
      %p196 = scmp.eq.s32.totalorder %s37, 3
      %p197 = por %p195, %p196
      %p198 = scmp.ne.s32.totalorder %s187, %s188
      %p199 = scmp.eq.s32.totalorder %s37, 0
      %p200 = por %p198, %p199
      %p201 = scmp.ne.s32.totalorder %s187, %s188
      %p202 = scmp.eq.s32.totalorder %s38, 3
      %p203 = por %p201, %p202
      %p205 = scmp.ne.s32.totalorder %s188, %s204
      %p206 = scmp.eq.s32.totalorder %s38, 0
      %p207 = por %p205, %p206
      %s208 = ssub.s32 %s40, %s47
      %p209 = scmp.eq.s32.totalorder %s208, 0
      %s211 = sadd.s32 %s210, 1
      %s212 = scalar_select %p209, %s210, %s211
      %p215 = pneg %p209
      %p216 = scmp.eq.s32.totalorder %s32, 3
      %p217 = por %p215, %p216
      %p218 = scmp.ne.s32.totalorder %s210, %s213
      %p219 = scmp.eq.s32.totalorder %s32, 0
      %p220 = por %p218, %p219
      %p221 = scmp.ne.s32.totalorder %s210, %s213
      %p222 = scmp.eq.s32.totalorder %s37, 3
      %p223 = por %p221, %p222
      %p224 = scmp.ne.s32.totalorder %s213, %s214
      %p225 = scmp.eq.s32.totalorder %s37, 0
      %p226 = por %p224, %p225
      %p227 = scmp.ne.s32.totalorder %s213, %s214
      %p228 = scmp.eq.s32.totalorder %s38, 3
      %p229 = por %p227, %p228
      %p231 = scmp.ne.s32.totalorder %s214, %s230
      %p232 = scmp.eq.s32.totalorder %s38, 0
      %p233 = por %p231, %p232
      %s235 = sadd.s32 %s234, 1
      %p238 = scmp.eq.s32.totalorder %s32, 3
      %p239 = scmp.ne.s32.totalorder %s234, %s236
      %p240 = scmp.eq.s32.totalorder %s32, 0
      %p241 = por %p239, %p240
      %p242 = scmp.ne.s32.totalorder %s234, %s236
      %p243 = scmp.eq.s32.totalorder %s37, 3
      %p244 = por %p242, %p243
      %p245 = scmp.ne.s32.totalorder %s236, %s237
      %p246 = scmp.eq.s32.totalorder %s37, 0
      %p247 = por %p245, %p246
      %p248 = scmp.ne.s32.totalorder %s236, %s237
      %p249 = scmp.eq.s32.totalorder %s38, 3
      %p250 = por %p248, %p249
      %p252 = scmp.ne.s32.totalorder %s237, %s251
      %p253 = scmp.eq.s32.totalorder %s38, 0
      %p254 = por %p252, %p253
      %s256 = sadd.s32 %s255, 1
      %p259 = scmp.eq.s32.totalorder %s32, 3
      %p260 = scmp.ne.s32.totalorder %s255, %s257
      %p261 = scmp.eq.s32.totalorder %s32, 0
      %p262 = por %p260, %p261
      %p263 = scmp.ne.s32.totalorder %s255, %s257
      %p264 = scmp.eq.s32.totalorder %s37, 3
      %p265 = por %p263, %p264
      %p266 = scmp.ne.s32.totalorder %s257, %s258
      %p267 = scmp.eq.s32.totalorder %s37, 0
      %p268 = por %p266, %p267
      %p269 = scmp.ne.s32.totalorder %s257, %s258
      %p270 = scmp.eq.s32.totalorder %s38, 3
      %p271 = por %p269, %p270
      %p273 = scmp.ne.s32.totalorder %s258, %s272
      %p274 = scmp.eq.s32.totalorder %s38, 0
      %p275 = por %p273, %p274
      %s277 = sadd.s32 %s276, 1
      %p280 = scmp.eq.s32.totalorder %s32, 3
      %p281 = scmp.ne.s32.totalorder %s276, %s278
      %p282 = scmp.eq.s32.totalorder %s32, 0
      %p283 = por %p281, %p282
      %p284 = scmp.ne.s32.totalorder %s276, %s278
      %p285 = scmp.eq.s32.totalorder %s37, 3
      %p286 = por %p284, %p285
      %p287 = scmp.ne.s32.totalorder %s278, %s279
      %p288 = scmp.eq.s32.totalorder %s37, 0
      %p289 = por %p287, %p288
      %p290 = scmp.ne.s32.totalorder %s278, %s279
      %p291 = scmp.eq.s32.totalorder %s38, 3
      %p292 = por %p290, %p291
      %p294 = scmp.ne.s32.totalorder %s279, %s293
      %p295 = scmp.eq.s32.totalorder %s38, 0
      %p296 = por %p294, %p295
      %s298 = sadd.s32 %s297, 1
      %p301 = scmp.eq.s32.totalorder %s32, 3
      %p302 = scmp.ne.s32.totalorder %s297, %s299
      %p303 = scmp.eq.s32.totalorder %s32, 0
      %p304 = por %p302, %p303
      %p305 = scmp.ne.s32.totalorder %s297, %s299
      %p306 = scmp.eq.s32.totalorder %s37, 3
      %p307 = por %p305, %p306
      %p308 = scmp.ne.s32.totalorder %s299, %s300
      %p309 = scmp.eq.s32.totalorder %s37, 0
      %p310 = por %p308, %p309
      %p311 = scmp.ne.s32.totalorder %s299, %s300
      %p312 = scmp.eq.s32.totalorder %s38, 3
      %p313 = por %p311, %p312
      %p315 = scmp.ne.s32.totalorder %s300, %s314
      %p316 = scmp.eq.s32.totalorder %s38, 0
      %p317 = por %p315, %p316
      %s318 = ssub.s32 %s39, %s51
      %s319 = ssub.s32 %s40, %s47
      %s320 = sor.u32 %s318, %s319
      %p321 = scmp.eq.s32.totalorder %s320, 0
      %s323 = sadd.s32 %s322, 1
      %s324 = scalar_select %p321, %s322, %s323
      %p327 = pneg %p321
      %p328 = scmp.eq.s32.totalorder %s32, 3
      %p329 = por %p327, %p328
      %p330 = scmp.ne.s32.totalorder %s322, %s325
      %p331 = scmp.eq.s32.totalorder %s32, 0
      %p332 = por %p330, %p331
      %p333 = scmp.ne.s32.totalorder %s322, %s325
      %p334 = scmp.eq.s32.totalorder %s37, 3
      %p335 = por %p333, %p334
      %p336 = scmp.ne.s32.totalorder %s325, %s326
      %p337 = scmp.eq.s32.totalorder %s37, 0
      %p338 = por %p336, %p337
      %p339 = scmp.ne.s32.totalorder %s325, %s326
      %p340 = scmp.eq.s32.totalorder %s38, 3
      %p341 = por %p339, %p340
      %p343 = scmp.ne.s32.totalorder %s326, %s342
      %p344 = scmp.eq.s32.totalorder %s38, 0
      %p345 = por %p343, %p344
      %s346 = ssub.s32 %s39, %s51
      %s347 = ssub.s32 %s40, %s47
      %s348 = sor.u32 %s346, %s347
      %p349 = scmp.eq.s32.totalorder %s348, 0
      %s351 = sadd.s32 %s350, 1
      %s352 = scalar_select %p349, %s350, %s351
      %p355 = pneg %p349
      %p356 = scmp.eq.s32.totalorder %s32, 3
      %p357 = por %p355, %p356
      %p358 = scmp.ne.s32.totalorder %s350, %s353
      %p359 = scmp.eq.s32.totalorder %s32, 0
      %p360 = por %p358, %p359
      %p361 = scmp.ne.s32.totalorder %s350, %s353
      %p362 = scmp.eq.s32.totalorder %s37, 3
      %p363 = por %p361, %p362
      %p364 = scmp.ne.s32.totalorder %s353, %s354
      %p365 = scmp.eq.s32.totalorder %s37, 0
      %p366 = por %p364, %p365
      %p367 = scmp.ne.s32.totalorder %s353, %s354
      %p368 = scmp.eq.s32.totalorder %s38, 3
      %p369 = por %p367, %p368
      %p371 = scmp.ne.s32.totalorder %s354, %s370
      %p372 = scmp.eq.s32.totalorder %s38, 0
      %p373 = por %p371, %p372
      %s374 = ssub.s32 %s39, %s51
      %p375 = scmp.eq.s32.totalorder %s374, 0
      %s377 = sadd.s32 %s376, 1
      %s378 = scalar_select %p375, %s376, %s377
      %p381 = pneg %p375
      %p382 = scmp.eq.s32.totalorder %s32, 3
      %p383 = por %p381, %p382
      %p384 = scmp.ne.s32.totalorder %s376, %s379
      %p385 = scmp.eq.s32.totalorder %s32, 0
      %p386 = por %p384, %p385
      %p387 = scmp.ne.s32.totalorder %s376, %s379
      %p388 = scmp.eq.s32.totalorder %s37, 3
      %p389 = por %p387, %p388
      %p390 = scmp.ne.s32.totalorder %s379, %s380
      %p391 = scmp.eq.s32.totalorder %s37, 0
      %p392 = por %p390, %p391
      %p393 = scmp.ne.s32.totalorder %s379, %s380
      %p394 = scmp.eq.s32.totalorder %s38, 3
      %p395 = por %p393, %p394
      %p397 = scmp.ne.s32.totalorder %s380, %s396
      %p398 = scmp.eq.s32.totalorder %s38, 0
      %p399 = por %p397, %p398
      %p400 = scmp.le.s32.totalorder 1, %s32
      %p401 = scmp.lt.s32.totalorder %s32, 5
      %p402 = pnand %p400, %p401
      %p403 = pneg %p402
      // Predicated region
      $region9: #{first_vicuna_forward.1} parent=5 // pred_check
        _
      $region10: #{first_vicuna_forward.1} parent=5 // pred_check_branch
        %405 = sbr.rel (%p402) target = $region12
      $region11: #{first_vicuna_forward.1} parent=5 // pred_region
        %s406 = ssub.s32 %s32, 1
        // Predicated region
        $region13: #{first_vicuna_forward.1} parent=11 // pred_check
          %p407 = pneg %p247
        $region14: #{first_vicuna_forward.1} parent=11 // pred_check_branch
          %409 = sbr.rel (%p407) target = $region16
        $region15: #{first_vicuna_forward.1} parent=11 // pred_region
          _
        $region16: #{first_vicuna_forward.1} parent=11 // pred_fallthru
          _
        // Predicated region
        $region17: #{first_vicuna_forward.1} parent=11 // pred_check
          %p410 = pneg %p268
        $region18: #{first_vicuna_forward.1} parent=11 // pred_check_branch
          %412 = sbr.rel (%p410) target = $region20
        $region19: #{first_vicuna_forward.1} parent=11 // pred_region
          _
        $region20: #{first_vicuna_forward.1} parent=11 // pred_fallthru
          _
        // Predicated region
        $region21: #{first_vicuna_forward.1} parent=11 // pred_check
          %p413 = pneg %p289
        $region22: #{first_vicuna_forward.1} parent=11 // pred_check_branch
          %415 = sbr.rel (%p413) target = $region24
        $region23: #{first_vicuna_forward.1} parent=11 // pred_region
          _
        $region24: #{first_vicuna_forward.1} parent=11 // pred_fallthru
          _
        // Predicated region
        $region25: #{first_vicuna_forward.1} parent=11 // pred_check
          %p416 = pneg %p310
        $region26: #{first_vicuna_forward.1} parent=11 // pred_check_branch
          %418 = sbr.rel (%p416) target = $region28
        $region27: #{first_vicuna_forward.1} parent=11 // pred_region
          %s420 = ssub.s32 8192, 8192
          %421 = vsyncadd [#allocation10], %s420
          %s422 = sshll.u32 [#allocation11], 4
          %s423 = int_to_ptr.vmem [resolvable:$true] %s422
          %428 = dma.hbm_to_vmem [thread:$0]  %s10, 8192, %s423, [#allocation10], 256, 256, 16
        $region28: #{first_vicuna_forward.1} parent=11 // pred_fallthru
          _
      $region12: #{first_vicuna_forward.1} parent=5 // pred_fallthru
        _
      %p429 = scmp.lt.s32.totalorder %s32, 4
      // Predicated region
      $region29: #{first_vicuna_forward.1} parent=5 // pred_check
        %p430 = pneg %p429
      $region30: #{first_vicuna_forward.1} parent=5 // pred_check_branch
        %432 = sbr.rel (%p430) target = $region32
      $region31: #{first_vicuna_forward.1} parent=5 // pred_region
        // Predicated region
        $region33: #{first_vicuna_forward.1} parent=31 // pred_check
          %p433 = pneg %p64
        $region34: #{first_vicuna_forward.1} parent=31 // pred_check_branch
          %435 = sbr.rel (%p433) target = $region36
        $region35: #{first_vicuna_forward.1} parent=31 // pred_region
          %p436 = scmp.lt.s32.totalorder %s39, 1
          %s437 = scalar_select %p436, %s39, 1
          %s438 = smul.addr %s437, 4
          %s439 = smul.addr %s438, 4
          %s440 = scalar_lea.vmem %s0, %s439
        $region36: #{first_vicuna_forward.1} parent=31 // pred_fallthru
          _
        // Predicated region
        $region37: #{first_vicuna_forward.1} parent=31 // pred_check
          %p441 = pneg %p90
        $region38: #{first_vicuna_forward.1} parent=31 // pred_check_branch
          %443 = sbr.rel (%p441) target = $region40
        $region39: #{first_vicuna_forward.1} parent=31 // pred_region
          %p444 = scmp.lt.s32.totalorder %s40, 1
          %s445 = scalar_select %p444, %s40, 1
          %s446 = smul.addr %s445, 2
          %s447 = scalar_lea.vmem %s1, %s446
        $region40: #{first_vicuna_forward.1} parent=31 // pred_fallthru
          _
        // Predicated region
        $region41: #{first_vicuna_forward.1} parent=31 // pred_check
          %p448 = pneg %p116
        $region42: #{first_vicuna_forward.1} parent=31 // pred_check_branch
          %450 = sbr.rel (%p448) target = $region44
        $region43: #{first_vicuna_forward.1} parent=31 // pred_region
          %s451 = sand.u32 %s106, 1
          %s452 = scalar_lea.sflag [#allocation4], %s451
          %s453 = sand.u32 %s106, 1
          %s454 = smul.addr %s453, 768
          %s455 = scalar_lea.vmem [#allocation3], %s454
          %s457 = ssub.s32 12288, 12288
          %458 = vsyncadd %s452, %s457
          %s459 = smul.addr %s40, 192
          %s460 = smul.addr %s459, 64
          %s461 = scalar_lea.hbm %s2, %s460
          %s462 = sshll.u32 %s455, 4
          %s463 = int_to_ptr.vmem [resolvable:$true] %s462
          %468 = dma.hbm_to_vmem [thread:$0]  %s461, 12288, %s463, %s452, 384, 384, 24
        $region44: #{first_vicuna_forward.1} parent=31 // pred_fallthru
          _
        // Predicated region
        $region45: #{first_vicuna_forward.1} parent=31 // pred_check
          %p469 = pneg %p142
        $region46: #{first_vicuna_forward.1} parent=31 // pred_check_branch
          %471 = sbr.rel (%p469) target = $region48
        $region47: #{first_vicuna_forward.1} parent=31 // pred_region
          %s472 = sand.u32 %s32, 1
          %s473 = scalar_lea.sflag [#allocation7], %s472
          %s474 = sand.u32 %s132, 1
          %s475 = smul.addr %s474, 256
          %s476 = scalar_lea.vmem [#allocation6], %s475
          %s478 = ssub.s32 4096, 4096
          %479 = vsyncadd %s473, %s478
          %s480 = smul.addr %s40, 64
          %s481 = smul.addr %s480, 64
          %s482 = scalar_lea.hbm %s3, %s481
          %s483 = sshll.u32 %s476, 4
          %s484 = int_to_ptr.vmem [resolvable:$true] %s483
          %489 = dma.hbm_to_vmem [thread:$0]  %s482, 4096, %s484, %s473, 128, 128, 8
        $region48: #{first_vicuna_forward.1} parent=31 // pred_fallthru
          _
        // Predicated region
        $region49: #{first_vicuna_forward.1} parent=31 // pred_check
          %p490 = pneg %p168
        $region50: #{first_vicuna_forward.1} parent=31 // pred_check_branch
          %492 = sbr.rel (%p490) target = $region52
        $region51: #{first_vicuna_forward.1} parent=31 // pred_region
          %p493 = scmp.lt.s32.totalorder %s40, 1
          %s494 = scalar_select %p493, %s40, 1
          %s495 = smul.addr %s494, 2
          %s496 = scalar_lea.vmem %s4, %s495
        $region52: #{first_vicuna_forward.1} parent=31 // pred_fallthru
          _
        // Predicated region
        $region53: #{first_vicuna_forward.1} parent=31 // pred_check
          %p497 = pneg %p194
        $region54: #{first_vicuna_forward.1} parent=31 // pred_check_branch
          %499 = sbr.rel (%p497) target = $region56
        $region55: #{first_vicuna_forward.1} parent=31 // pred_region
          %s500 = sand.u32 %s32, 1
          %s501 = scalar_lea.sflag [#allocation7], %s500
          %s502 = sand.u32 %s184, 1
          %s503 = smul.addr %s502, 1024
          %s504 = scalar_lea.vmem [#allocation8], %s503
          %s506 = ssub.s32 16384, 16384
          %507 = vsyncadd %s501, %s506
          %s508 = smul.addr %s40, 256
          %s509 = smul.addr %s508, 64
          %s510 = scalar_lea.hbm %s5, %s509
          %s511 = sshll.u32 %s504, 4
          %s512 = int_to_ptr.vmem [resolvable:$true] %s511
          %517 = dma.hbm_to_vmem [thread:$0]  %s510, 16384, %s512, %s501, 512, 512, 32
        $region56: #{first_vicuna_forward.1} parent=31 // pred_fallthru
          _
        // Predicated region
        $region57: #{first_vicuna_forward.1} parent=31 // pred_check
          %p518 = pneg %p220
        $region58: #{first_vicuna_forward.1} parent=31 // pred_check_branch
          %520 = sbr.rel (%p518) target = $region60
        $region59: #{first_vicuna_forward.1} parent=31 // pred_region
          %s521 = sand.u32 %s32, 1
          %s522 = scalar_lea.sflag [#allocation10], %s521
          %s523 = sand.u32 %s210, 1
          %s524 = smul.addr %s523, 512
          %s525 = scalar_lea.vmem [#allocation9], %s524
          %s527 = ssub.s32 8192, 8192
          %528 = vsyncadd %s522, %s527
          %s529 = smul.addr %s40, 128
          %s530 = smul.addr %s529, 64
          %s531 = scalar_lea.hbm %s6, %s530
          %s532 = sshll.u32 %s525, 4
          %s533 = int_to_ptr.vmem [resolvable:$true] %s532
          %538 = dma.hbm_to_vmem [thread:$0]  %s531, 8192, %s533, %s522, 128, 128, 8
        $region60: #{first_vicuna_forward.1} parent=31 // pred_fallthru
          _
      $region32: #{first_vicuna_forward.1} parent=5 // pred_fallthru
        _
      %p539 = scmp.le.s32.totalorder 1, %s32
      %p540 = scmp.lt.s32.totalorder %s32, 5
      %p541 = pnand %p539, %p540
      %p542 = pneg %p541
      // Predicated region
      $region61: #{first_vicuna_forward.1} parent=5 // pred_check
        _
      $region62: #{first_vicuna_forward.1} parent=5 // pred_check_branch
        %544 = sbr.rel (%p541) target = $region64
      $region63: #{first_vicuna_forward.1} parent=5 // pred_region
        %s545 = ssub.s32 %s32, 1
        %s546 = sand.u32 %s109, 1
        %s547 = scalar_lea.sflag [#allocation4], %s546
        %s548 = sand.u32 %s109, 1
        %s549 = smul.addr %s548, 768
        %s550 = scalar_lea.vmem [#allocation3], %s549
        // Predicated region
        $region65: #{first_vicuna_forward.1} parent=63 // pred_check
          %p551 = pneg %p122
        $region66: #{first_vicuna_forward.1} parent=63 // pred_check_branch
          %553 = sbr.rel (%p551) target = $region68
        $region67: #{first_vicuna_forward.1} parent=63 // pred_region
          %554 = dma.done %s547, 12288
        $region68: #{first_vicuna_forward.1} parent=63 // pred_fallthru
          _
        %s555 = sand.u32 %s37, 1
        %s556 = scalar_lea.sflag [#allocation7], %s555
        %s557 = sand.u32 %s135, 1
        %s558 = smul.addr %s557, 256
        %s559 = scalar_lea.vmem [#allocation6], %s558
        // Predicated region
        $region69: #{first_vicuna_forward.1} parent=63 // pred_check
          %p560 = pneg %p148
        $region70: #{first_vicuna_forward.1} parent=63 // pred_check_branch
          %562 = sbr.rel (%p560) target = $region72
        $region71: #{first_vicuna_forward.1} parent=63 // pred_region
          %563 = dma.done %s556, 4096
        $region72: #{first_vicuna_forward.1} parent=63 // pred_fallthru
          _
        %s564 = sand.u32 %s37, 1
        %s565 = scalar_lea.sflag [#allocation7], %s564
        %s566 = sand.u32 %s187, 1
        %s567 = smul.addr %s566, 1024
        %s568 = scalar_lea.vmem [#allocation8], %s567
        // Predicated region
        $region73: #{first_vicuna_forward.1} parent=63 // pred_check
          %p569 = pneg %p200
        $region74: #{first_vicuna_forward.1} parent=63 // pred_check_branch
          %571 = sbr.rel (%p569) target = $region76
        $region75: #{first_vicuna_forward.1} parent=63 // pred_region
          %572 = dma.done %s565, 16384
        $region76: #{first_vicuna_forward.1} parent=63 // pred_fallthru
          _
        %s573 = sand.u32 %s37, 1
        %s574 = scalar_lea.sflag [#allocation10], %s573
        %s575 = sand.u32 %s213, 1
        %s576 = smul.addr %s575, 512
        %s577 = scalar_lea.vmem [#allocation9], %s576
        // Predicated region
        $region77: #{first_vicuna_forward.1} parent=63 // pred_check
          %p578 = pneg %p226
        $region78: #{first_vicuna_forward.1} parent=63 // pred_check_branch
          %580 = sbr.rel (%p578) target = $region80
        $region79: #{first_vicuna_forward.1} parent=63 // pred_region
          %581 = dma.done %s574, 8192
        $region80: #{first_vicuna_forward.1} parent=63 // pred_fallthru
          _
        // Predicated region
        $region81: #{first_vicuna_forward.1} parent=63 // pred_check
          %p582 = pneg %p310
        $region82: #{first_vicuna_forward.1} parent=63 // pred_check_branch
          %584 = sbr.rel (%p582) target = $region84
        $region83: #{first_vicuna_forward.1} parent=63 // pred_region
          %585 = dma.done [#allocation10], 8192
        $region84: #{first_vicuna_forward.1} parent=63 // pred_fallthru
          _
        %p586 = scmp.lt.s32.totalorder %s41, 1
        %s587 = scalar_select %p586, %s41, 1
        %s588 = smul.addr %s587, 4
        %s589 = smul.addr %s588, 4
        %s590 = scalar_lea.vmem %s0, %s589
        %p591 = pneg %p70
        %p592 = pneg %p67
        %p593 = scmp.lt.s32.totalorder %s42, 1
        %s594 = scalar_select %p593, %s42, 1
        %s595 = smul.addr %s594, 2
        %s596 = scalar_lea.vmem %s1, %s595
        %p597 = pneg %p96
        %p598 = pneg %p93
        %s599 = sand.u32 %s109, 1
        %s600 = scalar_lea.sflag [#allocation4], %s599
        %s601 = sand.u32 %s109, 1
        %s602 = smul.addr %s601, 768
        %s603 = scalar_lea.vmem [#allocation3], %s602
        %p604 = pneg %p122
        %p605 = pneg %p119
        %s606 = sand.u32 %s37, 1
        %s607 = scalar_lea.sflag [#allocation7], %s606
        %s608 = sand.u32 %s135, 1
        %s609 = smul.addr %s608, 256
        %s610 = scalar_lea.vmem [#allocation6], %s609
        %p611 = pneg %p148
        %p612 = pneg %p145
        %p613 = scmp.lt.s32.totalorder %s42, 1
        %s614 = scalar_select %p613, %s42, 1
        %s615 = smul.addr %s614, 2
        %s616 = scalar_lea.vmem %s4, %s615
        %p617 = pneg %p174
        %p618 = pneg %p171
        %s619 = sand.u32 %s37, 1
        %s620 = scalar_lea.sflag [#allocation7], %s619
        %s621 = sand.u32 %s187, 1
        %s622 = smul.addr %s621, 1024
        %s623 = scalar_lea.vmem [#allocation8], %s622
        %p624 = pneg %p200
        %p625 = pneg %p197
        %s626 = sand.u32 %s37, 1
        %s627 = scalar_lea.sflag [#allocation10], %s626
        %s628 = sand.u32 %s213, 1
        %s629 = smul.addr %s628, 512
        %s630 = scalar_lea.vmem [#allocation9], %s629
        %p631 = pneg %p226
        %p632 = pneg %p223
        %p633 = pneg %p247
        %p634 = pneg %p244
        %p635 = pneg %p268
        %p636 = pneg %p265
        %p637 = pneg %p289
        %p638 = pneg %p286
        %p639 = pneg %p310
        %p640 = pneg %p307
        %p641 = pneg %p338
        %p642 = pneg %p335
        %p643 = scmp.lt.s32.totalorder %s41, 1
        %s644 = scalar_select %p643, %s41, 1
        %p645 = scmp.lt.s32.totalorder %s42, 1
        %s646 = scalar_select %p645, %s42, 1
        %s647 = smul.addr %s646, 4
        %s648 = smul.addr %s644, 8
        %s649 = sadd.s32 %s647, %s648
        %s650 = smul.addr %s649, 4
        %s651 = scalar_lea.vmem %s11, %s650
        %p652 = pneg %p366
        %p653 = pneg %p363
        %p654 = scmp.lt.s32.totalorder %s41, 1
        %s655 = scalar_select %p654, %s41, 1
        %p656 = scmp.lt.s32.totalorder %s42, 1
        %s657 = scalar_select %p656, %s42, 1
        %s658 = smul.addr %s657, 4
        %s659 = smul.addr %s655, 8
        %s660 = sadd.s32 %s658, %s659
        %s661 = smul.addr %s660, 4
        %s662 = scalar_lea.vmem %s12, %s661
        %p663 = pneg %p392
        %p664 = pneg %p389
        %s665 = sand.u32 %s379, 1
        %s666 = scalar_lea.sflag [#allocation5], %s665
        %s667 = sand.u32 %s379, 1
        %s668 = smul.addr %s667, 64
        %s669 = scalar_lea.vmem [#allocation12], %s668
        %p670 = scmp.lt.s32.totalorder %s41, 1
        %s671 = scalar_select %p670, %s41, 1
        %s672 = smul.addr %s671, 4
        %s673 = smul.addr %s672, 4
        %s674 = scalar_lea.vmem %s0, %s673
        %p675 = scmp.lt.s32.totalorder %s42, 1
        %s676 = scalar_select %p675, %s42, 1
        %s677 = smul.addr %s676, 2
        %s678 = scalar_lea.vmem %s1, %s677
        %p679 = scmp.lt.s32.totalorder %s42, 1
        %s680 = scalar_select %p679, %s42, 1
        %s681 = smul.addr %s680, 2
        %s682 = scalar_lea.vmem %s4, %s681
        %p683 = scmp.lt.s32.totalorder %s41, 1
        %s684 = scalar_select %p683, %s41, 1
        %p685 = scmp.lt.s32.totalorder %s42, 1
        %s686 = scalar_select %p685, %s42, 1
        %s687 = smul.addr %s686, 4
        %s688 = smul.addr %s684, 8
        %s689 = sadd.s32 %s687, %s688
        %s690 = smul.addr %s689, 4
        %s691 = scalar_lea.vmem %s11, %s690
        %p692 = scmp.lt.s32.totalorder %s41, 1
        %s693 = scalar_select %p692, %s41, 1
        %p694 = scmp.lt.s32.totalorder %s42, 1
        %s695 = scalar_select %p694, %s42, 1
        %s696 = smul.addr %s695, 4
        %s697 = smul.addr %s693, 8
        %s698 = sadd.s32 %s696, %s697
        %s699 = smul.addr %s698, 4
        %s700 = scalar_lea.vmem %s12, %s699
        %p702 = scmp.eq.s32.totalorder %s42, 0
        // Predicated region
        $region85: #{first_vicuna_forward.1} parent=63 // pred_check
          %p703 = pneg %p702
        $region86: #{first_vicuna_forward.1} parent=63 // pred_check_branch
          %705 = sbr.rel (%p703) target = $region88
        $region87: #{first_vicuna_forward.1} parent=63 // pred_region
          %v706 = vld [vmem:[%s674] sm:$0xff]
          %v707 = vld [vmem:[%s674 + $0x8] sm:$0xff]
          %v708 = vunpack.c.l.bf16 %v706
          %v709 = vunpack.c.h.bf16 %v706
          %v710 = vunpack.c.l.bf16 %v707
          %v711 = vunpack.c.h.bf16 %v707
          %712 = vst [vmem:[#allocation2] sm:$0xff] %v708
          %713 = vst [vmem:[#allocation2 + $0x8] sm:$0xff] %v709
          %714 = vst [vmem:[#allocation2 + $0x10] sm:$0xff] %v710
          %715 = vst [vmem:[#allocation2 + $0x18] sm:$0xff] %v711
        $region88: #{first_vicuna_forward.1} parent=63 // pred_fallthru
          _
        %v716 = vld [vmem:[#allocation2] sm:$0xff]
        %v717 = vld [vmem:[#allocation2 + $0x8] sm:$0xff]
        %v718 = vld [vmem:[#allocation2 + $0x10] sm:$0xff]
        %v719 = vld [vmem:[#allocation2 + $0x18] sm:$0xff]
        %v720 = vld [vmem:[%s678] sm:$0x3]
        %v721 = vunpack.c.l.bf16 %v720
        %v722 = vmul.f32 %v716, %v716
        %v723 = vmul.f32 %v717, %v717
        %v724 = vmul.f32 %v718, %v718
        %v725 = vmul.f32 %v719, %v719
        %v726 = vadd.f32 %v722, %v723
        %727 = vadd.xlane.f32.xlu0 %v726
        %v728 = vpop.xlane.xlu0 %727
        %v729 = vadd.f32 %v724, %v725
        %730 = vadd.xlane.f32.xlu0 %v729
        %v731 = vpop.xlane.xlu0 %730
        %v732 = vrcp.pop 256.0
        %v733 = vmul.f32 %v728, %v732
        %v734 = vmul.f32 %v731, %v732
        %v735 = vadd.f32 %v733, 1e-06
        %v736 = vadd.f32 %v734, 1e-06
        %v737 = vrsqrt.pop %v735
        %v738 = vrsqrt.pop %v736
        %v739 = vmul.f32 %v716, %v737
        %v740 = vmul.f32 %v717, %v737
        %v741 = vmul.f32 %v718, %v738
        %v742 = vmul.f32 %v719, %v738
        %v744 = vlaneseq
        %v745 = vshrl.u32 %v744, 7
        %v746 = vsub.s32 0, %v745
        %v747 = vrot.slane %v721, %v746
        %v748 = vlaneseq
        %v749 = vshrl.u32 %v748, 7
        %v750 = vsub.s32 2, %v749
        %v751 = vrot.slane %v721, %v750
        %v754 = vlaneseq
        %v755 = vshrl.u32 %v754, 7
        %v756 = vsub.s32 0, %v755
        %v757 = vrot.slane %v747, %v756
        %v758 = vlaneseq
        %v759 = vshrl.u32 %v758, 7
        %v760 = vsub.s32 0, %v759
        %v761 = vrot.slane %v751, %v760
        %v762 = vmul.f32 %v739, %v757
        %v763 = vmul.f32 %v740, %v761
        %v764 = vmul.f32 %v741, %v757
        %v765 = vmul.f32 %v742, %v761
        %v766 = vpack.c.bf16 %v764, %v762
        %v767 = vpack.c.bf16 %v765, %v763
        %v768 = vld [vmem:[%s550] sm:$0xff]
        %v769 = vld [vmem:[%s550 + $0x8] sm:$0xff]
        %v770 = vld [vmem:[%s550 + $0x10] sm:$0xff]
        %v771 = vld [vmem:[%s550 + $0x18] sm:$0xff]
        %v772 = vld [vmem:[%s550 + $0x20] sm:$0xff]
        %v773 = vld [vmem:[%s550 + $0x28] sm:$0xff]
        %v774 = vld [vmem:[%s550 + $0x30] sm:$0xff]
        %v775 = vld [vmem:[%s550 + $0x38] sm:$0xff]
        %v776 = vld [vmem:[%s550 + $0x40] sm:$0xff]
        %v777 = vld [vmem:[%s550 + $0x48] sm:$0xff]
        %v778 = vld [vmem:[%s550 + $0x50] sm:$0xff]
        %v779 = vld [vmem:[%s550 + $0x58] sm:$0xff]
        %v780 = vld [vmem:[%s550 + $0x60] sm:$0xff]
        %v781 = vld [vmem:[%s550 + $0x68] sm:$0xff]
        %v782 = vld [vmem:[%s550 + $0x70] sm:$0xff]
        %v783 = vld [vmem:[%s550 + $0x78] sm:$0xff]
        %v784 = vld [vmem:[%s550 + $0x80] sm:$0xff]
        %v785 = vld [vmem:[%s550 + $0x88] sm:$0xff]
        %v786 = vld [vmem:[%s550 + $0x90] sm:$0xff]
        %v787 = vld [vmem:[%s550 + $0x98] sm:$0xff]
        %v788 = vld [vmem:[%s550 + $0xa0] sm:$0xff]
        %v789 = vld [vmem:[%s550 + $0xa8] sm:$0xff]
        %v790 = vld [vmem:[%s550 + $0xb0] sm:$0xff]
        %v791 = vld [vmem:[%s550 + $0xb8] sm:$0xff]
        %v792 = vld [vmem:[%s550 + $0xc0] sm:$0xff]
        %v793 = vld [vmem:[%s550 + $0xc8] sm:$0xff]
        %v794 = vld [vmem:[%s550 + $0xd0] sm:$0xff]
        %v795 = vld [vmem:[%s550 + $0xd8] sm:$0xff]
        %v796 = vld [vmem:[%s550 + $0xe0] sm:$0xff]
        %v797 = vld [vmem:[%s550 + $0xe8] sm:$0xff]
        %v798 = vld [vmem:[%s550 + $0xf0] sm:$0xff]
        %v799 = vld [vmem:[%s550 + $0xf8] sm:$0xff]
        %v800 = vld [vmem:[%s550 + $0x100] sm:$0xff]
        %v801 = vld [vmem:[%s550 + $0x108] sm:$0xff]
        %v802 = vld [vmem:[%s550 + $0x110] sm:$0xff]
        %v803 = vld [vmem:[%s550 + $0x118] sm:$0xff]
        %v804 = vld [vmem:[%s550 + $0x120] sm:$0xff]
        %v805 = vld [vmem:[%s550 + $0x128] sm:$0xff]
        %v806 = vld [vmem:[%s550 + $0x130] sm:$0xff]
        %v807 = vld [vmem:[%s550 + $0x138] sm:$0xff]
        %v808 = vld [vmem:[%s550 + $0x140] sm:$0xff]
        %v809 = vld [vmem:[%s550 + $0x148] sm:$0xff]
        %v810 = vld [vmem:[%s550 + $0x150] sm:$0xff]
        %v811 = vld [vmem:[%s550 + $0x158] sm:$0xff]
        %v812 = vld [vmem:[%s550 + $0x160] sm:$0xff]
        %v813 = vld [vmem:[%s550 + $0x168] sm:$0xff]
        %v814 = vld [vmem:[%s550 + $0x170] sm:$0xff]
        %v815 = vld [vmem:[%s550 + $0x178] sm:$0xff]
        %v816 = vld [vmem:[%s550 + $0x180] sm:$0xff]
        %v817 = vld [vmem:[%s550 + $0x188] sm:$0xff]
        %v818 = vld [vmem:[%s550 + $0x190] sm:$0xff]
        %v819 = vld [vmem:[%s550 + $0x198] sm:$0xff]
        %v820 = vld [vmem:[%s550 + $0x1a0] sm:$0xff]
        %v821 = vld [vmem:[%s550 + $0x1a8] sm:$0xff]
        %v822 = vld [vmem:[%s550 + $0x1b0] sm:$0xff]
        %v823 = vld [vmem:[%s550 + $0x1b8] sm:$0xff]
        %v824 = vld [vmem:[%s550 + $0x1c0] sm:$0xff]
        %v825 = vld [vmem:[%s550 + $0x1c8] sm:$0xff]
        %v826 = vld [vmem:[%s550 + $0x1d0] sm:$0xff]
        %v827 = vld [vmem:[%s550 + $0x1d8] sm:$0xff]
        %v828 = vld [vmem:[%s550 + $0x1e0] sm:$0xff]
        %v829 = vld [vmem:[%s550 + $0x1e8] sm:$0xff]
        %v830 = vld [vmem:[%s550 + $0x1f0] sm:$0xff]
        %v831 = vld [vmem:[%s550 + $0x1f8] sm:$0xff]
        %v832 = vld [vmem:[%s550 + $0x200] sm:$0xff]
        %v833 = vld [vmem:[%s550 + $0x208] sm:$0xff]
        %v834 = vld [vmem:[%s550 + $0x210] sm:$0xff]
        %v835 = vld [vmem:[%s550 + $0x218] sm:$0xff]
        %v836 = vld [vmem:[%s550 + $0x220] sm:$0xff]
        %v837 = vld [vmem:[%s550 + $0x228] sm:$0xff]
        %v838 = vld [vmem:[%s550 + $0x230] sm:$0xff]
        %v839 = vld [vmem:[%s550 + $0x238] sm:$0xff]
        %v840 = vld [vmem:[%s550 + $0x240] sm:$0xff]
        %v841 = vld [vmem:[%s550 + $0x248] sm:$0xff]
        %v842 = vld [vmem:[%s550 + $0x250] sm:$0xff]
        %v843 = vld [vmem:[%s550 + $0x258] sm:$0xff]
        %v844 = vld [vmem:[%s550 + $0x260] sm:$0xff]
        %v845 = vld [vmem:[%s550 + $0x268] sm:$0xff]
        %v846 = vld [vmem:[%s550 + $0x270] sm:$0xff]
        %v847 = vld [vmem:[%s550 + $0x278] sm:$0xff]
        %v848 = vld [vmem:[%s550 + $0x280] sm:$0xff]
        %v849 = vld [vmem:[%s550 + $0x288] sm:$0xff]
        %v850 = vld [vmem:[%s550 + $0x290] sm:$0xff]
        %v851 = vld [vmem:[%s550 + $0x298] sm:$0xff]
        %v852 = vld [vmem:[%s550 + $0x2a0] sm:$0xff]
        %v853 = vld [vmem:[%s550 + $0x2a8] sm:$0xff]
        %v854 = vld [vmem:[%s550 + $0x2b0] sm:$0xff]
        %v855 = vld [vmem:[%s550 + $0x2b8] sm:$0xff]
        %v856 = vld [vmem:[%s550 + $0x2c0] sm:$0xff]
        %v857 = vld [vmem:[%s550 + $0x2c8] sm:$0xff]
        %v858 = vld [vmem:[%s550 + $0x2d0] sm:$0xff]
        %v859 = vld [vmem:[%s550 + $0x2d8] sm:$0xff]
        %v860 = vld [vmem:[%s550 + $0x2e0] sm:$0xff]
        %v861 = vld [vmem:[%s550 + $0x2e8] sm:$0xff]
        %v862 = vld [vmem:[%s550 + $0x2f0] sm:$0xff]
        %v863 = vld [vmem:[%s550 + $0x2f8] sm:$0xff]
        %v960 = vunpack.c.l.b16 %v768
        %v961 = vunpack.c.h.b16 %v768
        %v962 = vunpack.c.l.b16 %v769
        %v963 = vunpack.c.h.b16 %v769
        %v964 = vunpack.c.l.b16 %v770
        %v965 = vunpack.c.h.b16 %v770
        %v966 = vunpack.c.l.b16 %v771
        %v967 = vunpack.c.h.b16 %v771
        %v968 = vunpack.c.l.b16 %v772
        %v969 = vunpack.c.h.b16 %v772
        %v970 = vunpack.c.l.b16 %v773
        %v971 = vunpack.c.h.b16 %v773
        %v972 = vunpack.c.l.b16 %v774
        %v973 = vunpack.c.h.b16 %v774
        %v974 = vunpack.c.l.b16 %v775
        %v975 = vunpack.c.h.b16 %v775
        %v976 = vunpack.c.l.b16 %v776
        %v977 = vunpack.c.h.b16 %v776
        %v978 = vunpack.c.l.b16 %v777
        %v979 = vunpack.c.h.b16 %v777
        %v980 = vunpack.c.l.b16 %v778
        %v981 = vunpack.c.h.b16 %v778
        %v982 = vunpack.c.l.b16 %v779
        %v983 = vunpack.c.h.b16 %v779
        %v984 = vunpack.c.l.b16 %v780
        %v985 = vunpack.c.h.b16 %v780
        %v986 = vunpack.c.l.b16 %v781
        %v987 = vunpack.c.h.b16 %v781
        %v988 = vunpack.c.l.b16 %v782
        %v989 = vunpack.c.h.b16 %v782
        %v990 = vunpack.c.l.b16 %v783
        %v991 = vunpack.c.h.b16 %v783
        %v992 = vunpack.c.l.b16 %v784
        %v993 = vunpack.c.h.b16 %v784
        %v994 = vunpack.c.l.b16 %v785
        %v995 = vunpack.c.h.b16 %v785
        %v996 = vunpack.c.l.b16 %v786
        %v997 = vunpack.c.h.b16 %v786
        %v998 = vunpack.c.l.b16 %v787
        %v999 = vunpack.c.h.b16 %v787
        %v1000 = vunpack.c.l.b16 %v788
        %v1001 = vunpack.c.h.b16 %v788
        %v1002 = vunpack.c.l.b16 %v789
        %v1003 = vunpack.c.h.b16 %v789
        %v1004 = vunpack.c.l.b16 %v790
        %v1005 = vunpack.c.h.b16 %v790
        %v1006 = vunpack.c.l.b16 %v791
        %v1007 = vunpack.c.h.b16 %v791
        %v1008 = vunpack.c.l.b16 %v792
        %v1009 = vunpack.c.h.b16 %v792
        %v1010 = vunpack.c.l.b16 %v793
        %v1011 = vunpack.c.h.b16 %v793
        %v1012 = vunpack.c.l.b16 %v794
        %v1013 = vunpack.c.h.b16 %v794
        %v1014 = vunpack.c.l.b16 %v795
        %v1015 = vunpack.c.h.b16 %v795
        %v1016 = vunpack.c.l.b16 %v796
        %v1017 = vunpack.c.h.b16 %v796
        %v1018 = vunpack.c.l.b16 %v797
        %v1019 = vunpack.c.h.b16 %v797
        %v1020 = vunpack.c.l.b16 %v798
        %v1021 = vunpack.c.h.b16 %v798
        %v1022 = vunpack.c.l.b16 %v799
        %v1023 = vunpack.c.h.b16 %v799
        %v1024 = vunpack.c.l.b16 %v800
        %v1025 = vunpack.c.h.b16 %v800
        %v1026 = vunpack.c.l.b16 %v801
        %v1027 = vunpack.c.h.b16 %v801
        %v1028 = vunpack.c.l.b16 %v802
        %v1029 = vunpack.c.h.b16 %v802
        %v1030 = vunpack.c.l.b16 %v803
        %v1031 = vunpack.c.h.b16 %v803
        %v1032 = vunpack.c.l.b16 %v804
        %v1033 = vunpack.c.h.b16 %v804
        %v1034 = vunpack.c.l.b16 %v805
        %v1035 = vunpack.c.h.b16 %v805
        %v1036 = vunpack.c.l.b16 %v806
        %v1037 = vunpack.c.h.b16 %v806
        %v1038 = vunpack.c.l.b16 %v807
        %v1039 = vunpack.c.h.b16 %v807
        %v1040 = vunpack.c.l.b16 %v808
        %v1041 = vunpack.c.h.b16 %v808
        %v1042 = vunpack.c.l.b16 %v809
        %v1043 = vunpack.c.h.b16 %v809
        %v1044 = vunpack.c.l.b16 %v810
        %v1045 = vunpack.c.h.b16 %v810
        %v1046 = vunpack.c.l.b16 %v811
        %v1047 = vunpack.c.h.b16 %v811
        %v1048 = vunpack.c.l.b16 %v812
        %v1049 = vunpack.c.h.b16 %v812
        %v1050 = vunpack.c.l.b16 %v813
        %v1051 = vunpack.c.h.b16 %v813
        %v1052 = vunpack.c.l.b16 %v814
        %v1053 = vunpack.c.h.b16 %v814
        %v1054 = vunpack.c.l.b16 %v815
        %v1055 = vunpack.c.h.b16 %v815
        %v1056 = vunpack.c.l.b16 %v816
        %v1057 = vunpack.c.h.b16 %v816
        %v1058 = vunpack.c.l.b16 %v817
        %v1059 = vunpack.c.h.b16 %v817
        %v1060 = vunpack.c.l.b16 %v818
        %v1061 = vunpack.c.h.b16 %v818
        %v1062 = vunpack.c.l.b16 %v819
        %v1063 = vunpack.c.h.b16 %v819
        %v1064 = vunpack.c.l.b16 %v820
        %v1065 = vunpack.c.h.b16 %v820
        %v1066 = vunpack.c.l.b16 %v821
        %v1067 = vunpack.c.h.b16 %v821
        %v1068 = vunpack.c.l.b16 %v822
        %v1069 = vunpack.c.h.b16 %v822
        %v1070 = vunpack.c.l.b16 %v823
        %v1071 = vunpack.c.h.b16 %v823
        %v1072 = vunpack.c.l.b16 %v824
        %v1073 = vunpack.c.h.b16 %v824
        %v1074 = vunpack.c.l.b16 %v825
        %v1075 = vunpack.c.h.b16 %v825
        %v1076 = vunpack.c.l.b16 %v826
        %v1077 = vunpack.c.h.b16 %v826
        %v1078 = vunpack.c.l.b16 %v827
        %v1079 = vunpack.c.h.b16 %v827
        %v1080 = vunpack.c.l.b16 %v828
        %v1081 = vunpack.c.h.b16 %v828
        %v1082 = vunpack.c.l.b16 %v829
        %v1083 = vunpack.c.h.b16 %v829
        %v1084 = vunpack.c.l.b16 %v830
        %v1085 = vunpack.c.h.b16 %v830
        %v1086 = vunpack.c.l.b16 %v831
        %v1087 = vunpack.c.h.b16 %v831
        %v1088 = vunpack.c.l.b16 %v832
        %v1089 = vunpack.c.h.b16 %v832
        %v1090 = vunpack.c.l.b16 %v833
        %v1091 = vunpack.c.h.b16 %v833
        %v1092 = vunpack.c.l.b16 %v834
        %v1093 = vunpack.c.h.b16 %v834
        %v1094 = vunpack.c.l.b16 %v835
        %v1095 = vunpack.c.h.b16 %v835
        %v1096 = vunpack.c.l.b16 %v836
        %v1097 = vunpack.c.h.b16 %v836
        %v1098 = vunpack.c.l.b16 %v837
        %v1099 = vunpack.c.h.b16 %v837
        %v1100 = vunpack.c.l.b16 %v838
        %v1101 = vunpack.c.h.b16 %v838
        %v1102 = vunpack.c.l.b16 %v839
        %v1103 = vunpack.c.h.b16 %v839
        %v1104 = vunpack.c.l.b16 %v840
        %v1105 = vunpack.c.h.b16 %v840
        %v1106 = vunpack.c.l.b16 %v841
        %v1107 = vunpack.c.h.b16 %v841
        %v1108 = vunpack.c.l.b16 %v842
        %v1109 = vunpack.c.h.b16 %v842
        %v1110 = vunpack.c.l.b16 %v843
        %v1111 = vunpack.c.h.b16 %v843
        %v1112 = vunpack.c.l.b16 %v844
        %v1113 = vunpack.c.h.b16 %v844
        %v1114 = vunpack.c.l.b16 %v845
        %v1115 = vunpack.c.h.b16 %v845
        %v1116 = vunpack.c.l.b16 %v846
        %v1117 = vunpack.c.h.b16 %v846
        %v1118 = vunpack.c.l.b16 %v847
        %v1119 = vunpack.c.h.b16 %v847
        %v1120 = vunpack.c.l.b16 %v848
        %v1121 = vunpack.c.h.b16 %v848
        %v1122 = vunpack.c.l.b16 %v849
        %v1123 = vunpack.c.h.b16 %v849
        %v1124 = vunpack.c.l.b16 %v850
        %v1125 = vunpack.c.h.b16 %v850
        %v1126 = vunpack.c.l.b16 %v851
        %v1127 = vunpack.c.h.b16 %v851
        %v1128 = vunpack.c.l.b16 %v852
        %v1129 = vunpack.c.h.b16 %v852
        %v1130 = vunpack.c.l.b16 %v853
        %v1131 = vunpack.c.h.b16 %v853
        %v1132 = vunpack.c.l.b16 %v854
        %v1133 = vunpack.c.h.b16 %v854
        %v1134 = vunpack.c.l.b16 %v855
        %v1135 = vunpack.c.h.b16 %v855
        %v1136 = vunpack.c.l.b16 %v856
        %v1137 = vunpack.c.h.b16 %v856
        %v1138 = vunpack.c.l.b16 %v857
        %v1139 = vunpack.c.h.b16 %v857
        %v1140 = vunpack.c.l.b16 %v858
        %v1141 = vunpack.c.h.b16 %v858
        %v1142 = vunpack.c.l.b16 %v859
        %v1143 = vunpack.c.h.b16 %v859
        %v1144 = vunpack.c.l.b16 %v860
        %v1145 = vunpack.c.h.b16 %v860
        %v1146 = vunpack.c.l.b16 %v861
        %v1147 = vunpack.c.h.b16 %v861
        %v1148 = vunpack.c.l.b16 %v862
        %v1149 = vunpack.c.h.b16 %v862
        %v1150 = vunpack.c.l.b16 %v863
        %v1151 = vunpack.c.h.b16 %v863
        %v1152 = vpack.c.b16 %v966, %v960
        %v1153 = vpack.c.b16 %v967, %v961
        %v1154 = vpack.c.b16 %v968, %v962
        %v1155 = vpack.c.b16 %v969, %v963
        %v1156 = vpack.c.b16 %v970, %v964
        %v1157 = vpack.c.b16 %v971, %v965
        %v1158 = vpack.c.b16 %v978, %v972
        %v1159 = vpack.c.b16 %v979, %v973
        %v1160 = vpack.c.b16 %v980, %v974
        %v1161 = vpack.c.b16 %v981, %v975
        %v1162 = vpack.c.b16 %v982, %v976
        %v1163 = vpack.c.b16 %v983, %v977
        %v1164 = vpack.c.b16 %v990, %v984
        %v1165 = vpack.c.b16 %v991, %v985
        %v1166 = vpack.c.b16 %v992, %v986
        %v1167 = vpack.c.b16 %v993, %v987
        %v1168 = vpack.c.b16 %v994, %v988
        %v1169 = vpack.c.b16 %v995, %v989
        %v1170 = vpack.c.b16 %v1002, %v996
        %v1171 = vpack.c.b16 %v1003, %v997
        %v1172 = vpack.c.b16 %v1004, %v998
        %v1173 = vpack.c.b16 %v1005, %v999
        %v1174 = vpack.c.b16 %v1006, %v1000
        %v1175 = vpack.c.b16 %v1007, %v1001
        %v1176 = vpack.c.b16 %v1014, %v1008
        %v1177 = vpack.c.b16 %v1015, %v1009
        %v1178 = vpack.c.b16 %v1016, %v1010
        %v1179 = vpack.c.b16 %v1017, %v1011
        %v1180 = vpack.c.b16 %v1018, %v1012
        %v1181 = vpack.c.b16 %v1019, %v1013
        %v1182 = vpack.c.b16 %v1026, %v1020
        %v1183 = vpack.c.b16 %v1027, %v1021
        %v1184 = vpack.c.b16 %v1028, %v1022
        %v1185 = vpack.c.b16 %v1029, %v1023
        %v1186 = vpack.c.b16 %v1030, %v1024
        %v1187 = vpack.c.b16 %v1031, %v1025
        %v1188 = vpack.c.b16 %v1038, %v1032
        %v1189 = vpack.c.b16 %v1039, %v1033
        %v1190 = vpack.c.b16 %v1040, %v1034
        %v1191 = vpack.c.b16 %v1041, %v1035
        %v1192 = vpack.c.b16 %v1042, %v1036
        %v1193 = vpack.c.b16 %v1043, %v1037
        %v1194 = vpack.c.b16 %v1050, %v1044
        %v1195 = vpack.c.b16 %v1051, %v1045
        %v1196 = vpack.c.b16 %v1052, %v1046
        %v1197 = vpack.c.b16 %v1053, %v1047
        %v1198 = vpack.c.b16 %v1054, %v1048
        %v1199 = vpack.c.b16 %v1055, %v1049
        %v1200 = vpack.c.b16 %v1062, %v1056
        %v1201 = vpack.c.b16 %v1063, %v1057
        %v1202 = vpack.c.b16 %v1064, %v1058
        %v1203 = vpack.c.b16 %v1065, %v1059
        %v1204 = vpack.c.b16 %v1066, %v1060
        %v1205 = vpack.c.b16 %v1067, %v1061
        %v1206 = vpack.c.b16 %v1074, %v1068
        %v1207 = vpack.c.b16 %v1075, %v1069
        %v1208 = vpack.c.b16 %v1076, %v1070
        %v1209 = vpack.c.b16 %v1077, %v1071
        %v1210 = vpack.c.b16 %v1078, %v1072
        %v1211 = vpack.c.b16 %v1079, %v1073
        %v1212 = vpack.c.b16 %v1086, %v1080
        %v1213 = vpack.c.b16 %v1087, %v1081
        %v1214 = vpack.c.b16 %v1088, %v1082
        %v1215 = vpack.c.b16 %v1089, %v1083
        %v1216 = vpack.c.b16 %v1090, %v1084
        %v1217 = vpack.c.b16 %v1091, %v1085
        %v1218 = vpack.c.b16 %v1098, %v1092
        %v1219 = vpack.c.b16 %v1099, %v1093
        %v1220 = vpack.c.b16 %v1100, %v1094
        %v1221 = vpack.c.b16 %v1101, %v1095
        %v1222 = vpack.c.b16 %v1102, %v1096
        %v1223 = vpack.c.b16 %v1103, %v1097
        %v1224 = vpack.c.b16 %v1110, %v1104
        %v1225 = vpack.c.b16 %v1111, %v1105
        %v1226 = vpack.c.b16 %v1112, %v1106
        %v1227 = vpack.c.b16 %v1113, %v1107
        %v1228 = vpack.c.b16 %v1114, %v1108
        %v1229 = vpack.c.b16 %v1115, %v1109
        %v1230 = vpack.c.b16 %v1122, %v1116
        %v1231 = vpack.c.b16 %v1123, %v1117
        %v1232 = vpack.c.b16 %v1124, %v1118
        %v1233 = vpack.c.b16 %v1125, %v1119
        %v1234 = vpack.c.b16 %v1126, %v1120
        %v1235 = vpack.c.b16 %v1127, %v1121
        %v1236 = vpack.c.b16 %v1134, %v1128
        %v1237 = vpack.c.b16 %v1135, %v1129
        %v1238 = vpack.c.b16 %v1136, %v1130
        %v1239 = vpack.c.b16 %v1137, %v1131
        %v1240 = vpack.c.b16 %v1138, %v1132
        %v1241 = vpack.c.b16 %v1139, %v1133
        %v1242 = vpack.c.b16 %v1146, %v1140
        %v1243 = vpack.c.b16 %v1147, %v1141
        %v1244 = vpack.c.b16 %v1148, %v1142
        %v1245 = vpack.c.b16 %v1149, %v1143
        %v1246 = vpack.c.b16 %v1150, %v1144
        %v1247 = vpack.c.b16 %v1151, %v1145
        %1344 = vmatprep.subr.bf16.mxu0 %v1195
        %1345 = vmatpush1.bf16.msra.mxu0 %v1194
        %1346 = vmatprep.subr.bf16.mxu0 %v1189
        %1347 = vmatpush1.bf16.msra.mxu0 %v1188
        %1348 = vmatprep.subr.bf16.mxu0 %v1183
        %1349 = vmatpush1.bf16.msra.mxu0 %v1182
        %1350 = vmatprep.subr.bf16.mxu0 %v1177
        %1351 = vmatpush1.bf16.msra.mxu0 %v1176
        %1352 = vmatprep.subr.bf16.mxu0 %v1171
        %1353 = vmatpush1.bf16.msra.mxu0 %v1170
        %1354 = vmatprep.subr.bf16.mxu0 %v1165
        %1355 = vmatpush1.bf16.msra.mxu0 %v1164
        %1356 = vmatprep.subr.bf16.mxu0 %v1159
        %1357 = vmatpush1.bf16.msra.mxu0 %v1158
        %1358 = vmatprep.subr.bf16.mxu0 %v1153
        %1359 = vmatpush1.bf16.msra.mxu0 %v1152
        %1360 = vmatprep.subr.bf16.mxu0 %v1243
        %1361 = vmatpush2.bf16.msra.mxu0 %v1242
        %1362 = vmatprep.subr.bf16.mxu0 %v1237
        %1363 = vmatpush2.bf16.msra.mxu0 %v1236
        %1364 = vmatprep.subr.bf16.mxu0 %v1231
        %1365 = vmatpush2.bf16.msra.mxu0 %v1230
        %1366 = vmatprep.subr.bf16.mxu0 %v1225
        %1367 = vmatpush2.bf16.msra.mxu0 %v1224
        %1368 = vmatprep.subr.bf16.mxu0 %v1219
        %1369 = vmatpush2.bf16.msra.mxu0 %v1218
        %1370 = vmatprep.subr.bf16.mxu0 %v1213
        %1371 = vmatpush2.bf16.msra.mxu0 %v1212
        %1372 = vmatprep.subr.bf16.mxu0 %v1207
        %1373 = vmatpush2.bf16.msra.mxu0 %v1206
        %1374 = vmatprep.subr.bf16.mxu0 %v1201
        %1375 = vmatpush2.bf16.msra.mxu0 %v1200
        %1376 = vmatprep.mubr.bf16.mxu0 %v767
        %1377 = vmatmul.mubr.bf16.gmra.mxu0 %v766
        %v1378 = vpop.f32.mrf.mxu0
        %v1379 = vadd.f32 0.0, %v1378
        %v1380 = vpop.f32.mrf.mxu0
        %v1381 = vadd.f32 0.0, %v1380
        %v1382 = vpop.f32.mrf.mxu0
        %v1383 = vadd.f32 0.0, %v1382
        %v1384 = vpop.f32.mrf.mxu0
        %v1385 = vadd.f32 0.0, %v1384
        %1386 = vdwg.mxu0
        %1387 = vmatprep.subr.bf16.mxu0 %v1197
        %1388 = vmatpush1.bf16.msra.mxu0 %v1196
        %1389 = vmatprep.subr.bf16.mxu0 %v1191
        %1390 = vmatpush1.bf16.msra.mxu0 %v1190
        %1391 = vmatprep.subr.bf16.mxu0 %v1185
        %1392 = vmatpush1.bf16.msra.mxu0 %v1184
        %1393 = vmatprep.subr.bf16.mxu0 %v1179
        %1394 = vmatpush1.bf16.msra.mxu0 %v1178
        %1395 = vmatprep.subr.bf16.mxu0 %v1173
        %1396 = vmatpush1.bf16.msra.mxu0 %v1172
        %1397 = vmatprep.subr.bf16.mxu0 %v1167
        %1398 = vmatpush1.bf16.msra.mxu0 %v1166
        %1399 = vmatprep.subr.bf16.mxu0 %v1161
        %1400 = vmatpush1.bf16.msra.mxu0 %v1160
        %1401 = vmatprep.subr.bf16.mxu0 %v1155
        %1402 = vmatpush1.bf16.msra.mxu0 %v1154
        %1403 = vmatprep.subr.bf16.mxu0 %v1245
        %1404 = vmatpush2.bf16.msra.mxu0 %v1244
        %1405 = vmatprep.subr.bf16.mxu0 %v1239
        %1406 = vmatpush2.bf16.msra.mxu0 %v1238
        %1407 = vmatprep.subr.bf16.mxu0 %v1233
        %1408 = vmatpush2.bf16.msra.mxu0 %v1232
        %1409 = vmatprep.subr.bf16.mxu0 %v1227
        %1410 = vmatpush2.bf16.msra.mxu0 %v1226
        %1411 = vmatprep.subr.bf16.mxu0 %v1221
        %1412 = vmatpush2.bf16.msra.mxu0 %v1220
        %1413 = vmatprep.subr.bf16.mxu0 %v1215
        %1414 = vmatpush2.bf16.msra.mxu0 %v1214
        %1415 = vmatprep.subr.bf16.mxu0 %v1209
        %1416 = vmatpush2.bf16.msra.mxu0 %v1208
        %1417 = vmatprep.subr.bf16.mxu0 %v1203
        %1418 = vmatpush2.bf16.msra.mxu0 %v1202
        %1419 = vmatprep.mubr.bf16.mxu0 %v767
        %1420 = vmatmul.mubr.bf16.gmra.mxu0 %v766
        %v1421 = vpop.f32.mrf.mxu0
        %v1422 = vadd.f32 0.0, %v1421
        %v1423 = vpop.f32.mrf.mxu0
        %v1424 = vadd.f32 0.0, %v1423
        %v1425 = vpop.f32.mrf.mxu0
        %v1426 = vadd.f32 0.0, %v1425
        %v1427 = vpop.f32.mrf.mxu0
        %v1428 = vadd.f32 0.0, %v1427
        %1429 = vdwg.mxu0
        %1430 = vmatprep.subr.bf16.mxu0 %v1199
        %1431 = vmatpush1.bf16.msra.mxu0 %v1198
        %1432 = vmatprep.subr.bf16.mxu0 %v1193
        %1433 = vmatpush1.bf16.msra.mxu0 %v1192
        %1434 = vmatprep.subr.bf16.mxu0 %v1187
        %1435 = vmatpush1.bf16.msra.mxu0 %v1186
        %1436 = vmatprep.subr.bf16.mxu0 %v1181
        %1437 = vmatpush1.bf16.msra.mxu0 %v1180
        %1438 = vmatprep.subr.bf16.mxu0 %v1175
        %1439 = vmatpush1.bf16.msra.mxu0 %v1174
        %1440 = vmatprep.subr.bf16.mxu0 %v1169
        %1441 = vmatpush1.bf16.msra.mxu0 %v1168
        %1442 = vmatprep.subr.bf16.mxu0 %v1163
        %1443 = vmatpush1.bf16.msra.mxu0 %v1162
        %1444 = vmatprep.subr.bf16.mxu0 %v1157
        %1445 = vmatpush1.bf16.msra.mxu0 %v1156
        %1446 = vmatprep.subr.bf16.mxu0 %v1247
        %1447 = vmatpush2.bf16.msra.mxu0 %v1246
        %1448 = vmatprep.subr.bf16.mxu0 %v1241
        %1449 = vmatpush2.bf16.msra.mxu0 %v1240
        %1450 = vmatprep.subr.bf16.mxu0 %v1235
        %1451 = vmatpush2.bf16.msra.mxu0 %v1234
        %1452 = vmatprep.subr.bf16.mxu0 %v1229
        %1453 = vmatpush2.bf16.msra.mxu0 %v1228
        %1454 = vmatprep.subr.bf16.mxu0 %v1223
        %1455 = vmatpush2.bf16.msra.mxu0 %v1222
        %1456 = vmatprep.subr.bf16.mxu0 %v1217
        %1457 = vmatpush2.bf16.msra.mxu0 %v1216
        %1458 = vmatprep.subr.bf16.mxu0 %v1211
        %1459 = vmatpush2.bf16.msra.mxu0 %v1210
        %1460 = vmatprep.subr.bf16.mxu0 %v1205
        %1461 = vmatpush2.bf16.msra.mxu0 %v1204
        %1462 = vmatprep.mubr.bf16.mxu0 %v767
        %1463 = vmatmul.mubr.bf16.gmra.mxu0 %v766
        %v1464 = vpop.f32.mrf.mxu0
        %v1465 = vadd.f32 0.0, %v1464
        %v1466 = vpop.f32.mrf.mxu0
        %v1467 = vadd.f32 0.0, %v1466
        %v1468 = vpop.f32.mrf.mxu0
        %v1469 = vadd.f32 0.0, %v1468
        %v1470 = vpop.f32.mrf.mxu0
        %v1471 = vadd.f32 0.0, %v1470
        %1472 = vdwg.mxu0
        %v1473 = vld [vmem:[%s7] sm:$0xff]
        %v1474 = vld [vmem:[%s7 + $0x8] sm:$0xff]
        %v1475 = vld [vmem:[%s8] sm:$0xff]
        %v1476 = vld [vmem:[%s8 + $0x8] sm:$0xff]
        %v1477 = vlaneseq
        %v1478 = vand.u32 %v1477, 127
        %vm1479 = vcmp.lt.s32.totalorder %v1478, 64
        %v1480 = vsub.f32 0.0, %v1475
        %v1481 = vsub.f32 0.0, %v1476
        %v1482 = vsel %vm1479, %v1480, %v1475
        %v1483 = vsel %vm1479, %v1481, %v1476
        %v1484 = vlaneseq
        %v1485 = vshrl.u32 %v1484, 7
        %v1486 = vadd.s32 %v1485, 8
        %vm1487 = vcmp.le.s32.totalorder %v1478, %v1485
        %vm1488 = vcmp.le.s32.totalorder %v1478, %v1486
        %v1489 = vmul.f32 %v1379, %v1473
        %v1490 = vmul.f32 %v1383, %v1474
        %1491 = vrot.lane.b32.xlu0 %v1379, 64
        %v1492 = vpop.permute.xlu0 %1491
        %1493 = vrot.lane.b32.xlu0 %v1383, 64
        %v1494 = vpop.permute.xlu0 %1493
        %v1495 = vmul.f32 %v1492, %v1482
        %v1496 = vmul.f32 %v1494, %v1483
        %v1497 = vadd.f32 %v1489, %v1495
        %v1498 = vadd.f32 %v1490, %v1496
        %v1499 = vmul.f32 %v1422, %v1473
        %v1500 = vmul.f32 %v1426, %v1474
        %1501 = vrot.lane.b32.xlu0 %v1422, 64
        %v1502 = vpop.permute.xlu0 %1501
        %1503 = vrot.lane.b32.xlu0 %v1426, 64
        %v1504 = vpop.permute.xlu0 %1503
        %v1505 = vmul.f32 %v1502, %v1482
        %v1506 = vmul.f32 %v1504, %v1483
        %v1507 = vadd.f32 %v1499, %v1505
        %v1508 = vadd.f32 %v1500, %v1506
        %v1509 = vpack.c.bf16 %v1498, %v1497
        %v1510 = vpack.c.bf16 %v1508, %v1507
        %1511 = vmatprep.subr.bf16.mxu0 0
        %1512 = vmatpush1.bf16.xpose.msra.mxu0 0
        %1513 = vmatprep.subr.bf16.mxu0 0
        %1514 = vmatpush1.bf16.xpose.msra.mxu0 0
        %1515 = vmatprep.subr.bf16.mxu0 0
        %1516 = vmatpush1.bf16.xpose.msra.mxu0 0
        %1517 = vmatprep.subr.bf16.mxu0 0
        %1518 = vmatpush1.bf16.xpose.msra.mxu0 0
        %1519 = vmatprep.subr.bf16.mxu0 0
        %1520 = vmatpush1.bf16.xpose.msra.mxu0 0
        %1521 = vmatprep.subr.bf16.mxu0 0
        %1522 = vmatpush1.bf16.xpose.msra.mxu0 0
        %1523 = vmatprep.subr.bf16.mxu0 0
        %1524 = vmatpush1.bf16.xpose.msra.mxu0 0
        %1525 = vmatprep.subr.bf16.mxu0 0
        %1526 = vmatpush1.bf16.xpose.msra.mxu0 %v1510
        %1527 = vmatprep.subr.bf16.mxu0 0
        %1528 = vmatpush2.bf16.xpose.msra.mxu0 0
        %1529 = vmatprep.subr.bf16.mxu0 0
        %1530 = vmatpush2.bf16.xpose.msra.mxu0 0
        %1531 = vmatprep.subr.bf16.mxu0 0
        %1532 = vmatpush2.bf16.xpose.msra.mxu0 0
        %1533 = vmatprep.subr.bf16.mxu0 0
        %1534 = vmatpush2.bf16.xpose.msra.mxu0 0
        %1535 = vmatprep.subr.bf16.mxu0 0
        %1536 = vmatpush2.bf16.xpose.msra.mxu0 0
        %1537 = vmatprep.subr.bf16.mxu0 0
        %1538 = vmatpush2.bf16.xpose.msra.mxu0 0
        %1539 = vmatprep.subr.bf16.mxu0 0
        %1540 = vmatpush2.bf16.xpose.msra.mxu0 0
        %1541 = vmatprep.subr.bf16.mxu0 0
        %1542 = vmatpush2.bf16.xpose.msra.mxu0 0
        %1543 = vmatprep.mubr.bf16.mxu0 0
        %1544 = vmatmul.mubr.bf16.gmra.mxu0 %v1509
        %v1545 = vpop.f32.mrf.mxu0
        %v1546 = vadd.f32 0.0, %v1545
        %v1547 = vpop.f32.mrf.mxu0
        %v1548 = vpop.f32.mrf.mxu0
        %v1549 = vadd.f32 0.0, %v1548
        %v1550 = vpop.f32.mrf.mxu0
        %1551 = vdwg.mxu0
        %v1552 = vmul.f32 %v1546, 0.088388346
        %v1553 = vmul.f32 %v1549, 0.088388346
        %v1554 = vsel %vm1487, %v1552, -1e+30
        %v1555 = vsel %vm1488, %v1553, -1e+30
        %vm1556 = vcmask 130048
        %v1557 = vsel %vm1556, %v1554, -inf
        %1558 = vmax.xlane.f32.xlu0 %v1557
        %v1559 = vpop.xlane.xlu0 %1558
        %v1560 = vsel %vm1556, %v1555, -inf
        %1561 = vmax.xlane.f32.xlu0 %v1560
        %v1562 = vpop.xlane.xlu0 %1561
        %v1563 = vsub.f32 %v1554, %v1559
        %v1564 = vsub.f32 %v1555, %v1562
        %v1565 = vmul.f32 %v1563, 1.442695
        %v1566 = vpow.pop %v1565
        %v1567 = vmul.f32 %v1564, 1.442695
        %v1568 = vpow.pop %v1567
        %v1569 = vsel %vm1556, %v1566, 0.0
        %1570 = vadd.xlane.f32.xlu0 %v1569
        %v1571 = vpop.xlane.xlu0 %1570
        %v1572 = vsel %vm1556, %v1568, 0.0
        %1573 = vadd.xlane.f32.xlu0 %v1572
        %v1574 = vpop.xlane.xlu0 %1573
        %v1575 = vrcp.pop %v1571
        %v1576 = vrcp.pop %v1574
        %v1577 = vmul.f32 %v1566, %v1575
        %v1578 = vmul.f32 %v1568, %v1576
        %v1579 = vpack.c.bf16 %v1578, %v1577
        %v1580 = vpack.c.bf16 %v1469, %v1465
        %v1582 = vsel %vm1556, %v1579, 0
        %1584 = vmatprep.subr.bf16.mxu0 0
        %1585 = vmatpush1.bf16.msra.mxu0 0
        %1586 = vmatprep.subr.bf16.mxu0 0
        %1587 = vmatpush1.bf16.msra.mxu0 0
        %1588 = vmatprep.subr.bf16.mxu0 0
        %1589 = vmatpush1.bf16.msra.mxu0 0
        %1590 = vmatprep.subr.bf16.mxu0 0
        %1591 = vmatpush1.bf16.msra.mxu0 0
        %1592 = vmatprep.subr.bf16.mxu0 0
        %1593 = vmatpush1.bf16.msra.mxu0 0
        %1594 = vmatprep.subr.bf16.mxu0 0
        %1595 = vmatpush1.bf16.msra.mxu0 0
        %1596 = vmatprep.subr.bf16.mxu0 0
        %1597 = vmatpush1.bf16.msra.mxu0 0
        %1598 = vmatprep.subr.bf16.mxu0 0
        %1599 = vmatpush1.bf16.msra.mxu0 %v1580
        %1600 = vmatprep.subr.bf16.mxu0 0
        %1601 = vmatpush2.bf16.msra.mxu0 0
        %1602 = vmatprep.subr.bf16.mxu0 0
        %1603 = vmatpush2.bf16.msra.mxu0 0
        %1604 = vmatprep.subr.bf16.mxu0 0
        %1605 = vmatpush2.bf16.msra.mxu0 0
        %1606 = vmatprep.subr.bf16.mxu0 0
        %1607 = vmatpush2.bf16.msra.mxu0 0
        %1608 = vmatprep.subr.bf16.mxu0 0
        %1609 = vmatpush2.bf16.msra.mxu0 0
        %1610 = vmatprep.subr.bf16.mxu0 0
        %1611 = vmatpush2.bf16.msra.mxu0 0
        %1612 = vmatprep.subr.bf16.mxu0 0
        %1613 = vmatpush2.bf16.msra.mxu0 0
        %1614 = vmatprep.subr.bf16.mxu0 0
        %1615 = vmatpush2.bf16.msra.mxu0 0
        %1616 = vmatprep.mubr.bf16.mxu0 0
        %1617 = vmatmul.mubr.bf16.gmra.mxu0 %v1582
        %v1618 = vpop.f32.mrf.mxu0
        %v1619 = vadd.f32 0.0, %v1618
        %v1620 = vpop.f32.mrf.mxu0
        %v1621 = vpop.f32.mrf.mxu0
        %v1622 = vadd.f32 0.0, %v1621
        %v1623 = vpop.f32.mrf.mxu0
        %1624 = vdwg.mxu0
        %v1625 = vmul.f32 %v1381, %v1473
        %v1626 = vmul.f32 %v1385, %v1474
        %1627 = vrot.lane.b32.xlu0 %v1381, 64
        %v1628 = vpop.permute.xlu0 %1627
        %1629 = vrot.lane.b32.xlu0 %v1385, 64
        %v1630 = vpop.permute.xlu0 %1629
        %v1631 = vmul.f32 %v1628, %v1482
        %v1632 = vmul.f32 %v1630, %v1483
        %v1633 = vadd.f32 %v1625, %v1631
        %v1634 = vadd.f32 %v1626, %v1632
        %v1635 = vmul.f32 %v1424, %v1473
        %v1636 = vmul.f32 %v1428, %v1474
        %1637 = vrot.lane.b32.xlu0 %v1424, 64
        %v1638 = vpop.permute.xlu0 %1637
        %1639 = vrot.lane.b32.xlu0 %v1428, 64
        %v1640 = vpop.permute.xlu0 %1639
        %v1641 = vmul.f32 %v1638, %v1482
        %v1642 = vmul.f32 %v1640, %v1483
        %v1643 = vadd.f32 %v1635, %v1641
        %v1644 = vadd.f32 %v1636, %v1642
        %v1645 = vpack.c.bf16 %v1634, %v1633
        %v1646 = vpack.c.bf16 %v1644, %v1643
        %1647 = vmatprep.subr.bf16.mxu0 0
        %1648 = vmatpush1.bf16.xpose.msra.mxu0 0
        %1649 = vmatprep.subr.bf16.mxu0 0
        %1650 = vmatpush1.bf16.xpose.msra.mxu0 0
        %1651 = vmatprep.subr.bf16.mxu0 0
        %1652 = vmatpush1.bf16.xpose.msra.mxu0 0
        %1653 = vmatprep.subr.bf16.mxu0 0
        %1654 = vmatpush1.bf16.xpose.msra.mxu0 0
        %1655 = vmatprep.subr.bf16.mxu0 0
        %1656 = vmatpush1.bf16.xpose.msra.mxu0 0
        %1657 = vmatprep.subr.bf16.mxu0 0
        %1658 = vmatpush1.bf16.xpose.msra.mxu0 0
        %1659 = vmatprep.subr.bf16.mxu0 0
        %1660 = vmatpush1.bf16.xpose.msra.mxu0 0
        %1661 = vmatprep.subr.bf16.mxu0 0
        %1662 = vmatpush1.bf16.xpose.msra.mxu0 %v1646
        %1663 = vmatprep.subr.bf16.mxu0 0
        %1664 = vmatpush2.bf16.xpose.msra.mxu0 0
        %1665 = vmatprep.subr.bf16.mxu0 0
        %1666 = vmatpush2.bf16.xpose.msra.mxu0 0
        %1667 = vmatprep.subr.bf16.mxu0 0
        %1668 = vmatpush2.bf16.xpose.msra.mxu0 0
        %1669 = vmatprep.subr.bf16.mxu0 0
        %1670 = vmatpush2.bf16.xpose.msra.mxu0 0
        %1671 = vmatprep.subr.bf16.mxu0 0
        %1672 = vmatpush2.bf16.xpose.msra.mxu0 0
        %1673 = vmatprep.subr.bf16.mxu0 0
        %1674 = vmatpush2.bf16.xpose.msra.mxu0 0
        %1675 = vmatprep.subr.bf16.mxu0 0
        %1676 = vmatpush2.bf16.xpose.msra.mxu0 0
        %1677 = vmatprep.subr.bf16.mxu0 0
        %1678 = vmatpush2.bf16.xpose.msra.mxu0 0
        %1679 = vmatprep.mubr.bf16.mxu0 0
        %1680 = vmatmul.mubr.bf16.gmra.mxu0 %v1645
        %v1681 = vpop.f32.mrf.mxu0
        %v1682 = vadd.f32 0.0, %v1681
        %v1683 = vpop.f32.mrf.mxu0
        %v1684 = vpop.f32.mrf.mxu0
        %v1685 = vadd.f32 0.0, %v1684
        %v1686 = vpop.f32.mrf.mxu0
        %1687 = vdwg.mxu0
        %v1688 = vmul.f32 %v1682, 0.088388346
        %v1689 = vmul.f32 %v1685, 0.088388346
        %v1690 = vsel %vm1487, %v1688, -1e+30
        %v1691 = vsel %vm1488, %v1689, -1e+30
        %v1692 = vsel %vm1556, %v1690, -inf
        %1693 = vmax.xlane.f32.xlu0 %v1692
        %v1694 = vpop.xlane.xlu0 %1693
        %v1695 = vsel %vm1556, %v1691, -inf
        %1696 = vmax.xlane.f32.xlu0 %v1695
        %v1697 = vpop.xlane.xlu0 %1696
        %v1698 = vsub.f32 %v1690, %v1694
        %v1699 = vsub.f32 %v1691, %v1697
        %v1700 = vmul.f32 %v1698, 1.442695
        %v1701 = vpow.pop %v1700
        %v1702 = vmul.f32 %v1699, 1.442695
        %v1703 = vpow.pop %v1702
        %v1704 = vsel %vm1556, %v1701, 0.0
        %1705 = vadd.xlane.f32.xlu0 %v1704
        %v1706 = vpop.xlane.xlu0 %1705
        %v1707 = vsel %vm1556, %v1703, 0.0
        %1708 = vadd.xlane.f32.xlu0 %v1707
        %v1709 = vpop.xlane.xlu0 %1708
        %v1710 = vrcp.pop %v1706
        %v1711 = vrcp.pop %v1709
        %v1712 = vmul.f32 %v1701, %v1710
        %v1713 = vmul.f32 %v1703, %v1711
        %v1714 = vpack.c.bf16 %v1713, %v1712
        %v1715 = vpack.c.bf16 %v1471, %v1467
        %v1717 = vsel %vm1556, %v1714, 0
        %1719 = vmatprep.subr.bf16.mxu0 0
        %1720 = vmatpush1.bf16.msra.mxu0 0
        %1721 = vmatprep.subr.bf16.mxu0 0
        %1722 = vmatpush1.bf16.msra.mxu0 0
        %1723 = vmatprep.subr.bf16.mxu0 0
        %1724 = vmatpush1.bf16.msra.mxu0 0
        %1725 = vmatprep.subr.bf16.mxu0 0
        %1726 = vmatpush1.bf16.msra.mxu0 0
        %1727 = vmatprep.subr.bf16.mxu0 0
        %1728 = vmatpush1.bf16.msra.mxu0 0
        %1729 = vmatprep.subr.bf16.mxu0 0
        %1730 = vmatpush1.bf16.msra.mxu0 0
        %1731 = vmatprep.subr.bf16.mxu0 0
        %1732 = vmatpush1.bf16.msra.mxu0 0
        %1733 = vmatprep.subr.bf16.mxu0 0
        %1734 = vmatpush1.bf16.msra.mxu0 %v1715
        %1735 = vmatprep.subr.bf16.mxu0 0
        %1736 = vmatpush2.bf16.msra.mxu0 0
        %1737 = vmatprep.subr.bf16.mxu0 0
        %1738 = vmatpush2.bf16.msra.mxu0 0
        %1739 = vmatprep.subr.bf16.mxu0 0
        %1740 = vmatpush2.bf16.msra.mxu0 0
        %1741 = vmatprep.subr.bf16.mxu0 0
        %1742 = vmatpush2.bf16.msra.mxu0 0
        %1743 = vmatprep.subr.bf16.mxu0 0
        %1744 = vmatpush2.bf16.msra.mxu0 0
        %1745 = vmatprep.subr.bf16.mxu0 0
        %1746 = vmatpush2.bf16.msra.mxu0 0
        %1747 = vmatprep.subr.bf16.mxu0 0
        %1748 = vmatpush2.bf16.msra.mxu0 0
        %1749 = vmatprep.subr.bf16.mxu0 0
        %1750 = vmatpush2.bf16.msra.mxu0 0
        %1751 = vmatprep.mubr.bf16.mxu0 0
        %1752 = vmatmul.mubr.bf16.gmra.mxu0 %v1717
        %v1753 = vpop.f32.mrf.mxu0
        %v1754 = vadd.f32 0.0, %v1753
        %v1755 = vpop.f32.mrf.mxu0
        %v1756 = vpop.f32.mrf.mxu0
        %v1757 = vadd.f32 0.0, %v1756
        %v1758 = vpop.f32.mrf.mxu0
        %1759 = vdwg.mxu0
        %v1762 = vunpack.c.l.b16 %v1510
        %v1763 = vunpack.c.h.b16 %v1510
        %v1764 = vunpack.c.l.b16 %v1646
        %v1765 = vunpack.c.h.b16 %v1646
        %v1766 = vpack.c.b16 %v1762, %v1762
        %v1767 = vpack.c.b16 %v1763, %v1763
        %v1768 = vpack.c.b16 %v1764, %v1764
        %v1769 = vpack.c.b16 %v1765, %v1765
        %1774 = vst [vmem:[%s691] sm:$0xf] %v1766
        %1775 = vst [vmem:[%s691 + $0x4] sm:$0xf] %v1767
        %1776 = vst [vmem:[%s691 + $0x8] sm:$0xf] %v1768
        %1777 = vst [vmem:[%s691 + $0xc] sm:$0xf] %v1769
        %v1780 = vunpack.c.l.b16 %v1580
        %v1781 = vunpack.c.h.b16 %v1580
        %v1782 = vunpack.c.l.b16 %v1715
        %v1783 = vunpack.c.h.b16 %v1715
        %v1784 = vpack.c.b16 %v1780, %v1780
        %v1785 = vpack.c.b16 %v1781, %v1781
        %v1786 = vpack.c.b16 %v1782, %v1782
        %v1787 = vpack.c.b16 %v1783, %v1783
        %1792 = vst [vmem:[%s700] sm:$0xf] %v1784
        %1793 = vst [vmem:[%s700 + $0x4] sm:$0xf] %v1785
        %1794 = vst [vmem:[%s700 + $0x8] sm:$0xf] %v1786
        %1795 = vst [vmem:[%s700 + $0xc] sm:$0xf] %v1787
        %v1796 = vpack.c.bf16 %v1622, %v1619
        %v1797 = vpack.c.bf16 %v1757, %v1754
        %v1798 = vld [vmem:[%s559] sm:$0xff]
        %v1799 = vld [vmem:[%s559 + $0x8] sm:$0xff]
        %v1800 = vld [vmem:[%s559 + $0x10] sm:$0xff]
        %v1801 = vld [vmem:[%s559 + $0x18] sm:$0xff]
        %v1802 = vld [vmem:[%s559 + $0x20] sm:$0xff]
        %v1803 = vld [vmem:[%s559 + $0x28] sm:$0xff]
        %v1804 = vld [vmem:[%s559 + $0x30] sm:$0xff]
        %v1805 = vld [vmem:[%s559 + $0x38] sm:$0xff]
        %v1806 = vld [vmem:[%s559 + $0x40] sm:$0xff]
        %v1807 = vld [vmem:[%s559 + $0x48] sm:$0xff]
        %v1808 = vld [vmem:[%s559 + $0x50] sm:$0xff]
        %v1809 = vld [vmem:[%s559 + $0x58] sm:$0xff]
        %v1810 = vld [vmem:[%s559 + $0x60] sm:$0xff]
        %v1811 = vld [vmem:[%s559 + $0x68] sm:$0xff]
        %v1812 = vld [vmem:[%s559 + $0x70] sm:$0xff]
        %v1813 = vld [vmem:[%s559 + $0x78] sm:$0xff]
        %v1814 = vld [vmem:[%s559 + $0x80] sm:$0xff]
        %v1815 = vld [vmem:[%s559 + $0x88] sm:$0xff]
        %v1816 = vld [vmem:[%s559 + $0x90] sm:$0xff]
        %v1817 = vld [vmem:[%s559 + $0x98] sm:$0xff]
        %v1818 = vld [vmem:[%s559 + $0xa0] sm:$0xff]
        %v1819 = vld [vmem:[%s559 + $0xa8] sm:$0xff]
        %v1820 = vld [vmem:[%s559 + $0xb0] sm:$0xff]
        %v1821 = vld [vmem:[%s559 + $0xb8] sm:$0xff]
        %v1822 = vld [vmem:[%s559 + $0xc0] sm:$0xff]
        %v1823 = vld [vmem:[%s559 + $0xc8] sm:$0xff]
        %v1824 = vld [vmem:[%s559 + $0xd0] sm:$0xff]
        %v1825 = vld [vmem:[%s559 + $0xd8] sm:$0xff]
        %v1826 = vld [vmem:[%s559 + $0xe0] sm:$0xff]
        %v1827 = vld [vmem:[%s559 + $0xe8] sm:$0xff]
        %v1828 = vld [vmem:[%s559 + $0xf0] sm:$0xff]
        %v1829 = vld [vmem:[%s559 + $0xf8] sm:$0xff]
        %v1862 = vunpack.c.l.b16 %v1798
        %v1863 = vunpack.c.h.b16 %v1798
        %v1864 = vunpack.c.l.b16 %v1799
        %v1865 = vunpack.c.h.b16 %v1799
        %v1866 = vunpack.c.l.b16 %v1800
        %v1867 = vunpack.c.h.b16 %v1800
        %v1868 = vunpack.c.l.b16 %v1801
        %v1869 = vunpack.c.h.b16 %v1801
        %v1870 = vunpack.c.l.b16 %v1802
        %v1871 = vunpack.c.h.b16 %v1802
        %v1872 = vunpack.c.l.b16 %v1803
        %v1873 = vunpack.c.h.b16 %v1803
        %v1874 = vunpack.c.l.b16 %v1804
        %v1875 = vunpack.c.h.b16 %v1804
        %v1876 = vunpack.c.l.b16 %v1805
        %v1877 = vunpack.c.h.b16 %v1805
        %v1878 = vunpack.c.l.b16 %v1806
        %v1879 = vunpack.c.h.b16 %v1806
        %v1880 = vunpack.c.l.b16 %v1807
        %v1881 = vunpack.c.h.b16 %v1807
        %v1882 = vunpack.c.l.b16 %v1808
        %v1883 = vunpack.c.h.b16 %v1808
        %v1884 = vunpack.c.l.b16 %v1809
        %v1885 = vunpack.c.h.b16 %v1809
        %v1886 = vunpack.c.l.b16 %v1810
        %v1887 = vunpack.c.h.b16 %v1810
        %v1888 = vunpack.c.l.b16 %v1811
        %v1889 = vunpack.c.h.b16 %v1811
        %v1890 = vunpack.c.l.b16 %v1812
        %v1891 = vunpack.c.h.b16 %v1812
        %v1892 = vunpack.c.l.b16 %v1813
        %v1893 = vunpack.c.h.b16 %v1813
        %v1894 = vunpack.c.l.b16 %v1814
        %v1895 = vunpack.c.h.b16 %v1814
        %v1896 = vunpack.c.l.b16 %v1815
        %v1897 = vunpack.c.h.b16 %v1815
        %v1898 = vunpack.c.l.b16 %v1816
        %v1899 = vunpack.c.h.b16 %v1816
        %v1900 = vunpack.c.l.b16 %v1817
        %v1901 = vunpack.c.h.b16 %v1817
        %v1902 = vunpack.c.l.b16 %v1818
        %v1903 = vunpack.c.h.b16 %v1818
        %v1904 = vunpack.c.l.b16 %v1819
        %v1905 = vunpack.c.h.b16 %v1819
        %v1906 = vunpack.c.l.b16 %v1820
        %v1907 = vunpack.c.h.b16 %v1820
        %v1908 = vunpack.c.l.b16 %v1821
        %v1909 = vunpack.c.h.b16 %v1821
        %v1910 = vunpack.c.l.b16 %v1822
        %v1911 = vunpack.c.h.b16 %v1822
        %v1912 = vunpack.c.l.b16 %v1823
        %v1913 = vunpack.c.h.b16 %v1823
        %v1914 = vunpack.c.l.b16 %v1824
        %v1915 = vunpack.c.h.b16 %v1824
        %v1916 = vunpack.c.l.b16 %v1825
        %v1917 = vunpack.c.h.b16 %v1825
        %v1918 = vunpack.c.l.b16 %v1826
        %v1919 = vunpack.c.h.b16 %v1826
        %v1920 = vunpack.c.l.b16 %v1827
        %v1921 = vunpack.c.h.b16 %v1827
        %v1922 = vunpack.c.l.b16 %v1828
        %v1923 = vunpack.c.h.b16 %v1828
        %v1924 = vunpack.c.l.b16 %v1829
        %v1925 = vunpack.c.h.b16 %v1829
        %v1926 = vpack.c.b16 %v1864, %v1862
        %v1927 = vpack.c.b16 %v1865, %v1863
        %v1928 = vpack.c.b16 %v1868, %v1866
        %v1929 = vpack.c.b16 %v1869, %v1867
        %v1930 = vpack.c.b16 %v1872, %v1870
        %v1931 = vpack.c.b16 %v1873, %v1871
        %v1932 = vpack.c.b16 %v1876, %v1874
        %v1933 = vpack.c.b16 %v1877, %v1875
        %v1934 = vpack.c.b16 %v1880, %v1878
        %v1935 = vpack.c.b16 %v1881, %v1879
        %v1936 = vpack.c.b16 %v1884, %v1882
        %v1937 = vpack.c.b16 %v1885, %v1883
        %v1938 = vpack.c.b16 %v1888, %v1886
        %v1939 = vpack.c.b16 %v1889, %v1887
        %v1940 = vpack.c.b16 %v1892, %v1890
        %v1941 = vpack.c.b16 %v1893, %v1891
        %v1942 = vpack.c.b16 %v1896, %v1894
        %v1943 = vpack.c.b16 %v1897, %v1895
        %v1944 = vpack.c.b16 %v1900, %v1898
        %v1945 = vpack.c.b16 %v1901, %v1899
        %v1946 = vpack.c.b16 %v1904, %v1902
        %v1947 = vpack.c.b16 %v1905, %v1903
        %v1948 = vpack.c.b16 %v1908, %v1906
        %v1949 = vpack.c.b16 %v1909, %v1907
        %v1950 = vpack.c.b16 %v1912, %v1910
        %v1951 = vpack.c.b16 %v1913, %v1911
        %v1952 = vpack.c.b16 %v1916, %v1914
        %v1953 = vpack.c.b16 %v1917, %v1915
        %v1954 = vpack.c.b16 %v1920, %v1918
        %v1955 = vpack.c.b16 %v1921, %v1919
        %v1956 = vpack.c.b16 %v1924, %v1922
        %v1957 = vpack.c.b16 %v1925, %v1923
        %1990 = vmatprep.subr.bf16.mxu0 %v1941
        %1991 = vmatpush1.bf16.msra.mxu0 %v1940
        %1992 = vmatprep.subr.bf16.mxu0 %v1939
        %1993 = vmatpush1.bf16.msra.mxu0 %v1938
        %1994 = vmatprep.subr.bf16.mxu0 %v1937
        %1995 = vmatpush1.bf16.msra.mxu0 %v1936
        %1996 = vmatprep.subr.bf16.mxu0 %v1935
        %1997 = vmatpush1.bf16.msra.mxu0 %v1934
        %1998 = vmatprep.subr.bf16.mxu0 %v1933
        %1999 = vmatpush1.bf16.msra.mxu0 %v1932
        %2000 = vmatprep.subr.bf16.mxu0 %v1931
        %2001 = vmatpush1.bf16.msra.mxu0 %v1930
        %2002 = vmatprep.subr.bf16.mxu0 %v1929
        %2003 = vmatpush1.bf16.msra.mxu0 %v1928
        %2004 = vmatprep.subr.bf16.mxu0 %v1927
        %2005 = vmatpush1.bf16.msra.mxu0 %v1926
        %2006 = vmatprep.subr.bf16.mxu0 %v1957
        %2007 = vmatpush2.bf16.msra.mxu0 %v1956
        %2008 = vmatprep.subr.bf16.mxu0 %v1955
        %2009 = vmatpush2.bf16.msra.mxu0 %v1954
        %2010 = vmatprep.subr.bf16.mxu0 %v1953
        %2011 = vmatpush2.bf16.msra.mxu0 %v1952
        %2012 = vmatprep.subr.bf16.mxu0 %v1951
        %2013 = vmatpush2.bf16.msra.mxu0 %v1950
        %2014 = vmatprep.subr.bf16.mxu0 %v1949
        %2015 = vmatpush2.bf16.msra.mxu0 %v1948
        %2016 = vmatprep.subr.bf16.mxu0 %v1947
        %2017 = vmatpush2.bf16.msra.mxu0 %v1946
        %2018 = vmatprep.subr.bf16.mxu0 %v1945
        %2019 = vmatpush2.bf16.msra.mxu0 %v1944
        %2020 = vmatprep.subr.bf16.mxu0 %v1943
        %2021 = vmatpush2.bf16.msra.mxu0 %v1942
        %2022 = vmatprep.mubr.bf16.mxu0 %v1797
        %2023 = vmatmul.mubr.bf16.gmra.mxu0 %v1796
        %v2024 = vpop.f32.mrf.mxu0
        %v2025 = vadd.f32 0.0, %v2024
        %v2026 = vpop.f32.mrf.mxu0
        %v2027 = vadd.f32 0.0, %v2026
        %v2028 = vpop.f32.mrf.mxu0
        %v2029 = vadd.f32 0.0, %v2028
        %v2030 = vpop.f32.mrf.mxu0
        %v2031 = vadd.f32 0.0, %v2030
        %2032 = vdwg.mxu0
        %v2033 = vadd.f32 %v716, %v2025
        %v2034 = vadd.f32 %v717, %v2027
        %v2035 = vadd.f32 %v718, %v2029
        %v2036 = vadd.f32 %v719, %v2031
        %v2037 = vld [vmem:[%s682] sm:$0x3]
        %v2038 = vunpack.c.l.bf16 %v2037
        %v2039 = vmul.f32 %v2033, %v2033
        %v2040 = vmul.f32 %v2034, %v2034
        %v2041 = vmul.f32 %v2035, %v2035
        %v2042 = vmul.f32 %v2036, %v2036
        %v2043 = vadd.f32 %v2039, %v2040
        %2044 = vadd.xlane.f32.xlu0 %v2043
        %v2045 = vpop.xlane.xlu0 %2044
        %v2046 = vadd.f32 %v2041, %v2042
        %2047 = vadd.xlane.f32.xlu0 %v2046
        %v2048 = vpop.xlane.xlu0 %2047
        %v2049 = vmul.f32 %v2045, %v732
        %v2050 = vmul.f32 %v2048, %v732
        %v2051 = vadd.f32 %v2049, 1e-06
        %v2052 = vadd.f32 %v2050, 1e-06
        %v2053 = vrsqrt.pop %v2051
        %v2054 = vrsqrt.pop %v2052
        %v2055 = vmul.f32 %v2033, %v2053
        %v2056 = vmul.f32 %v2034, %v2053
        %v2057 = vmul.f32 %v2035, %v2054
        %v2058 = vmul.f32 %v2036, %v2054
        %v2060 = vlaneseq
        %v2061 = vshrl.u32 %v2060, 7
        %v2062 = vsub.s32 0, %v2061
        %v2063 = vrot.slane %v2038, %v2062
        %v2064 = vlaneseq
        %v2065 = vshrl.u32 %v2064, 7
        %v2066 = vsub.s32 2, %v2065
        %v2067 = vrot.slane %v2038, %v2066
        %v2070 = vlaneseq
        %v2071 = vshrl.u32 %v2070, 7
        %v2072 = vsub.s32 0, %v2071
        %v2073 = vrot.slane %v2063, %v2072
        %v2074 = vlaneseq
        %v2075 = vshrl.u32 %v2074, 7
        %v2076 = vsub.s32 0, %v2075
        %v2077 = vrot.slane %v2067, %v2076
        %v2078 = vmul.f32 %v2055, %v2073
        %v2079 = vmul.f32 %v2056, %v2077
        %v2080 = vmul.f32 %v2057, %v2073
        %v2081 = vmul.f32 %v2058, %v2077
        %v2082 = vpack.c.bf16 %v2080, %v2078
        %v2083 = vpack.c.bf16 %v2081, %v2079
        %v2084 = vld [vmem:[%s568] sm:$0xff]
        %v2085 = vld [vmem:[%s568 + $0x8] sm:$0xff]
        %v2086 = vld [vmem:[%s568 + $0x10] sm:$0xff]
        %v2087 = vld [vmem:[%s568 + $0x18] sm:$0xff]
        %v2088 = vld [vmem:[%s568 + $0x20] sm:$0xff]
        %v2089 = vld [vmem:[%s568 + $0x28] sm:$0xff]
        %v2090 = vld [vmem:[%s568 + $0x30] sm:$0xff]
        %v2091 = vld [vmem:[%s568 + $0x38] sm:$0xff]
        %v2092 = vld [vmem:[%s568 + $0x40] sm:$0xff]
        %v2093 = vld [vmem:[%s568 + $0x48] sm:$0xff]
        %v2094 = vld [vmem:[%s568 + $0x50] sm:$0xff]
        %v2095 = vld [vmem:[%s568 + $0x58] sm:$0xff]
        %v2096 = vld [vmem:[%s568 + $0x60] sm:$0xff]
        %v2097 = vld [vmem:[%s568 + $0x68] sm:$0xff]
        %v2098 = vld [vmem:[%s568 + $0x70] sm:$0xff]
        %v2099 = vld [vmem:[%s568 + $0x78] sm:$0xff]
        %v2100 = vld [vmem:[%s568 + $0x80] sm:$0xff]
        %v2101 = vld [vmem:[%s568 + $0x88] sm:$0xff]
        %v2102 = vld [vmem:[%s568 + $0x90] sm:$0xff]
        %v2103 = vld [vmem:[%s568 + $0x98] sm:$0xff]
        %v2104 = vld [vmem:[%s568 + $0xa0] sm:$0xff]
        %v2105 = vld [vmem:[%s568 + $0xa8] sm:$0xff]
        %v2106 = vld [vmem:[%s568 + $0xb0] sm:$0xff]
        %v2107 = vld [vmem:[%s568 + $0xb8] sm:$0xff]
        %v2108 = vld [vmem:[%s568 + $0xc0] sm:$0xff]
        %v2109 = vld [vmem:[%s568 + $0xc8] sm:$0xff]
        %v2110 = vld [vmem:[%s568 + $0xd0] sm:$0xff]
        %v2111 = vld [vmem:[%s568 + $0xd8] sm:$0xff]
        %v2112 = vld [vmem:[%s568 + $0xe0] sm:$0xff]
        %v2113 = vld [vmem:[%s568 + $0xe8] sm:$0xff]
        %v2114 = vld [vmem:[%s568 + $0xf0] sm:$0xff]
        %v2115 = vld [vmem:[%s568 + $0xf8] sm:$0xff]
        %v2116 = vld [vmem:[%s568 + $0x100] sm:$0xff]
        %v2117 = vld [vmem:[%s568 + $0x108] sm:$0xff]
        %v2118 = vld [vmem:[%s568 + $0x110] sm:$0xff]
        %v2119 = vld [vmem:[%s568 + $0x118] sm:$0xff]
        %v2120 = vld [vmem:[%s568 + $0x120] sm:$0xff]
        %v2121 = vld [vmem:[%s568 + $0x128] sm:$0xff]
        %v2122 = vld [vmem:[%s568 + $0x130] sm:$0xff]
        %v2123 = vld [vmem:[%s568 + $0x138] sm:$0xff]
        %v2124 = vld [vmem:[%s568 + $0x140] sm:$0xff]
        %v2125 = vld [vmem:[%s568 + $0x148] sm:$0xff]
        %v2126 = vld [vmem:[%s568 + $0x150] sm:$0xff]
        %v2127 = vld [vmem:[%s568 + $0x158] sm:$0xff]
        %v2128 = vld [vmem:[%s568 + $0x160] sm:$0xff]
        %v2129 = vld [vmem:[%s568 + $0x168] sm:$0xff]
        %v2130 = vld [vmem:[%s568 + $0x170] sm:$0xff]
        %v2131 = vld [vmem:[%s568 + $0x178] sm:$0xff]
        %v2132 = vld [vmem:[%s568 + $0x180] sm:$0xff]
        %v2133 = vld [vmem:[%s568 + $0x188] sm:$0xff]
        %v2134 = vld [vmem:[%s568 + $0x190] sm:$0xff]
        %v2135 = vld [vmem:[%s568 + $0x198] sm:$0xff]
        %v2136 = vld [vmem:[%s568 + $0x1a0] sm:$0xff]
        %v2137 = vld [vmem:[%s568 + $0x1a8] sm:$0xff]
        %v2138 = vld [vmem:[%s568 + $0x1b0] sm:$0xff]
        %v2139 = vld [vmem:[%s568 + $0x1b8] sm:$0xff]
        %v2140 = vld [vmem:[%s568 + $0x1c0] sm:$0xff]
        %v2141 = vld [vmem:[%s568 + $0x1c8] sm:$0xff]
        %v2142 = vld [vmem:[%s568 + $0x1d0] sm:$0xff]
        %v2143 = vld [vmem:[%s568 + $0x1d8] sm:$0xff]
        %v2144 = vld [vmem:[%s568 + $0x1e0] sm:$0xff]
        %v2145 = vld [vmem:[%s568 + $0x1e8] sm:$0xff]
        %v2146 = vld [vmem:[%s568 + $0x1f0] sm:$0xff]
        %v2147 = vld [vmem:[%s568 + $0x1f8] sm:$0xff]
        %v2148 = vld [vmem:[%s568 + $0x200] sm:$0xff]
        %v2149 = vld [vmem:[%s568 + $0x208] sm:$0xff]
        %v2150 = vld [vmem:[%s568 + $0x210] sm:$0xff]
        %v2151 = vld [vmem:[%s568 + $0x218] sm:$0xff]
        %v2152 = vld [vmem:[%s568 + $0x220] sm:$0xff]
        %v2153 = vld [vmem:[%s568 + $0x228] sm:$0xff]
        %v2154 = vld [vmem:[%s568 + $0x230] sm:$0xff]
        %v2155 = vld [vmem:[%s568 + $0x238] sm:$0xff]
        %v2156 = vld [vmem:[%s568 + $0x240] sm:$0xff]
        %v2157 = vld [vmem:[%s568 + $0x248] sm:$0xff]
        %v2158 = vld [vmem:[%s568 + $0x250] sm:$0xff]
        %v2159 = vld [vmem:[%s568 + $0x258] sm:$0xff]
        %v2160 = vld [vmem:[%s568 + $0x260] sm:$0xff]
        %v2161 = vld [vmem:[%s568 + $0x268] sm:$0xff]
        %v2162 = vld [vmem:[%s568 + $0x270] sm:$0xff]
        %v2163 = vld [vmem:[%s568 + $0x278] sm:$0xff]
        %v2164 = vld [vmem:[%s568 + $0x280] sm:$0xff]
        %v2165 = vld [vmem:[%s568 + $0x288] sm:$0xff]
        %v2166 = vld [vmem:[%s568 + $0x290] sm:$0xff]
        %v2167 = vld [vmem:[%s568 + $0x298] sm:$0xff]
        %v2168 = vld [vmem:[%s568 + $0x2a0] sm:$0xff]
        %v2169 = vld [vmem:[%s568 + $0x2a8] sm:$0xff]
        %v2170 = vld [vmem:[%s568 + $0x2b0] sm:$0xff]
        %v2171 = vld [vmem:[%s568 + $0x2b8] sm:$0xff]
        %v2172 = vld [vmem:[%s568 + $0x2c0] sm:$0xff]
        %v2173 = vld [vmem:[%s568 + $0x2c8] sm:$0xff]
        %v2174 = vld [vmem:[%s568 + $0x2d0] sm:$0xff]
        %v2175 = vld [vmem:[%s568 + $0x2d8] sm:$0xff]
        %v2176 = vld [vmem:[%s568 + $0x2e0] sm:$0xff]
        %v2177 = vld [vmem:[%s568 + $0x2e8] sm:$0xff]
        %v2178 = vld [vmem:[%s568 + $0x2f0] sm:$0xff]
        %v2179 = vld [vmem:[%s568 + $0x2f8] sm:$0xff]
        %v2180 = vld [vmem:[%s568 + $0x300] sm:$0xff]
        %v2181 = vld [vmem:[%s568 + $0x308] sm:$0xff]
        %v2182 = vld [vmem:[%s568 + $0x310] sm:$0xff]
        %v2183 = vld [vmem:[%s568 + $0x318] sm:$0xff]
        %v2184 = vld [vmem:[%s568 + $0x320] sm:$0xff]
        %v2185 = vld [vmem:[%s568 + $0x328] sm:$0xff]
        %v2186 = vld [vmem:[%s568 + $0x330] sm:$0xff]
        %v2187 = vld [vmem:[%s568 + $0x338] sm:$0xff]
        %v2188 = vld [vmem:[%s568 + $0x340] sm:$0xff]
        %v2189 = vld [vmem:[%s568 + $0x348] sm:$0xff]
        %v2190 = vld [vmem:[%s568 + $0x350] sm:$0xff]
        %v2191 = vld [vmem:[%s568 + $0x358] sm:$0xff]
        %v2192 = vld [vmem:[%s568 + $0x360] sm:$0xff]
        %v2193 = vld [vmem:[%s568 + $0x368] sm:$0xff]
        %v2194 = vld [vmem:[%s568 + $0x370] sm:$0xff]
        %v2195 = vld [vmem:[%s568 + $0x378] sm:$0xff]
        %v2196 = vld [vmem:[%s568 + $0x380] sm:$0xff]
        %v2197 = vld [vmem:[%s568 + $0x388] sm:$0xff]
        %v2198 = vld [vmem:[%s568 + $0x390] sm:$0xff]
        %v2199 = vld [vmem:[%s568 + $0x398] sm:$0xff]
        %v2200 = vld [vmem:[%s568 + $0x3a0] sm:$0xff]
        %v2201 = vld [vmem:[%s568 + $0x3a8] sm:$0xff]
        %v2202 = vld [vmem:[%s568 + $0x3b0] sm:$0xff]
        %v2203 = vld [vmem:[%s568 + $0x3b8] sm:$0xff]
        %v2204 = vld [vmem:[%s568 + $0x3c0] sm:$0xff]
        %v2205 = vld [vmem:[%s568 + $0x3c8] sm:$0xff]
        %v2206 = vld [vmem:[%s568 + $0x3d0] sm:$0xff]
        %v2207 = vld [vmem:[%s568 + $0x3d8] sm:$0xff]
        %v2208 = vld [vmem:[%s568 + $0x3e0] sm:$0xff]
        %v2209 = vld [vmem:[%s568 + $0x3e8] sm:$0xff]
        %v2210 = vld [vmem:[%s568 + $0x3f0] sm:$0xff]
        %v2211 = vld [vmem:[%s568 + $0x3f8] sm:$0xff]
        %v2340 = vunpack.c.l.b16 %v2084
        %v2341 = vunpack.c.h.b16 %v2084
        %v2342 = vunpack.c.l.b16 %v2085
        %v2343 = vunpack.c.h.b16 %v2085
        %v2344 = vunpack.c.l.b16 %v2086
        %v2345 = vunpack.c.h.b16 %v2086
        %v2346 = vunpack.c.l.b16 %v2087
        %v2347 = vunpack.c.h.b16 %v2087
        %v2348 = vunpack.c.l.b16 %v2088
        %v2349 = vunpack.c.h.b16 %v2088
        %v2350 = vunpack.c.l.b16 %v2089
        %v2351 = vunpack.c.h.b16 %v2089
        %v2352 = vunpack.c.l.b16 %v2090
        %v2353 = vunpack.c.h.b16 %v2090
        %v2354 = vunpack.c.l.b16 %v2091
        %v2355 = vunpack.c.h.b16 %v2091
        %v2356 = vunpack.c.l.b16 %v2092
        %v2357 = vunpack.c.h.b16 %v2092
        %v2358 = vunpack.c.l.b16 %v2093
        %v2359 = vunpack.c.h.b16 %v2093
        %v2360 = vunpack.c.l.b16 %v2094
        %v2361 = vunpack.c.h.b16 %v2094
        %v2362 = vunpack.c.l.b16 %v2095
        %v2363 = vunpack.c.h.b16 %v2095
        %v2364 = vunpack.c.l.b16 %v2096
        %v2365 = vunpack.c.h.b16 %v2096
        %v2366 = vunpack.c.l.b16 %v2097
        %v2367 = vunpack.c.h.b16 %v2097
        %v2368 = vunpack.c.l.b16 %v2098
        %v2369 = vunpack.c.h.b16 %v2098
        %v2370 = vunpack.c.l.b16 %v2099
        %v2371 = vunpack.c.h.b16 %v2099
        %v2372 = vunpack.c.l.b16 %v2100
        %v2373 = vunpack.c.h.b16 %v2100
        %v2374 = vunpack.c.l.b16 %v2101
        %v2375 = vunpack.c.h.b16 %v2101
        %v2376 = vunpack.c.l.b16 %v2102
        %v2377 = vunpack.c.h.b16 %v2102
        %v2378 = vunpack.c.l.b16 %v2103
        %v2379 = vunpack.c.h.b16 %v2103
        %v2380 = vunpack.c.l.b16 %v2104
        %v2381 = vunpack.c.h.b16 %v2104
        %v2382 = vunpack.c.l.b16 %v2105
        %v2383 = vunpack.c.h.b16 %v2105
        %v2384 = vunpack.c.l.b16 %v2106
        %v2385 = vunpack.c.h.b16 %v2106
        %v2386 = vunpack.c.l.b16 %v2107
        %v2387 = vunpack.c.h.b16 %v2107
        %v2388 = vunpack.c.l.b16 %v2108
        %v2389 = vunpack.c.h.b16 %v2108
        %v2390 = vunpack.c.l.b16 %v2109
        %v2391 = vunpack.c.h.b16 %v2109
        %v2392 = vunpack.c.l.b16 %v2110
        %v2393 = vunpack.c.h.b16 %v2110
        %v2394 = vunpack.c.l.b16 %v2111
        %v2395 = vunpack.c.h.b16 %v2111
        %v2396 = vunpack.c.l.b16 %v2112
        %v2397 = vunpack.c.h.b16 %v2112
        %v2398 = vunpack.c.l.b16 %v2113
        %v2399 = vunpack.c.h.b16 %v2113
        %v2400 = vunpack.c.l.b16 %v2114
        %v2401 = vunpack.c.h.b16 %v2114
        %v2402 = vunpack.c.l.b16 %v2115
        %v2403 = vunpack.c.h.b16 %v2115
        %v2404 = vunpack.c.l.b16 %v2116
        %v2405 = vunpack.c.h.b16 %v2116
        %v2406 = vunpack.c.l.b16 %v2117
        %v2407 = vunpack.c.h.b16 %v2117
        %v2408 = vunpack.c.l.b16 %v2118
        %v2409 = vunpack.c.h.b16 %v2118
        %v2410 = vunpack.c.l.b16 %v2119
        %v2411 = vunpack.c.h.b16 %v2119
        %v2412 = vunpack.c.l.b16 %v2120
        %v2413 = vunpack.c.h.b16 %v2120
        %v2414 = vunpack.c.l.b16 %v2121
        %v2415 = vunpack.c.h.b16 %v2121
        %v2416 = vunpack.c.l.b16 %v2122
        %v2417 = vunpack.c.h.b16 %v2122
        %v2418 = vunpack.c.l.b16 %v2123
        %v2419 = vunpack.c.h.b16 %v2123
        %v2420 = vunpack.c.l.b16 %v2124
        %v2421 = vunpack.c.h.b16 %v2124
        %v2422 = vunpack.c.l.b16 %v2125
        %v2423 = vunpack.c.h.b16 %v2125
        %v2424 = vunpack.c.l.b16 %v2126
        %v2425 = vunpack.c.h.b16 %v2126
        %v2426 = vunpack.c.l.b16 %v2127
        %v2427 = vunpack.c.h.b16 %v2127
        %v2428 = vunpack.c.l.b16 %v2128
        %v2429 = vunpack.c.h.b16 %v2128
        %v2430 = vunpack.c.l.b16 %v2129
        %v2431 = vunpack.c.h.b16 %v2129
        %v2432 = vunpack.c.l.b16 %v2130
        %v2433 = vunpack.c.h.b16 %v2130
        %v2434 = vunpack.c.l.b16 %v2131
        %v2435 = vunpack.c.h.b16 %v2131
        %v2436 = vunpack.c.l.b16 %v2132
        %v2437 = vunpack.c.h.b16 %v2132
        %v2438 = vunpack.c.l.b16 %v2133
        %v2439 = vunpack.c.h.b16 %v2133
        %v2440 = vunpack.c.l.b16 %v2134
        %v2441 = vunpack.c.h.b16 %v2134
        %v2442 = vunpack.c.l.b16 %v2135
        %v2443 = vunpack.c.h.b16 %v2135
        %v2444 = vunpack.c.l.b16 %v2136
        %v2445 = vunpack.c.h.b16 %v2136
        %v2446 = vunpack.c.l.b16 %v2137
        %v2447 = vunpack.c.h.b16 %v2137
        %v2448 = vunpack.c.l.b16 %v2138
        %v2449 = vunpack.c.h.b16 %v2138
        %v2450 = vunpack.c.l.b16 %v2139
        %v2451 = vunpack.c.h.b16 %v2139
        %v2452 = vunpack.c.l.b16 %v2140
        %v2453 = vunpack.c.h.b16 %v2140
        %v2454 = vunpack.c.l.b16 %v2141
        %v2455 = vunpack.c.h.b16 %v2141
        %v2456 = vunpack.c.l.b16 %v2142
        %v2457 = vunpack.c.h.b16 %v2142
        %v2458 = vunpack.c.l.b16 %v2143
        %v2459 = vunpack.c.h.b16 %v2143
        %v2460 = vunpack.c.l.b16 %v2144
        %v2461 = vunpack.c.h.b16 %v2144
        %v2462 = vunpack.c.l.b16 %v2145
        %v2463 = vunpack.c.h.b16 %v2145
        %v2464 = vunpack.c.l.b16 %v2146
        %v2465 = vunpack.c.h.b16 %v2146
        %v2466 = vunpack.c.l.b16 %v2147
        %v2467 = vunpack.c.h.b16 %v2147
        %v2468 = vunpack.c.l.b16 %v2148
        %v2469 = vunpack.c.h.b16 %v2148
        %v2470 = vunpack.c.l.b16 %v2149
        %v2471 = vunpack.c.h.b16 %v2149
        %v2472 = vunpack.c.l.b16 %v2150
        %v2473 = vunpack.c.h.b16 %v2150
        %v2474 = vunpack.c.l.b16 %v2151
        %v2475 = vunpack.c.h.b16 %v2151
        %v2476 = vunpack.c.l.b16 %v2152
        %v2477 = vunpack.c.h.b16 %v2152
        %v2478 = vunpack.c.l.b16 %v2153
        %v2479 = vunpack.c.h.b16 %v2153
        %v2480 = vunpack.c.l.b16 %v2154
        %v2481 = vunpack.c.h.b16 %v2154
        %v2482 = vunpack.c.l.b16 %v2155
        %v2483 = vunpack.c.h.b16 %v2155
        %v2484 = vunpack.c.l.b16 %v2156
        %v2485 = vunpack.c.h.b16 %v2156
        %v2486 = vunpack.c.l.b16 %v2157
        %v2487 = vunpack.c.h.b16 %v2157
        %v2488 = vunpack.c.l.b16 %v2158
        %v2489 = vunpack.c.h.b16 %v2158
        %v2490 = vunpack.c.l.b16 %v2159
        %v2491 = vunpack.c.h.b16 %v2159
        %v2492 = vunpack.c.l.b16 %v2160
        %v2493 = vunpack.c.h.b16 %v2160
        %v2494 = vunpack.c.l.b16 %v2161
        %v2495 = vunpack.c.h.b16 %v2161
        %v2496 = vunpack.c.l.b16 %v2162
        %v2497 = vunpack.c.h.b16 %v2162
        %v2498 = vunpack.c.l.b16 %v2163
        %v2499 = vunpack.c.h.b16 %v2163
        %v2500 = vunpack.c.l.b16 %v2164
        %v2501 = vunpack.c.h.b16 %v2164
        %v2502 = vunpack.c.l.b16 %v2165
        %v2503 = vunpack.c.h.b16 %v2165
        %v2504 = vunpack.c.l.b16 %v2166
        %v2505 = vunpack.c.h.b16 %v2166
        %v2506 = vunpack.c.l.b16 %v2167
        %v2507 = vunpack.c.h.b16 %v2167
        %v2508 = vunpack.c.l.b16 %v2168
        %v2509 = vunpack.c.h.b16 %v2168
        %v2510 = vunpack.c.l.b16 %v2169
        %v2511 = vunpack.c.h.b16 %v2169
        %v2512 = vunpack.c.l.b16 %v2170
        %v2513 = vunpack.c.h.b16 %v2170
        %v2514 = vunpack.c.l.b16 %v2171
        %v2515 = vunpack.c.h.b16 %v2171
        %v2516 = vunpack.c.l.b16 %v2172
        %v2517 = vunpack.c.h.b16 %v2172
        %v2518 = vunpack.c.l.b16 %v2173
        %v2519 = vunpack.c.h.b16 %v2173
        %v2520 = vunpack.c.l.b16 %v2174
        %v2521 = vunpack.c.h.b16 %v2174
        %v2522 = vunpack.c.l.b16 %v2175
        %v2523 = vunpack.c.h.b16 %v2175
        %v2524 = vunpack.c.l.b16 %v2176
        %v2525 = vunpack.c.h.b16 %v2176
        %v2526 = vunpack.c.l.b16 %v2177
        %v2527 = vunpack.c.h.b16 %v2177
        %v2528 = vunpack.c.l.b16 %v2178
        %v2529 = vunpack.c.h.b16 %v2178
        %v2530 = vunpack.c.l.b16 %v2179
        %v2531 = vunpack.c.h.b16 %v2179
        %v2532 = vunpack.c.l.b16 %v2180
        %v2533 = vunpack.c.h.b16 %v2180
        %v2534 = vunpack.c.l.b16 %v2181
        %v2535 = vunpack.c.h.b16 %v2181
        %v2536 = vunpack.c.l.b16 %v2182
        %v2537 = vunpack.c.h.b16 %v2182
        %v2538 = vunpack.c.l.b16 %v2183
        %v2539 = vunpack.c.h.b16 %v2183
        %v2540 = vunpack.c.l.b16 %v2184
        %v2541 = vunpack.c.h.b16 %v2184
        %v2542 = vunpack.c.l.b16 %v2185
        %v2543 = vunpack.c.h.b16 %v2185
        %v2544 = vunpack.c.l.b16 %v2186
        %v2545 = vunpack.c.h.b16 %v2186
        %v2546 = vunpack.c.l.b16 %v2187
        %v2547 = vunpack.c.h.b16 %v2187
        %v2548 = vunpack.c.l.b16 %v2188
        %v2549 = vunpack.c.h.b16 %v2188
        %v2550 = vunpack.c.l.b16 %v2189
        %v2551 = vunpack.c.h.b16 %v2189
        %v2552 = vunpack.c.l.b16 %v2190
        %v2553 = vunpack.c.h.b16 %v2190
        %v2554 = vunpack.c.l.b16 %v2191
        %v2555 = vunpack.c.h.b16 %v2191
        %v2556 = vunpack.c.l.b16 %v2192
        %v2557 = vunpack.c.h.b16 %v2192
        %v2558 = vunpack.c.l.b16 %v2193
        %v2559 = vunpack.c.h.b16 %v2193
        %v2560 = vunpack.c.l.b16 %v2194
        %v2561 = vunpack.c.h.b16 %v2194
        %v2562 = vunpack.c.l.b16 %v2195
        %v2563 = vunpack.c.h.b16 %v2195
        %v2564 = vunpack.c.l.b16 %v2196
        %v2565 = vunpack.c.h.b16 %v2196
        %v2566 = vunpack.c.l.b16 %v2197
        %v2567 = vunpack.c.h.b16 %v2197
        %v2568 = vunpack.c.l.b16 %v2198
        %v2569 = vunpack.c.h.b16 %v2198
        %v2570 = vunpack.c.l.b16 %v2199
        %v2571 = vunpack.c.h.b16 %v2199
        %v2572 = vunpack.c.l.b16 %v2200
        %v2573 = vunpack.c.h.b16 %v2200
        %v2574 = vunpack.c.l.b16 %v2201
        %v2575 = vunpack.c.h.b16 %v2201
        %v2576 = vunpack.c.l.b16 %v2202
        %v2577 = vunpack.c.h.b16 %v2202
        %v2578 = vunpack.c.l.b16 %v2203
        %v2579 = vunpack.c.h.b16 %v2203
        %v2580 = vunpack.c.l.b16 %v2204
        %v2581 = vunpack.c.h.b16 %v2204
        %v2582 = vunpack.c.l.b16 %v2205
        %v2583 = vunpack.c.h.b16 %v2205
        %v2584 = vunpack.c.l.b16 %v2206
        %v2585 = vunpack.c.h.b16 %v2206
        %v2586 = vunpack.c.l.b16 %v2207
        %v2587 = vunpack.c.h.b16 %v2207
        %v2588 = vunpack.c.l.b16 %v2208
        %v2589 = vunpack.c.h.b16 %v2208
        %v2590 = vunpack.c.l.b16 %v2209
        %v2591 = vunpack.c.h.b16 %v2209
        %v2592 = vunpack.c.l.b16 %v2210
        %v2593 = vunpack.c.h.b16 %v2210
        %v2594 = vunpack.c.l.b16 %v2211
        %v2595 = vunpack.c.h.b16 %v2211
        %v2596 = vpack.c.b16 %v2348, %v2340
        %v2597 = vpack.c.b16 %v2349, %v2341
        %v2598 = vpack.c.b16 %v2350, %v2342
        %v2599 = vpack.c.b16 %v2351, %v2343
        %v2600 = vpack.c.b16 %v2352, %v2344
        %v2601 = vpack.c.b16 %v2353, %v2345
        %v2602 = vpack.c.b16 %v2354, %v2346
        %v2603 = vpack.c.b16 %v2355, %v2347
        %v2604 = vpack.c.b16 %v2364, %v2356
        %v2605 = vpack.c.b16 %v2365, %v2357
        %v2606 = vpack.c.b16 %v2366, %v2358
        %v2607 = vpack.c.b16 %v2367, %v2359
        %v2608 = vpack.c.b16 %v2368, %v2360
        %v2609 = vpack.c.b16 %v2369, %v2361
        %v2610 = vpack.c.b16 %v2370, %v2362
        %v2611 = vpack.c.b16 %v2371, %v2363
        %v2612 = vpack.c.b16 %v2380, %v2372
        %v2613 = vpack.c.b16 %v2381, %v2373
        %v2614 = vpack.c.b16 %v2382, %v2374
        %v2615 = vpack.c.b16 %v2383, %v2375
        %v2616 = vpack.c.b16 %v2384, %v2376
        %v2617 = vpack.c.b16 %v2385, %v2377
        %v2618 = vpack.c.b16 %v2386, %v2378
        %v2619 = vpack.c.b16 %v2387, %v2379
        %v2620 = vpack.c.b16 %v2396, %v2388
        %v2621 = vpack.c.b16 %v2397, %v2389
        %v2622 = vpack.c.b16 %v2398, %v2390
        %v2623 = vpack.c.b16 %v2399, %v2391
        %v2624 = vpack.c.b16 %v2400, %v2392
        %v2625 = vpack.c.b16 %v2401, %v2393
        %v2626 = vpack.c.b16 %v2402, %v2394
        %v2627 = vpack.c.b16 %v2403, %v2395
        %v2628 = vpack.c.b16 %v2412, %v2404
        %v2629 = vpack.c.b16 %v2413, %v2405
        %v2630 = vpack.c.b16 %v2414, %v2406
        %v2631 = vpack.c.b16 %v2415, %v2407
        %v2632 = vpack.c.b16 %v2416, %v2408
        %v2633 = vpack.c.b16 %v2417, %v2409
        %v2634 = vpack.c.b16 %v2418, %v2410
        %v2635 = vpack.c.b16 %v2419, %v2411
        %v2636 = vpack.c.b16 %v2428, %v2420
        %v2637 = vpack.c.b16 %v2429, %v2421
        %v2638 = vpack.c.b16 %v2430, %v2422
        %v2639 = vpack.c.b16 %v2431, %v2423
        %v2640 = vpack.c.b16 %v2432, %v2424
        %v2641 = vpack.c.b16 %v2433, %v2425
        %v2642 = vpack.c.b16 %v2434, %v2426
        %v2643 = vpack.c.b16 %v2435, %v2427
        %v2644 = vpack.c.b16 %v2444, %v2436
        %v2645 = vpack.c.b16 %v2445, %v2437
        %v2646 = vpack.c.b16 %v2446, %v2438
        %v2647 = vpack.c.b16 %v2447, %v2439
        %v2648 = vpack.c.b16 %v2448, %v2440
        %v2649 = vpack.c.b16 %v2449, %v2441
        %v2650 = vpack.c.b16 %v2450, %v2442
        %v2651 = vpack.c.b16 %v2451, %v2443
        %v2652 = vpack.c.b16 %v2460, %v2452
        %v2653 = vpack.c.b16 %v2461, %v2453
        %v2654 = vpack.c.b16 %v2462, %v2454
        %v2655 = vpack.c.b16 %v2463, %v2455
        %v2656 = vpack.c.b16 %v2464, %v2456
        %v2657 = vpack.c.b16 %v2465, %v2457
        %v2658 = vpack.c.b16 %v2466, %v2458
        %v2659 = vpack.c.b16 %v2467, %v2459
        %v2660 = vpack.c.b16 %v2476, %v2468
        %v2661 = vpack.c.b16 %v2477, %v2469
        %v2662 = vpack.c.b16 %v2478, %v2470
        %v2663 = vpack.c.b16 %v2479, %v2471
        %v2664 = vpack.c.b16 %v2480, %v2472
        %v2665 = vpack.c.b16 %v2481, %v2473
        %v2666 = vpack.c.b16 %v2482, %v2474
        %v2667 = vpack.c.b16 %v2483, %v2475
        %v2668 = vpack.c.b16 %v2492, %v2484
        %v2669 = vpack.c.b16 %v2493, %v2485
        %v2670 = vpack.c.b16 %v2494, %v2486
        %v2671 = vpack.c.b16 %v2495, %v2487
        %v2672 = vpack.c.b16 %v2496, %v2488
        %v2673 = vpack.c.b16 %v2497, %v2489
        %v2674 = vpack.c.b16 %v2498, %v2490
        %v2675 = vpack.c.b16 %v2499, %v2491
        %v2676 = vpack.c.b16 %v2508, %v2500
        %v2677 = vpack.c.b16 %v2509, %v2501
        %v2678 = vpack.c.b16 %v2510, %v2502
        %v2679 = vpack.c.b16 %v2511, %v2503
        %v2680 = vpack.c.b16 %v2512, %v2504
        %v2681 = vpack.c.b16 %v2513, %v2505
        %v2682 = vpack.c.b16 %v2514, %v2506
        %v2683 = vpack.c.b16 %v2515, %v2507
        %v2684 = vpack.c.b16 %v2524, %v2516
        %v2685 = vpack.c.b16 %v2525, %v2517
        %v2686 = vpack.c.b16 %v2526, %v2518
        %v2687 = vpack.c.b16 %v2527, %v2519
        %v2688 = vpack.c.b16 %v2528, %v2520
        %v2689 = vpack.c.b16 %v2529, %v2521
        %v2690 = vpack.c.b16 %v2530, %v2522
        %v2691 = vpack.c.b16 %v2531, %v2523
        %v2692 = vpack.c.b16 %v2540, %v2532
        %v2693 = vpack.c.b16 %v2541, %v2533
        %v2694 = vpack.c.b16 %v2542, %v2534
        %v2695 = vpack.c.b16 %v2543, %v2535
        %v2696 = vpack.c.b16 %v2544, %v2536
        %v2697 = vpack.c.b16 %v2545, %v2537
        %v2698 = vpack.c.b16 %v2546, %v2538
        %v2699 = vpack.c.b16 %v2547, %v2539
        %v2700 = vpack.c.b16 %v2556, %v2548
        %v2701 = vpack.c.b16 %v2557, %v2549
        %v2702 = vpack.c.b16 %v2558, %v2550
        %v2703 = vpack.c.b16 %v2559, %v2551
        %v2704 = vpack.c.b16 %v2560, %v2552
        %v2705 = vpack.c.b16 %v2561, %v2553
        %v2706 = vpack.c.b16 %v2562, %v2554
        %v2707 = vpack.c.b16 %v2563, %v2555
        %v2708 = vpack.c.b16 %v2572, %v2564
        %v2709 = vpack.c.b16 %v2573, %v2565
        %v2710 = vpack.c.b16 %v2574, %v2566
        %v2711 = vpack.c.b16 %v2575, %v2567
        %v2712 = vpack.c.b16 %v2576, %v2568
        %v2713 = vpack.c.b16 %v2577, %v2569
        %v2714 = vpack.c.b16 %v2578, %v2570
        %v2715 = vpack.c.b16 %v2579, %v2571
        %v2716 = vpack.c.b16 %v2588, %v2580
        %v2717 = vpack.c.b16 %v2589, %v2581
        %v2718 = vpack.c.b16 %v2590, %v2582
        %v2719 = vpack.c.b16 %v2591, %v2583
        %v2720 = vpack.c.b16 %v2592, %v2584
        %v2721 = vpack.c.b16 %v2593, %v2585
        %v2722 = vpack.c.b16 %v2594, %v2586
        %v2723 = vpack.c.b16 %v2595, %v2587
        %2852 = vmatprep.subr.bf16.mxu0 %v2653
        %2853 = vmatpush1.bf16.msra.mxu0 %v2652
        %2854 = vmatprep.subr.bf16.mxu0 %v2645
        %2855 = vmatpush1.bf16.msra.mxu0 %v2644
        %2856 = vmatprep.subr.bf16.mxu0 %v2637
        %2857 = vmatpush1.bf16.msra.mxu0 %v2636
        %2858 = vmatprep.subr.bf16.mxu0 %v2629
        %2859 = vmatpush1.bf16.msra.mxu0 %v2628
        %2860 = vmatprep.subr.bf16.mxu0 %v2621
        %2861 = vmatpush1.bf16.msra.mxu0 %v2620
        %2862 = vmatprep.subr.bf16.mxu0 %v2613
        %2863 = vmatpush1.bf16.msra.mxu0 %v2612
        %2864 = vmatprep.subr.bf16.mxu0 %v2605
        %2865 = vmatpush1.bf16.msra.mxu0 %v2604
        %2866 = vmatprep.subr.bf16.mxu0 %v2597
        %2867 = vmatpush1.bf16.msra.mxu0 %v2596
        %2868 = vmatprep.subr.bf16.mxu0 %v2717
        %2869 = vmatpush2.bf16.msra.mxu0 %v2716
        %2870 = vmatprep.subr.bf16.mxu0 %v2709
        %2871 = vmatpush2.bf16.msra.mxu0 %v2708
        %2872 = vmatprep.subr.bf16.mxu0 %v2701
        %2873 = vmatpush2.bf16.msra.mxu0 %v2700
        %2874 = vmatprep.subr.bf16.mxu0 %v2693
        %2875 = vmatpush2.bf16.msra.mxu0 %v2692
        %2876 = vmatprep.subr.bf16.mxu0 %v2685
        %2877 = vmatpush2.bf16.msra.mxu0 %v2684
        %2878 = vmatprep.subr.bf16.mxu0 %v2677
        %2879 = vmatpush2.bf16.msra.mxu0 %v2676
        %2880 = vmatprep.subr.bf16.mxu0 %v2669
        %2881 = vmatpush2.bf16.msra.mxu0 %v2668
        %2882 = vmatprep.subr.bf16.mxu0 %v2661
        %2883 = vmatpush2.bf16.msra.mxu0 %v2660
        %2884 = vmatprep.mubr.bf16.mxu0 %v2083
        %2885 = vmatmul.mubr.bf16.gmra.mxu0 %v2082
        %v2886 = vpop.f32.mrf.mxu0
        %v2887 = vadd.f32 0.0, %v2886
        %v2888 = vpop.f32.mrf.mxu0
        %v2889 = vadd.f32 0.0, %v2888
        %v2890 = vpop.f32.mrf.mxu0
        %v2891 = vadd.f32 0.0, %v2890
        %v2892 = vpop.f32.mrf.mxu0
        %v2893 = vadd.f32 0.0, %v2892
        %2894 = vdwg.mxu0
        %2895 = vmatprep.subr.bf16.mxu0 %v2655
        %2896 = vmatpush1.bf16.msra.mxu0 %v2654
        %2897 = vmatprep.subr.bf16.mxu0 %v2647
        %2898 = vmatpush1.bf16.msra.mxu0 %v2646
        %2899 = vmatprep.subr.bf16.mxu0 %v2639
        %2900 = vmatpush1.bf16.msra.mxu0 %v2638
        %2901 = vmatprep.subr.bf16.mxu0 %v2631
        %2902 = vmatpush1.bf16.msra.mxu0 %v2630
        %2903 = vmatprep.subr.bf16.mxu0 %v2623
        %2904 = vmatpush1.bf16.msra.mxu0 %v2622
        %2905 = vmatprep.subr.bf16.mxu0 %v2615
        %2906 = vmatpush1.bf16.msra.mxu0 %v2614
        %2907 = vmatprep.subr.bf16.mxu0 %v2607
        %2908 = vmatpush1.bf16.msra.mxu0 %v2606
        %2909 = vmatprep.subr.bf16.mxu0 %v2599
        %2910 = vmatpush1.bf16.msra.mxu0 %v2598
        %2911 = vmatprep.subr.bf16.mxu0 %v2719
        %2912 = vmatpush2.bf16.msra.mxu0 %v2718
        %2913 = vmatprep.subr.bf16.mxu0 %v2711
        %2914 = vmatpush2.bf16.msra.mxu0 %v2710
        %2915 = vmatprep.subr.bf16.mxu0 %v2703
        %2916 = vmatpush2.bf16.msra.mxu0 %v2702
        %2917 = vmatprep.subr.bf16.mxu0 %v2695
        %2918 = vmatpush2.bf16.msra.mxu0 %v2694
        %2919 = vmatprep.subr.bf16.mxu0 %v2687
        %2920 = vmatpush2.bf16.msra.mxu0 %v2686
        %2921 = vmatprep.subr.bf16.mxu0 %v2679
        %2922 = vmatpush2.bf16.msra.mxu0 %v2678
        %2923 = vmatprep.subr.bf16.mxu0 %v2671
        %2924 = vmatpush2.bf16.msra.mxu0 %v2670
        %2925 = vmatprep.subr.bf16.mxu0 %v2663
        %2926 = vmatpush2.bf16.msra.mxu0 %v2662
        %2927 = vmatprep.mubr.bf16.mxu0 %v2083
        %2928 = vmatmul.mubr.bf16.gmra.mxu0 %v2082
        %v2929 = vpop.f32.mrf.mxu0
        %v2930 = vadd.f32 0.0, %v2929
        %v2931 = vpop.f32.mrf.mxu0
        %v2932 = vadd.f32 0.0, %v2931
        %v2933 = vpop.f32.mrf.mxu0
        %v2934 = vadd.f32 0.0, %v2933
        %v2935 = vpop.f32.mrf.mxu0
        %v2936 = vadd.f32 0.0, %v2935
        %2937 = vdwg.mxu0
        %2938 = vmatprep.subr.bf16.mxu0 %v2657
        %2939 = vmatpush1.bf16.msra.mxu0 %v2656
        %2940 = vmatprep.subr.bf16.mxu0 %v2649
        %2941 = vmatpush1.bf16.msra.mxu0 %v2648
        %2942 = vmatprep.subr.bf16.mxu0 %v2641
        %2943 = vmatpush1.bf16.msra.mxu0 %v2640
        %2944 = vmatprep.subr.bf16.mxu0 %v2633
        %2945 = vmatpush1.bf16.msra.mxu0 %v2632
        %2946 = vmatprep.subr.bf16.mxu0 %v2625
        %2947 = vmatpush1.bf16.msra.mxu0 %v2624
        %2948 = vmatprep.subr.bf16.mxu0 %v2617
        %2949 = vmatpush1.bf16.msra.mxu0 %v2616
        %2950 = vmatprep.subr.bf16.mxu0 %v2609
        %2951 = vmatpush1.bf16.msra.mxu0 %v2608
        %2952 = vmatprep.subr.bf16.mxu0 %v2601
        %2953 = vmatpush1.bf16.msra.mxu0 %v2600
        %2954 = vmatprep.subr.bf16.mxu0 %v2721
        %2955 = vmatpush2.bf16.msra.mxu0 %v2720
        %2956 = vmatprep.subr.bf16.mxu0 %v2713
        %2957 = vmatpush2.bf16.msra.mxu0 %v2712
        %2958 = vmatprep.subr.bf16.mxu0 %v2705
        %2959 = vmatpush2.bf16.msra.mxu0 %v2704
        %2960 = vmatprep.subr.bf16.mxu0 %v2697
        %2961 = vmatpush2.bf16.msra.mxu0 %v2696
        %2962 = vmatprep.subr.bf16.mxu0 %v2689
        %2963 = vmatpush2.bf16.msra.mxu0 %v2688
        %2964 = vmatprep.subr.bf16.mxu0 %v2681
        %2965 = vmatpush2.bf16.msra.mxu0 %v2680
        %2966 = vmatprep.subr.bf16.mxu0 %v2673
        %2967 = vmatpush2.bf16.msra.mxu0 %v2672
        %2968 = vmatprep.subr.bf16.mxu0 %v2665
        %2969 = vmatpush2.bf16.msra.mxu0 %v2664
        %2970 = vmatprep.mubr.bf16.mxu0 %v2083
        %2971 = vmatmul.mubr.bf16.gmra.mxu0 %v2082
        %v2972 = vpop.f32.mrf.mxu0
        %v2973 = vadd.f32 0.0, %v2972
        %v2974 = vpop.f32.mrf.mxu0
        %v2975 = vadd.f32 0.0, %v2974
        %v2976 = vpop.f32.mrf.mxu0
        %v2977 = vadd.f32 0.0, %v2976
        %v2978 = vpop.f32.mrf.mxu0
        %v2979 = vadd.f32 0.0, %v2978
        %2980 = vdwg.mxu0
        %2981 = vmatprep.subr.bf16.mxu0 %v2659
        %2982 = vmatpush1.bf16.msra.mxu0 %v2658
        %2983 = vmatprep.subr.bf16.mxu0 %v2651
        %2984 = vmatpush1.bf16.msra.mxu0 %v2650
        %2985 = vmatprep.subr.bf16.mxu0 %v2643
        %2986 = vmatpush1.bf16.msra.mxu0 %v2642
        %2987 = vmatprep.subr.bf16.mxu0 %v2635
        %2988 = vmatpush1.bf16.msra.mxu0 %v2634
        %2989 = vmatprep.subr.bf16.mxu0 %v2627
        %2990 = vmatpush1.bf16.msra.mxu0 %v2626
        %2991 = vmatprep.subr.bf16.mxu0 %v2619
        %2992 = vmatpush1.bf16.msra.mxu0 %v2618
        %2993 = vmatprep.subr.bf16.mxu0 %v2611
        %2994 = vmatpush1.bf16.msra.mxu0 %v2610
        %2995 = vmatprep.subr.bf16.mxu0 %v2603
        %2996 = vmatpush1.bf16.msra.mxu0 %v2602
        %2997 = vmatprep.subr.bf16.mxu0 %v2723
        %2998 = vmatpush2.bf16.msra.mxu0 %v2722
        %2999 = vmatprep.subr.bf16.mxu0 %v2715
        %3000 = vmatpush2.bf16.msra.mxu0 %v2714
        %3001 = vmatprep.subr.bf16.mxu0 %v2707
        %3002 = vmatpush2.bf16.msra.mxu0 %v2706
        %3003 = vmatprep.subr.bf16.mxu0 %v2699
        %3004 = vmatpush2.bf16.msra.mxu0 %v2698
        %3005 = vmatprep.subr.bf16.mxu0 %v2691
        %3006 = vmatpush2.bf16.msra.mxu0 %v2690
        %3007 = vmatprep.subr.bf16.mxu0 %v2683
        %3008 = vmatpush2.bf16.msra.mxu0 %v2682
        %3009 = vmatprep.subr.bf16.mxu0 %v2675
        %3010 = vmatpush2.bf16.msra.mxu0 %v2674
        %3011 = vmatprep.subr.bf16.mxu0 %v2667
        %3012 = vmatpush2.bf16.msra.mxu0 %v2666
        %3013 = vmatprep.mubr.bf16.mxu0 %v2083
        %3014 = vmatmul.mubr.bf16.gmra.mxu0 %v2082
        %v3015 = vpop.f32.mrf.mxu0
        %v3016 = vadd.f32 0.0, %v3015
        %v3017 = vpop.f32.mrf.mxu0
        %v3018 = vadd.f32 0.0, %v3017
        %v3019 = vpop.f32.mrf.mxu0
        %v3020 = vadd.f32 0.0, %v3019
        %v3021 = vpop.f32.mrf.mxu0
        %v3022 = vadd.f32 0.0, %v3021
        %3023 = vdwg.mxu0
        %v3024 = vxor.u32 %v2887, 2147483648
        %v3025 = vxor.u32 %v2889, 2147483648
        %v3026 = vxor.u32 %v2930, 2147483648
        %v3027 = vxor.u32 %v2932, 2147483648
        %v3028 = vxor.u32 %v2891, 2147483648
        %v3029 = vxor.u32 %v2893, 2147483648
        %v3030 = vxor.u32 %v2934, 2147483648
        %v3031 = vxor.u32 %v2936, 2147483648
        %v3032 = vmul.f32 %v3024, 1.442695
        %v3033 = vpow.pop %v3032
        %v3034 = vmul.f32 %v3025, 1.442695
        %v3035 = vpow.pop %v3034
        %v3036 = vmul.f32 %v3026, 1.442695
        %v3037 = vpow.pop %v3036
        %v3038 = vmul.f32 %v3027, 1.442695
        %v3039 = vpow.pop %v3038
        %v3040 = vmul.f32 %v3028, 1.442695
        %v3041 = vpow.pop %v3040
        %v3042 = vmul.f32 %v3029, 1.442695
        %v3043 = vpow.pop %v3042
        %v3044 = vmul.f32 %v3030, 1.442695
        %v3045 = vpow.pop %v3044
        %v3046 = vmul.f32 %v3031, 1.442695
        %v3047 = vpow.pop %v3046
        %v3048 = vadd.f32 %v3033, 1.0
        %v3049 = vadd.f32 %v3035, 1.0
        %v3050 = vadd.f32 %v3037, 1.0
        %v3051 = vadd.f32 %v3039, 1.0
        %v3052 = vadd.f32 %v3041, 1.0
        %v3053 = vadd.f32 %v3043, 1.0
        %v3054 = vadd.f32 %v3045, 1.0
        %v3055 = vadd.f32 %v3047, 1.0
        %v3056 = vrcp.pop %v3048
        %v3057 = vmul.f32 1.0, %v3056
        %v3058 = vrcp.pop %v3049
        %v3059 = vmul.f32 1.0, %v3058
        %v3060 = vrcp.pop %v3050
        %v3061 = vmul.f32 1.0, %v3060
        %v3062 = vrcp.pop %v3051
        %v3063 = vmul.f32 1.0, %v3062
        %v3064 = vrcp.pop %v3052
        %v3065 = vmul.f32 1.0, %v3064
        %v3066 = vrcp.pop %v3053
        %v3067 = vmul.f32 1.0, %v3066
        %v3068 = vrcp.pop %v3054
        %v3069 = vmul.f32 1.0, %v3068
        %v3070 = vrcp.pop %v3055
        %v3071 = vmul.f32 1.0, %v3070
        %v3072 = vmul.f32 %v2887, %v3057
        %v3073 = vmul.f32 %v2889, %v3059
        %v3074 = vmul.f32 %v2930, %v3061
        %v3075 = vmul.f32 %v2932, %v3063
        %v3076 = vmul.f32 %v2891, %v3065
        %v3077 = vmul.f32 %v2893, %v3067
        %v3078 = vmul.f32 %v2934, %v3069
        %v3079 = vmul.f32 %v2936, %v3071
        %v3080 = vmul.f32 %v3072, %v2973
        %v3081 = vmul.f32 %v3073, %v2975
        %v3082 = vmul.f32 %v3074, %v3016
        %v3083 = vmul.f32 %v3075, %v3018
        %v3084 = vmul.f32 %v3076, %v2977
        %v3085 = vmul.f32 %v3077, %v2979
        %v3086 = vmul.f32 %v3078, %v3020
        %v3087 = vmul.f32 %v3079, %v3022
        %v3088 = vpack.c.bf16 %v3084, %v3080
        %v3089 = vpack.c.bf16 %v3085, %v3081
        %v3090 = vpack.c.bf16 %v3086, %v3082
        %v3091 = vpack.c.bf16 %v3087, %v3083
        %v3092 = vld [vmem:[%s577] sm:$0xff]
        %v3093 = vld [vmem:[%s577 + $0x8] sm:$0xff]
        %v3094 = vld [vmem:[%s577 + $0x10] sm:$0xff]
        %v3095 = vld [vmem:[%s577 + $0x18] sm:$0xff]
        %v3096 = vld [vmem:[%s577 + $0x20] sm:$0xff]
        %v3097 = vld [vmem:[%s577 + $0x28] sm:$0xff]
        %v3098 = vld [vmem:[%s577 + $0x30] sm:$0xff]
        %v3099 = vld [vmem:[%s577 + $0x38] sm:$0xff]
        %v3100 = vld [vmem:[%s577 + $0x40] sm:$0xff]
        %v3101 = vld [vmem:[%s577 + $0x48] sm:$0xff]
        %v3102 = vld [vmem:[%s577 + $0x50] sm:$0xff]
        %v3103 = vld [vmem:[%s577 + $0x58] sm:$0xff]
        %v3104 = vld [vmem:[%s577 + $0x60] sm:$0xff]
        %v3105 = vld [vmem:[%s577 + $0x68] sm:$0xff]
        %v3106 = vld [vmem:[%s577 + $0x70] sm:$0xff]
        %v3107 = vld [vmem:[%s577 + $0x78] sm:$0xff]
        %v3108 = vld [vmem:[%s577 + $0x80] sm:$0xff]
        %v3109 = vld [vmem:[%s577 + $0x88] sm:$0xff]
        %v3110 = vld [vmem:[%s577 + $0x90] sm:$0xff]
        %v3111 = vld [vmem:[%s577 + $0x98] sm:$0xff]
        %v3112 = vld [vmem:[%s577 + $0xa0] sm:$0xff]
        %v3113 = vld [vmem:[%s577 + $0xa8] sm:$0xff]
        %v3114 = vld [vmem:[%s577 + $0xb0] sm:$0xff]
        %v3115 = vld [vmem:[%s577 + $0xb8] sm:$0xff]
        %v3116 = vld [vmem:[%s577 + $0xc0] sm:$0xff]
        %v3117 = vld [vmem:[%s577 + $0xc8] sm:$0xff]
        %v3118 = vld [vmem:[%s577 + $0xd0] sm:$0xff]
        %v3119 = vld [vmem:[%s577 + $0xd8] sm:$0xff]
        %v3120 = vld [vmem:[%s577 + $0xe0] sm:$0xff]
        %v3121 = vld [vmem:[%s577 + $0xe8] sm:$0xff]
        %v3122 = vld [vmem:[%s577 + $0xf0] sm:$0xff]
        %v3123 = vld [vmem:[%s577 + $0xf8] sm:$0xff]
        %v3124 = vld [vmem:[%s577 + $0x100] sm:$0xff]
        %v3125 = vld [vmem:[%s577 + $0x108] sm:$0xff]
        %v3126 = vld [vmem:[%s577 + $0x110] sm:$0xff]
        %v3127 = vld [vmem:[%s577 + $0x118] sm:$0xff]
        %v3128 = vld [vmem:[%s577 + $0x120] sm:$0xff]
        %v3129 = vld [vmem:[%s577 + $0x128] sm:$0xff]
        %v3130 = vld [vmem:[%s577 + $0x130] sm:$0xff]
        %v3131 = vld [vmem:[%s577 + $0x138] sm:$0xff]
        %v3132 = vld [vmem:[%s577 + $0x140] sm:$0xff]
        %v3133 = vld [vmem:[%s577 + $0x148] sm:$0xff]
        %v3134 = vld [vmem:[%s577 + $0x150] sm:$0xff]
        %v3135 = vld [vmem:[%s577 + $0x158] sm:$0xff]
        %v3136 = vld [vmem:[%s577 + $0x160] sm:$0xff]
        %v3137 = vld [vmem:[%s577 + $0x168] sm:$0xff]
        %v3138 = vld [vmem:[%s577 + $0x170] sm:$0xff]
        %v3139 = vld [vmem:[%s577 + $0x178] sm:$0xff]
        %v3140 = vld [vmem:[%s577 + $0x180] sm:$0xff]
        %v3141 = vld [vmem:[%s577 + $0x188] sm:$0xff]
        %v3142 = vld [vmem:[%s577 + $0x190] sm:$0xff]
        %v3143 = vld [vmem:[%s577 + $0x198] sm:$0xff]
        %v3144 = vld [vmem:[%s577 + $0x1a0] sm:$0xff]
        %v3145 = vld [vmem:[%s577 + $0x1a8] sm:$0xff]
        %v3146 = vld [vmem:[%s577 + $0x1b0] sm:$0xff]
        %v3147 = vld [vmem:[%s577 + $0x1b8] sm:$0xff]
        %v3148 = vld [vmem:[%s577 + $0x1c0] sm:$0xff]
        %v3149 = vld [vmem:[%s577 + $0x1c8] sm:$0xff]
        %v3150 = vld [vmem:[%s577 + $0x1d0] sm:$0xff]
        %v3151 = vld [vmem:[%s577 + $0x1d8] sm:$0xff]
        %v3152 = vld [vmem:[%s577 + $0x1e0] sm:$0xff]
        %v3153 = vld [vmem:[%s577 + $0x1e8] sm:$0xff]
        %v3154 = vld [vmem:[%s577 + $0x1f0] sm:$0xff]
        %v3155 = vld [vmem:[%s577 + $0x1f8] sm:$0xff]
        %v3220 = vunpack.c.l.b16 %v3092
        %v3221 = vunpack.c.h.b16 %v3092
        %v3222 = vunpack.c.l.b16 %v3093
        %v3223 = vunpack.c.h.b16 %v3093
        %v3224 = vunpack.c.l.b16 %v3094
        %v3225 = vunpack.c.h.b16 %v3094
        %v3226 = vunpack.c.l.b16 %v3095
        %v3227 = vunpack.c.h.b16 %v3095
        %v3228 = vunpack.c.l.b16 %v3096
        %v3229 = vunpack.c.h.b16 %v3096
        %v3230 = vunpack.c.l.b16 %v3097
        %v3231 = vunpack.c.h.b16 %v3097
        %v3232 = vunpack.c.l.b16 %v3098
        %v3233 = vunpack.c.h.b16 %v3098
        %v3234 = vunpack.c.l.b16 %v3099
        %v3235 = vunpack.c.h.b16 %v3099
        %v3236 = vunpack.c.l.b16 %v3100
        %v3237 = vunpack.c.h.b16 %v3100
        %v3238 = vunpack.c.l.b16 %v3101
        %v3239 = vunpack.c.h.b16 %v3101
        %v3240 = vunpack.c.l.b16 %v3102
        %v3241 = vunpack.c.h.b16 %v3102
        %v3242 = vunpack.c.l.b16 %v3103
        %v3243 = vunpack.c.h.b16 %v3103
        %v3244 = vunpack.c.l.b16 %v3104
        %v3245 = vunpack.c.h.b16 %v3104
        %v3246 = vunpack.c.l.b16 %v3105
        %v3247 = vunpack.c.h.b16 %v3105
        %v3248 = vunpack.c.l.b16 %v3106
        %v3249 = vunpack.c.h.b16 %v3106
        %v3250 = vunpack.c.l.b16 %v3107
        %v3251 = vunpack.c.h.b16 %v3107
        %v3252 = vunpack.c.l.b16 %v3108
        %v3253 = vunpack.c.h.b16 %v3108
        %v3254 = vunpack.c.l.b16 %v3109
        %v3255 = vunpack.c.h.b16 %v3109
        %v3256 = vunpack.c.l.b16 %v3110
        %v3257 = vunpack.c.h.b16 %v3110
        %v3258 = vunpack.c.l.b16 %v3111
        %v3259 = vunpack.c.h.b16 %v3111
        %v3260 = vunpack.c.l.b16 %v3112
        %v3261 = vunpack.c.h.b16 %v3112
        %v3262 = vunpack.c.l.b16 %v3113
        %v3263 = vunpack.c.h.b16 %v3113
        %v3264 = vunpack.c.l.b16 %v3114
        %v3265 = vunpack.c.h.b16 %v3114
        %v3266 = vunpack.c.l.b16 %v3115
        %v3267 = vunpack.c.h.b16 %v3115
        %v3268 = vunpack.c.l.b16 %v3116
        %v3269 = vunpack.c.h.b16 %v3116
        %v3270 = vunpack.c.l.b16 %v3117
        %v3271 = vunpack.c.h.b16 %v3117
        %v3272 = vunpack.c.l.b16 %v3118
        %v3273 = vunpack.c.h.b16 %v3118
        %v3274 = vunpack.c.l.b16 %v3119
        %v3275 = vunpack.c.h.b16 %v3119
        %v3276 = vunpack.c.l.b16 %v3120
        %v3277 = vunpack.c.h.b16 %v3120
        %v3278 = vunpack.c.l.b16 %v3121
        %v3279 = vunpack.c.h.b16 %v3121
        %v3280 = vunpack.c.l.b16 %v3122
        %v3281 = vunpack.c.h.b16 %v3122
        %v3282 = vunpack.c.l.b16 %v3123
        %v3283 = vunpack.c.h.b16 %v3123
        %v3284 = vunpack.c.l.b16 %v3124
        %v3285 = vunpack.c.h.b16 %v3124
        %v3286 = vunpack.c.l.b16 %v3125
        %v3287 = vunpack.c.h.b16 %v3125
        %v3288 = vunpack.c.l.b16 %v3126
        %v3289 = vunpack.c.h.b16 %v3126
        %v3290 = vunpack.c.l.b16 %v3127
        %v3291 = vunpack.c.h.b16 %v3127
        %v3292 = vunpack.c.l.b16 %v3128
        %v3293 = vunpack.c.h.b16 %v3128
        %v3294 = vunpack.c.l.b16 %v3129
        %v3295 = vunpack.c.h.b16 %v3129
        %v3296 = vunpack.c.l.b16 %v3130
        %v3297 = vunpack.c.h.b16 %v3130
        %v3298 = vunpack.c.l.b16 %v3131
        %v3299 = vunpack.c.h.b16 %v3131
        %v3300 = vunpack.c.l.b16 %v3132
        %v3301 = vunpack.c.h.b16 %v3132
        %v3302 = vunpack.c.l.b16 %v3133
        %v3303 = vunpack.c.h.b16 %v3133
        %v3304 = vunpack.c.l.b16 %v3134
        %v3305 = vunpack.c.h.b16 %v3134
        %v3306 = vunpack.c.l.b16 %v3135
        %v3307 = vunpack.c.h.b16 %v3135
        %v3308 = vunpack.c.l.b16 %v3136
        %v3309 = vunpack.c.h.b16 %v3136
        %v3310 = vunpack.c.l.b16 %v3137
        %v3311 = vunpack.c.h.b16 %v3137
        %v3312 = vunpack.c.l.b16 %v3138
        %v3313 = vunpack.c.h.b16 %v3138
        %v3314 = vunpack.c.l.b16 %v3139
        %v3315 = vunpack.c.h.b16 %v3139
        %v3316 = vunpack.c.l.b16 %v3140
        %v3317 = vunpack.c.h.b16 %v3140
        %v3318 = vunpack.c.l.b16 %v3141
        %v3319 = vunpack.c.h.b16 %v3141
        %v3320 = vunpack.c.l.b16 %v3142
        %v3321 = vunpack.c.h.b16 %v3142
        %v3322 = vunpack.c.l.b16 %v3143
        %v3323 = vunpack.c.h.b16 %v3143
        %v3324 = vunpack.c.l.b16 %v3144
        %v3325 = vunpack.c.h.b16 %v3144
        %v3326 = vunpack.c.l.b16 %v3145
        %v3327 = vunpack.c.h.b16 %v3145
        %v3328 = vunpack.c.l.b16 %v3146
        %v3329 = vunpack.c.h.b16 %v3146
        %v3330 = vunpack.c.l.b16 %v3147
        %v3331 = vunpack.c.h.b16 %v3147
        %v3332 = vunpack.c.l.b16 %v3148
        %v3333 = vunpack.c.h.b16 %v3148
        %v3334 = vunpack.c.l.b16 %v3149
        %v3335 = vunpack.c.h.b16 %v3149
        %v3336 = vunpack.c.l.b16 %v3150
        %v3337 = vunpack.c.h.b16 %v3150
        %v3338 = vunpack.c.l.b16 %v3151
        %v3339 = vunpack.c.h.b16 %v3151
        %v3340 = vunpack.c.l.b16 %v3152
        %v3341 = vunpack.c.h.b16 %v3152
        %v3342 = vunpack.c.l.b16 %v3153
        %v3343 = vunpack.c.h.b16 %v3153
        %v3344 = vunpack.c.l.b16 %v3154
        %v3345 = vunpack.c.h.b16 %v3154
        %v3346 = vunpack.c.l.b16 %v3155
        %v3347 = vunpack.c.h.b16 %v3155
        %v3348 = vpack.c.b16 %v3222, %v3220
        %v3349 = vpack.c.b16 %v3223, %v3221
        %v3350 = vpack.c.b16 %v3226, %v3224
        %v3351 = vpack.c.b16 %v3227, %v3225
        %v3352 = vpack.c.b16 %v3230, %v3228
        %v3353 = vpack.c.b16 %v3231, %v3229
        %v3354 = vpack.c.b16 %v3234, %v3232
        %v3355 = vpack.c.b16 %v3235, %v3233
        %v3356 = vpack.c.b16 %v3238, %v3236
        %v3357 = vpack.c.b16 %v3239, %v3237
        %v3358 = vpack.c.b16 %v3242, %v3240
        %v3359 = vpack.c.b16 %v3243, %v3241
        %v3360 = vpack.c.b16 %v3246, %v3244
        %v3361 = vpack.c.b16 %v3247, %v3245
        %v3362 = vpack.c.b16 %v3250, %v3248
        %v3363 = vpack.c.b16 %v3251, %v3249
        %v3364 = vpack.c.b16 %v3254, %v3252
        %v3365 = vpack.c.b16 %v3255, %v3253
        %v3366 = vpack.c.b16 %v3258, %v3256
        %v3367 = vpack.c.b16 %v3259, %v3257
        %v3368 = vpack.c.b16 %v3262, %v3260
        %v3369 = vpack.c.b16 %v3263, %v3261
        %v3370 = vpack.c.b16 %v3266, %v3264
        %v3371 = vpack.c.b16 %v3267, %v3265
        %v3372 = vpack.c.b16 %v3270, %v3268
        %v3373 = vpack.c.b16 %v3271, %v3269
        %v3374 = vpack.c.b16 %v3274, %v3272
        %v3375 = vpack.c.b16 %v3275, %v3273
        %v3376 = vpack.c.b16 %v3278, %v3276
        %v3377 = vpack.c.b16 %v3279, %v3277
        %v3378 = vpack.c.b16 %v3282, %v3280
        %v3379 = vpack.c.b16 %v3283, %v3281
        %v3380 = vpack.c.b16 %v3286, %v3284
        %v3381 = vpack.c.b16 %v3287, %v3285
        %v3382 = vpack.c.b16 %v3290, %v3288
        %v3383 = vpack.c.b16 %v3291, %v3289
        %v3384 = vpack.c.b16 %v3294, %v3292
        %v3385 = vpack.c.b16 %v3295, %v3293
        %v3386 = vpack.c.b16 %v3298, %v3296
        %v3387 = vpack.c.b16 %v3299, %v3297
        %v3388 = vpack.c.b16 %v3302, %v3300
        %v3389 = vpack.c.b16 %v3303, %v3301
        %v3390 = vpack.c.b16 %v3306, %v3304
        %v3391 = vpack.c.b16 %v3307, %v3305
        %v3392 = vpack.c.b16 %v3310, %v3308
        %v3393 = vpack.c.b16 %v3311, %v3309
        %v3394 = vpack.c.b16 %v3314, %v3312
        %v3395 = vpack.c.b16 %v3315, %v3313
        %v3396 = vpack.c.b16 %v3318, %v3316
        %v3397 = vpack.c.b16 %v3319, %v3317
        %v3398 = vpack.c.b16 %v3322, %v3320
        %v3399 = vpack.c.b16 %v3323, %v3321
        %v3400 = vpack.c.b16 %v3326, %v3324
        %v3401 = vpack.c.b16 %v3327, %v3325
        %v3402 = vpack.c.b16 %v3330, %v3328
        %v3403 = vpack.c.b16 %v3331, %v3329
        %v3404 = vpack.c.b16 %v3334, %v3332
        %v3405 = vpack.c.b16 %v3335, %v3333
        %v3406 = vpack.c.b16 %v3338, %v3336
        %v3407 = vpack.c.b16 %v3339, %v3337
        %v3408 = vpack.c.b16 %v3342, %v3340
        %v3409 = vpack.c.b16 %v3343, %v3341
        %v3410 = vpack.c.b16 %v3346, %v3344
        %v3411 = vpack.c.b16 %v3347, %v3345
        %3476 = vmatprep.subr.bf16.mxu0 %v3363
        %3477 = vmatpush1.bf16.msra.mxu0 %v3362
        %3478 = vmatprep.subr.bf16.mxu0 %v3361
        %3479 = vmatpush1.bf16.msra.mxu0 %v3360
        %3480 = vmatprep.subr.bf16.mxu0 %v3359
        %3481 = vmatpush1.bf16.msra.mxu0 %v3358
        %3482 = vmatprep.subr.bf16.mxu0 %v3357
        %3483 = vmatpush1.bf16.msra.mxu0 %v3356
        %3484 = vmatprep.subr.bf16.mxu0 %v3355
        %3485 = vmatpush1.bf16.msra.mxu0 %v3354
        %3486 = vmatprep.subr.bf16.mxu0 %v3353
        %3487 = vmatpush1.bf16.msra.mxu0 %v3352
        %3488 = vmatprep.subr.bf16.mxu0 %v3351
        %3489 = vmatpush1.bf16.msra.mxu0 %v3350
        %3490 = vmatprep.subr.bf16.mxu0 %v3349
        %3491 = vmatpush1.bf16.msra.mxu0 %v3348
        %3492 = vmatprep.subr.bf16.mxu0 %v3379
        %3493 = vmatpush2.bf16.msra.mxu0 %v3378
        %3494 = vmatprep.subr.bf16.mxu0 %v3377
        %3495 = vmatpush2.bf16.msra.mxu0 %v3376
        %3496 = vmatprep.subr.bf16.mxu0 %v3375
        %3497 = vmatpush2.bf16.msra.mxu0 %v3374
        %3498 = vmatprep.subr.bf16.mxu0 %v3373
        %3499 = vmatpush2.bf16.msra.mxu0 %v3372
        %3500 = vmatprep.subr.bf16.mxu0 %v3371
        %3501 = vmatpush2.bf16.msra.mxu0 %v3370
        %3502 = vmatprep.subr.bf16.mxu0 %v3369
        %3503 = vmatpush2.bf16.msra.mxu0 %v3368
        %3504 = vmatprep.subr.bf16.mxu0 %v3367
        %3505 = vmatpush2.bf16.msra.mxu0 %v3366
        %3506 = vmatprep.subr.bf16.mxu0 %v3365
        %3507 = vmatpush2.bf16.msra.mxu0 %v3364
        %3508 = vmatprep.mubr.bf16.mxu0 %v3089
        %3509 = vmatmul.mubr.bf16.gmra.mxu0 %v3088
        %v3510 = vpop.f32.mrf.mxu0
        %v3511 = vadd.f32 0.0, %v3510
        %v3512 = vpop.f32.mrf.mxu0
        %v3513 = vadd.f32 0.0, %v3512
        %v3514 = vpop.f32.mrf.mxu0
        %v3515 = vadd.f32 0.0, %v3514
        %v3516 = vpop.f32.mrf.mxu0
        %v3517 = vadd.f32 0.0, %v3516
        %3518 = vdwg.mxu0
        %3519 = vmatprep.subr.bf16.mxu0 %v3395
        %3520 = vmatpush1.bf16.msra.mxu0 %v3394
        %3521 = vmatprep.subr.bf16.mxu0 %v3393
        %3522 = vmatpush1.bf16.msra.mxu0 %v3392
        %3523 = vmatprep.subr.bf16.mxu0 %v3391
        %3524 = vmatpush1.bf16.msra.mxu0 %v3390
        %3525 = vmatprep.subr.bf16.mxu0 %v3389
        %3526 = vmatpush1.bf16.msra.mxu0 %v3388
        %3527 = vmatprep.subr.bf16.mxu0 %v3387
        %3528 = vmatpush1.bf16.msra.mxu0 %v3386
        %3529 = vmatprep.subr.bf16.mxu0 %v3385
        %3530 = vmatpush1.bf16.msra.mxu0 %v3384
        %3531 = vmatprep.subr.bf16.mxu0 %v3383
        %3532 = vmatpush1.bf16.msra.mxu0 %v3382
        %3533 = vmatprep.subr.bf16.mxu0 %v3381
        %3534 = vmatpush1.bf16.msra.mxu0 %v3380
        %3535 = vmatprep.subr.bf16.mxu0 %v3411
        %3536 = vmatpush2.bf16.msra.mxu0 %v3410
        %3537 = vmatprep.subr.bf16.mxu0 %v3409
        %3538 = vmatpush2.bf16.msra.mxu0 %v3408
        %3539 = vmatprep.subr.bf16.mxu0 %v3407
        %3540 = vmatpush2.bf16.msra.mxu0 %v3406
        %3541 = vmatprep.subr.bf16.mxu0 %v3405
        %3542 = vmatpush2.bf16.msra.mxu0 %v3404
        %3543 = vmatprep.subr.bf16.mxu0 %v3403
        %3544 = vmatpush2.bf16.msra.mxu0 %v3402
        %3545 = vmatprep.subr.bf16.mxu0 %v3401
        %3546 = vmatpush2.bf16.msra.mxu0 %v3400
        %3547 = vmatprep.subr.bf16.mxu0 %v3399
        %3548 = vmatpush2.bf16.msra.mxu0 %v3398
        %3549 = vmatprep.subr.bf16.mxu0 %v3397
        %3550 = vmatpush2.bf16.msra.mxu0 %v3396
        %3551 = vmatprep.mubr.bf16.mxu0 %v3091
        %3552 = vmatmul.mubr.bf16.gmra.mxu0 %v3090
        %v3553 = vpop.f32.mrf.mxu0
        %v3554 = vadd.f32 %v3511, %v3553
        %v3555 = vpop.f32.mrf.mxu0
        %v3556 = vadd.f32 %v3513, %v3555
        %v3557 = vpop.f32.mrf.mxu0
        %v3558 = vadd.f32 %v3515, %v3557
        %v3559 = vpop.f32.mrf.mxu0
        %v3560 = vadd.f32 %v3517, %v3559
        %3561 = vdwg.mxu0
        %v3562 = vadd.f32 %v2033, %v3554
        %v3563 = vadd.f32 %v2034, %v3556
        %v3564 = vadd.f32 %v2035, %v3558
        %v3565 = vadd.f32 %v2036, %v3560
        %3566 = vst [vmem:[#allocation2] sm:$0xff] %v3562
        %3567 = vst [vmem:[#allocation2 + $0x8] sm:$0xff] %v3563
        %3568 = vst [vmem:[#allocation2 + $0x10] sm:$0xff] %v3564
        %3569 = vst [vmem:[#allocation2 + $0x18] sm:$0xff] %v3565
        %p3570 = scmp.eq.s32.totalorder %s42, 1
        // Predicated region
        $region89: #{first_vicuna_forward.1} parent=63 // pred_check
          %p3571 = pneg %p3570
        $region90: #{first_vicuna_forward.1} parent=63 // pred_check_branch
          %3573 = sbr.rel (%p3571) target = $region92
        $region91: #{first_vicuna_forward.1} parent=63 // pred_region
          %v3574 = vld [vmem:[%s9] sm:$0x3]
          %v3575 = vunpack.c.l.bf16 %v3574
          %v3576 = vmul.f32 %v3562, %v3562
          %v3577 = vmul.f32 %v3563, %v3563
          %v3578 = vmul.f32 %v3564, %v3564
          %v3579 = vmul.f32 %v3565, %v3565
          %v3580 = vadd.f32 %v3576, %v3577
          %3581 = vadd.xlane.f32.xlu0 %v3580
          %v3582 = vpop.xlane.xlu0 %3581
          %v3583 = vadd.f32 %v3578, %v3579
          %3584 = vadd.xlane.f32.xlu0 %v3583
          %v3585 = vpop.xlane.xlu0 %3584
          %v3586 = vmul.f32 %v3582, %v732
          %v3587 = vmul.f32 %v3585, %v732
          %v3588 = vadd.f32 %v3586, 1e-06
          %v3589 = vadd.f32 %v3587, 1e-06
          %v3590 = vrsqrt.pop %v3588
          %v3591 = vrsqrt.pop %v3589
          %v3592 = vmul.f32 %v3562, %v3590
          %v3593 = vmul.f32 %v3563, %v3590
          %v3594 = vmul.f32 %v3564, %v3591
          %v3595 = vmul.f32 %v3565, %v3591
          %v3597 = vlaneseq
          %v3598 = vshrl.u32 %v3597, 7
          %v3599 = vsub.s32 0, %v3598
          %v3600 = vrot.slane %v3575, %v3599
          %v3601 = vlaneseq
          %v3602 = vshrl.u32 %v3601, 7
          %v3603 = vsub.s32 2, %v3602
          %v3604 = vrot.slane %v3575, %v3603
          %v3607 = vlaneseq
          %v3608 = vshrl.u32 %v3607, 7
          %v3609 = vsub.s32 0, %v3608
          %v3610 = vrot.slane %v3600, %v3609
          %v3611 = vlaneseq
          %v3612 = vshrl.u32 %v3611, 7
          %v3613 = vsub.s32 0, %v3612
          %v3614 = vrot.slane %v3604, %v3613
          %v3615 = vmul.f32 %v3592, %v3610
          %v3616 = vmul.f32 %v3593, %v3614
          %v3617 = vmul.f32 %v3594, %v3610
          %v3618 = vmul.f32 %v3595, %v3614
          %v3619 = vpack.c.bf16 %v3617, %v3615
          %v3620 = vpack.c.bf16 %v3618, %v3616
          %v3621 = vld [vmem:[#allocation11] sm:$0xff]
          %v3622 = vld [vmem:[#allocation11 + $0x8] sm:$0xff]
          %v3623 = vld [vmem:[#allocation11 + $0x10] sm:$0xff]
          %v3624 = vld [vmem:[#allocation11 + $0x18] sm:$0xff]
          %v3625 = vld [vmem:[#allocation11 + $0x20] sm:$0xff]
          %v3626 = vld [vmem:[#allocation11 + $0x28] sm:$0xff]
          %v3627 = vld [vmem:[#allocation11 + $0x30] sm:$0xff]
          %v3628 = vld [vmem:[#allocation11 + $0x38] sm:$0xff]
          %v3629 = vld [vmem:[#allocation11 + $0x40] sm:$0xff]
          %v3630 = vld [vmem:[#allocation11 + $0x48] sm:$0xff]
          %v3631 = vld [vmem:[#allocation11 + $0x50] sm:$0xff]
          %v3632 = vld [vmem:[#allocation11 + $0x58] sm:$0xff]
          %v3633 = vld [vmem:[#allocation11 + $0x60] sm:$0xff]
          %v3634 = vld [vmem:[#allocation11 + $0x68] sm:$0xff]
          %v3635 = vld [vmem:[#allocation11 + $0x70] sm:$0xff]
          %v3636 = vld [vmem:[#allocation11 + $0x78] sm:$0xff]
          %v3637 = vld [vmem:[#allocation11 + $0x80] sm:$0xff]
          %v3638 = vld [vmem:[#allocation11 + $0x88] sm:$0xff]
          %v3639 = vld [vmem:[#allocation11 + $0x90] sm:$0xff]
          %v3640 = vld [vmem:[#allocation11 + $0x98] sm:$0xff]
          %v3641 = vld [vmem:[#allocation11 + $0xa0] sm:$0xff]
          %v3642 = vld [vmem:[#allocation11 + $0xa8] sm:$0xff]
          %v3643 = vld [vmem:[#allocation11 + $0xb0] sm:$0xff]
          %v3644 = vld [vmem:[#allocation11 + $0xb8] sm:$0xff]
          %v3645 = vld [vmem:[#allocation11 + $0xc0] sm:$0xff]
          %v3646 = vld [vmem:[#allocation11 + $0xc8] sm:$0xff]
          %v3647 = vld [vmem:[#allocation11 + $0xd0] sm:$0xff]
          %v3648 = vld [vmem:[#allocation11 + $0xd8] sm:$0xff]
          %v3649 = vld [vmem:[#allocation11 + $0xe0] sm:$0xff]
          %v3650 = vld [vmem:[#allocation11 + $0xe8] sm:$0xff]
          %v3651 = vld [vmem:[#allocation11 + $0xf0] sm:$0xff]
          %v3652 = vld [vmem:[#allocation11 + $0xf8] sm:$0xff]
          %v3653 = vld [vmem:[#allocation11 + $0x100] sm:$0xff]
          %v3654 = vld [vmem:[#allocation11 + $0x108] sm:$0xff]
          %v3655 = vld [vmem:[#allocation11 + $0x110] sm:$0xff]
          %v3656 = vld [vmem:[#allocation11 + $0x118] sm:$0xff]
          %v3657 = vld [vmem:[#allocation11 + $0x120] sm:$0xff]
          %v3658 = vld [vmem:[#allocation11 + $0x128] sm:$0xff]
          %v3659 = vld [vmem:[#allocation11 + $0x130] sm:$0xff]
          %v3660 = vld [vmem:[#allocation11 + $0x138] sm:$0xff]
          %v3661 = vld [vmem:[#allocation11 + $0x140] sm:$0xff]
          %v3662 = vld [vmem:[#allocation11 + $0x148] sm:$0xff]
          %v3663 = vld [vmem:[#allocation11 + $0x150] sm:$0xff]
          %v3664 = vld [vmem:[#allocation11 + $0x158] sm:$0xff]
          %v3665 = vld [vmem:[#allocation11 + $0x160] sm:$0xff]
          %v3666 = vld [vmem:[#allocation11 + $0x168] sm:$0xff]
          %v3667 = vld [vmem:[#allocation11 + $0x170] sm:$0xff]
          %v3668 = vld [vmem:[#allocation11 + $0x178] sm:$0xff]
          %v3669 = vld [vmem:[#allocation11 + $0x180] sm:$0xff]
          %v3670 = vld [vmem:[#allocation11 + $0x188] sm:$0xff]
          %v3671 = vld [vmem:[#allocation11 + $0x190] sm:$0xff]
          %v3672 = vld [vmem:[#allocation11 + $0x198] sm:$0xff]
          %v3673 = vld [vmem:[#allocation11 + $0x1a0] sm:$0xff]
          %v3674 = vld [vmem:[#allocation11 + $0x1a8] sm:$0xff]
          %v3675 = vld [vmem:[#allocation11 + $0x1b0] sm:$0xff]
          %v3676 = vld [vmem:[#allocation11 + $0x1b8] sm:$0xff]
          %v3677 = vld [vmem:[#allocation11 + $0x1c0] sm:$0xff]
          %v3678 = vld [vmem:[#allocation11 + $0x1c8] sm:$0xff]
          %v3679 = vld [vmem:[#allocation11 + $0x1d0] sm:$0xff]
          %v3680 = vld [vmem:[#allocation11 + $0x1d8] sm:$0xff]
          %v3681 = vld [vmem:[#allocation11 + $0x1e0] sm:$0xff]
          %v3682 = vld [vmem:[#allocation11 + $0x1e8] sm:$0xff]
          %v3683 = vld [vmem:[#allocation11 + $0x1f0] sm:$0xff]
          %v3684 = vld [vmem:[#allocation11 + $0x1f8] sm:$0xff]
          %v3749 = vunpack.c.l.b16 %v3621
          %v3750 = vunpack.c.h.b16 %v3621
          %v3751 = vunpack.c.l.b16 %v3622
          %v3752 = vunpack.c.h.b16 %v3622
          %v3753 = vunpack.c.l.b16 %v3623
          %v3754 = vunpack.c.h.b16 %v3623
          %v3755 = vunpack.c.l.b16 %v3624
          %v3756 = vunpack.c.h.b16 %v3624
          %v3757 = vunpack.c.l.b16 %v3625
          %v3758 = vunpack.c.h.b16 %v3625
          %v3759 = vunpack.c.l.b16 %v3626
          %v3760 = vunpack.c.h.b16 %v3626
          %v3761 = vunpack.c.l.b16 %v3627
          %v3762 = vunpack.c.h.b16 %v3627
          %v3763 = vunpack.c.l.b16 %v3628
          %v3764 = vunpack.c.h.b16 %v3628
          %v3765 = vunpack.c.l.b16 %v3629
          %v3766 = vunpack.c.h.b16 %v3629
          %v3767 = vunpack.c.l.b16 %v3630
          %v3768 = vunpack.c.h.b16 %v3630
          %v3769 = vunpack.c.l.b16 %v3631
          %v3770 = vunpack.c.h.b16 %v3631
          %v3771 = vunpack.c.l.b16 %v3632
          %v3772 = vunpack.c.h.b16 %v3632
          %v3773 = vunpack.c.l.b16 %v3633
          %v3774 = vunpack.c.h.b16 %v3633
          %v3775 = vunpack.c.l.b16 %v3634
          %v3776 = vunpack.c.h.b16 %v3634
          %v3777 = vunpack.c.l.b16 %v3635
          %v3778 = vunpack.c.h.b16 %v3635
          %v3779 = vunpack.c.l.b16 %v3636
          %v3780 = vunpack.c.h.b16 %v3636
          %v3781 = vunpack.c.l.b16 %v3637
          %v3782 = vunpack.c.h.b16 %v3637
          %v3783 = vunpack.c.l.b16 %v3638
          %v3784 = vunpack.c.h.b16 %v3638
          %v3785 = vunpack.c.l.b16 %v3639
          %v3786 = vunpack.c.h.b16 %v3639
          %v3787 = vunpack.c.l.b16 %v3640
          %v3788 = vunpack.c.h.b16 %v3640
          %v3789 = vunpack.c.l.b16 %v3641
          %v3790 = vunpack.c.h.b16 %v3641
          %v3791 = vunpack.c.l.b16 %v3642
          %v3792 = vunpack.c.h.b16 %v3642
          %v3793 = vunpack.c.l.b16 %v3643
          %v3794 = vunpack.c.h.b16 %v3643
          %v3795 = vunpack.c.l.b16 %v3644
          %v3796 = vunpack.c.h.b16 %v3644
          %v3797 = vunpack.c.l.b16 %v3645
          %v3798 = vunpack.c.h.b16 %v3645
          %v3799 = vunpack.c.l.b16 %v3646
          %v3800 = vunpack.c.h.b16 %v3646
          %v3801 = vunpack.c.l.b16 %v3647
          %v3802 = vunpack.c.h.b16 %v3647
          %v3803 = vunpack.c.l.b16 %v3648
          %v3804 = vunpack.c.h.b16 %v3648
          %v3805 = vunpack.c.l.b16 %v3649
          %v3806 = vunpack.c.h.b16 %v3649
          %v3807 = vunpack.c.l.b16 %v3650
          %v3808 = vunpack.c.h.b16 %v3650
          %v3809 = vunpack.c.l.b16 %v3651
          %v3810 = vunpack.c.h.b16 %v3651
          %v3811 = vunpack.c.l.b16 %v3652
          %v3812 = vunpack.c.h.b16 %v3652
          %v3813 = vunpack.c.l.b16 %v3653
          %v3814 = vunpack.c.h.b16 %v3653
          %v3815 = vunpack.c.l.b16 %v3654
          %v3816 = vunpack.c.h.b16 %v3654
          %v3817 = vunpack.c.l.b16 %v3655
          %v3818 = vunpack.c.h.b16 %v3655
          %v3819 = vunpack.c.l.b16 %v3656
          %v3820 = vunpack.c.h.b16 %v3656
          %v3821 = vunpack.c.l.b16 %v3657
          %v3822 = vunpack.c.h.b16 %v3657
          %v3823 = vunpack.c.l.b16 %v3658
          %v3824 = vunpack.c.h.b16 %v3658
          %v3825 = vunpack.c.l.b16 %v3659
          %v3826 = vunpack.c.h.b16 %v3659
          %v3827 = vunpack.c.l.b16 %v3660
          %v3828 = vunpack.c.h.b16 %v3660
          %v3829 = vunpack.c.l.b16 %v3661
          %v3830 = vunpack.c.h.b16 %v3661
          %v3831 = vunpack.c.l.b16 %v3662
          %v3832 = vunpack.c.h.b16 %v3662
          %v3833 = vunpack.c.l.b16 %v3663
          %v3834 = vunpack.c.h.b16 %v3663
          %v3835 = vunpack.c.l.b16 %v3664
          %v3836 = vunpack.c.h.b16 %v3664
          %v3837 = vunpack.c.l.b16 %v3665
          %v3838 = vunpack.c.h.b16 %v3665
          %v3839 = vunpack.c.l.b16 %v3666
          %v3840 = vunpack.c.h.b16 %v3666
          %v3841 = vunpack.c.l.b16 %v3667
          %v3842 = vunpack.c.h.b16 %v3667
          %v3843 = vunpack.c.l.b16 %v3668
          %v3844 = vunpack.c.h.b16 %v3668
          %v3845 = vunpack.c.l.b16 %v3669
          %v3846 = vunpack.c.h.b16 %v3669
          %v3847 = vunpack.c.l.b16 %v3670
          %v3848 = vunpack.c.h.b16 %v3670
          %v3849 = vunpack.c.l.b16 %v3671
          %v3850 = vunpack.c.h.b16 %v3671
          %v3851 = vunpack.c.l.b16 %v3672
          %v3852 = vunpack.c.h.b16 %v3672
          %v3853 = vunpack.c.l.b16 %v3673
          %v3854 = vunpack.c.h.b16 %v3673
          %v3855 = vunpack.c.l.b16 %v3674
          %v3856 = vunpack.c.h.b16 %v3674
          %v3857 = vunpack.c.l.b16 %v3675
          %v3858 = vunpack.c.h.b16 %v3675
          %v3859 = vunpack.c.l.b16 %v3676
          %v3860 = vunpack.c.h.b16 %v3676
          %v3861 = vunpack.c.l.b16 %v3677
          %v3862 = vunpack.c.h.b16 %v3677
          %v3863 = vunpack.c.l.b16 %v3678
          %v3864 = vunpack.c.h.b16 %v3678
          %v3865 = vunpack.c.l.b16 %v3679
          %v3866 = vunpack.c.h.b16 %v3679
          %v3867 = vunpack.c.l.b16 %v3680
          %v3868 = vunpack.c.h.b16 %v3680
          %v3869 = vunpack.c.l.b16 %v3681
          %v3870 = vunpack.c.h.b16 %v3681
          %v3871 = vunpack.c.l.b16 %v3682
          %v3872 = vunpack.c.h.b16 %v3682
          %v3873 = vunpack.c.l.b16 %v3683
          %v3874 = vunpack.c.h.b16 %v3683
          %v3875 = vunpack.c.l.b16 %v3684
          %v3876 = vunpack.c.h.b16 %v3684
          %v3877 = vpack.c.b16 %v3753, %v3749
          %v3878 = vpack.c.b16 %v3754, %v3750
          %v3879 = vpack.c.b16 %v3755, %v3751
          %v3880 = vpack.c.b16 %v3756, %v3752
          %v3881 = vpack.c.b16 %v3761, %v3757
          %v3882 = vpack.c.b16 %v3762, %v3758
          %v3883 = vpack.c.b16 %v3763, %v3759
          %v3884 = vpack.c.b16 %v3764, %v3760
          %v3885 = vpack.c.b16 %v3769, %v3765
          %v3886 = vpack.c.b16 %v3770, %v3766
          %v3887 = vpack.c.b16 %v3771, %v3767
          %v3888 = vpack.c.b16 %v3772, %v3768
          %v3889 = vpack.c.b16 %v3777, %v3773
          %v3890 = vpack.c.b16 %v3778, %v3774
          %v3891 = vpack.c.b16 %v3779, %v3775
          %v3892 = vpack.c.b16 %v3780, %v3776
          %v3893 = vpack.c.b16 %v3785, %v3781
          %v3894 = vpack.c.b16 %v3786, %v3782
          %v3895 = vpack.c.b16 %v3787, %v3783
          %v3896 = vpack.c.b16 %v3788, %v3784
          %v3897 = vpack.c.b16 %v3793, %v3789
          %v3898 = vpack.c.b16 %v3794, %v3790
          %v3899 = vpack.c.b16 %v3795, %v3791
          %v3900 = vpack.c.b16 %v3796, %v3792
          %v3901 = vpack.c.b16 %v3801, %v3797
          %v3902 = vpack.c.b16 %v3802, %v3798
          %v3903 = vpack.c.b16 %v3803, %v3799
          %v3904 = vpack.c.b16 %v3804, %v3800
          %v3905 = vpack.c.b16 %v3809, %v3805
          %v3906 = vpack.c.b16 %v3810, %v3806
          %v3907 = vpack.c.b16 %v3811, %v3807
          %v3908 = vpack.c.b16 %v3812, %v3808
          %v3909 = vpack.c.b16 %v3817, %v3813
          %v3910 = vpack.c.b16 %v3818, %v3814
          %v3911 = vpack.c.b16 %v3819, %v3815
          %v3912 = vpack.c.b16 %v3820, %v3816
          %v3913 = vpack.c.b16 %v3825, %v3821
          %v3914 = vpack.c.b16 %v3826, %v3822
          %v3915 = vpack.c.b16 %v3827, %v3823
          %v3916 = vpack.c.b16 %v3828, %v3824
          %v3917 = vpack.c.b16 %v3833, %v3829
          %v3918 = vpack.c.b16 %v3834, %v3830
          %v3919 = vpack.c.b16 %v3835, %v3831
          %v3920 = vpack.c.b16 %v3836, %v3832
          %v3921 = vpack.c.b16 %v3841, %v3837
          %v3922 = vpack.c.b16 %v3842, %v3838
          %v3923 = vpack.c.b16 %v3843, %v3839
          %v3924 = vpack.c.b16 %v3844, %v3840
          %v3925 = vpack.c.b16 %v3849, %v3845
          %v3926 = vpack.c.b16 %v3850, %v3846
          %v3927 = vpack.c.b16 %v3851, %v3847
          %v3928 = vpack.c.b16 %v3852, %v3848
          %v3929 = vpack.c.b16 %v3857, %v3853
          %v3930 = vpack.c.b16 %v3858, %v3854
          %v3931 = vpack.c.b16 %v3859, %v3855
          %v3932 = vpack.c.b16 %v3860, %v3856
          %v3933 = vpack.c.b16 %v3865, %v3861
          %v3934 = vpack.c.b16 %v3866, %v3862
          %v3935 = vpack.c.b16 %v3867, %v3863
          %v3936 = vpack.c.b16 %v3868, %v3864
          %v3937 = vpack.c.b16 %v3873, %v3869
          %v3938 = vpack.c.b16 %v3874, %v3870
          %v3939 = vpack.c.b16 %v3875, %v3871
          %v3940 = vpack.c.b16 %v3876, %v3872
          %4005 = vmatprep.subr.bf16.mxu0 %v3906
          %4006 = vmatpush1.bf16.msra.mxu0 %v3905
          %4007 = vmatprep.subr.bf16.mxu0 %v3902
          %4008 = vmatpush1.bf16.msra.mxu0 %v3901
          %4009 = vmatprep.subr.bf16.mxu0 %v3898
          %4010 = vmatpush1.bf16.msra.mxu0 %v3897
          %4011 = vmatprep.subr.bf16.mxu0 %v3894
          %4012 = vmatpush1.bf16.msra.mxu0 %v3893
          %4013 = vmatprep.subr.bf16.mxu0 %v3890
          %4014 = vmatpush1.bf16.msra.mxu0 %v3889
          %4015 = vmatprep.subr.bf16.mxu0 %v3886
          %4016 = vmatpush1.bf16.msra.mxu0 %v3885
          %4017 = vmatprep.subr.bf16.mxu0 %v3882
          %4018 = vmatpush1.bf16.msra.mxu0 %v3881
          %4019 = vmatprep.subr.bf16.mxu0 %v3878
          %4020 = vmatpush1.bf16.msra.mxu0 %v3877
          %4021 = vmatprep.subr.bf16.mxu0 %v3938
          %4022 = vmatpush2.bf16.msra.mxu0 %v3937
          %4023 = vmatprep.subr.bf16.mxu0 %v3934
          %4024 = vmatpush2.bf16.msra.mxu0 %v3933
          %4025 = vmatprep.subr.bf16.mxu0 %v3930
          %4026 = vmatpush2.bf16.msra.mxu0 %v3929
          %4027 = vmatprep.subr.bf16.mxu0 %v3926
          %4028 = vmatpush2.bf16.msra.mxu0 %v3925
          %4029 = vmatprep.subr.bf16.mxu0 %v3922
          %4030 = vmatpush2.bf16.msra.mxu0 %v3921
          %4031 = vmatprep.subr.bf16.mxu0 %v3918
          %4032 = vmatpush2.bf16.msra.mxu0 %v3917
          %4033 = vmatprep.subr.bf16.mxu0 %v3914
          %4034 = vmatpush2.bf16.msra.mxu0 %v3913
          %4035 = vmatprep.subr.bf16.mxu0 %v3910
          %4036 = vmatpush2.bf16.msra.mxu0 %v3909
          %4037 = vmatprep.mubr.bf16.mxu0 %v3620
          %4038 = vmatmul.mubr.bf16.gmra.mxu0 %v3619
          %v4039 = vpop.f32.mrf.mxu0
          %v4040 = vadd.f32 0.0, %v4039
          %v4041 = vpop.f32.mrf.mxu0
          %v4042 = vadd.f32 0.0, %v4041
          %v4043 = vpop.f32.mrf.mxu0
          %v4044 = vadd.f32 0.0, %v4043
          %v4045 = vpop.f32.mrf.mxu0
          %v4046 = vadd.f32 0.0, %v4045
          %4047 = vdwg.mxu0
          %4048 = vmatprep.subr.bf16.mxu0 %v3908
          %4049 = vmatpush1.bf16.msra.mxu0 %v3907
          %4050 = vmatprep.subr.bf16.mxu0 %v3904
          %4051 = vmatpush1.bf16.msra.mxu0 %v3903
          %4052 = vmatprep.subr.bf16.mxu0 %v3900
          %4053 = vmatpush1.bf16.msra.mxu0 %v3899
          %4054 = vmatprep.subr.bf16.mxu0 %v3896
          %4055 = vmatpush1.bf16.msra.mxu0 %v3895
          %4056 = vmatprep.subr.bf16.mxu0 %v3892
          %4057 = vmatpush1.bf16.msra.mxu0 %v3891
          %4058 = vmatprep.subr.bf16.mxu0 %v3888
          %4059 = vmatpush1.bf16.msra.mxu0 %v3887
          %4060 = vmatprep.subr.bf16.mxu0 %v3884
          %4061 = vmatpush1.bf16.msra.mxu0 %v3883
          %4062 = vmatprep.subr.bf16.mxu0 %v3880
          %4063 = vmatpush1.bf16.msra.mxu0 %v3879
          %4064 = vmatprep.subr.bf16.mxu0 %v3940
          %4065 = vmatpush2.bf16.msra.mxu0 %v3939
          %4066 = vmatprep.subr.bf16.mxu0 %v3936
          %4067 = vmatpush2.bf16.msra.mxu0 %v3935
          %4068 = vmatprep.subr.bf16.mxu0 %v3932
          %4069 = vmatpush2.bf16.msra.mxu0 %v3931
          %4070 = vmatprep.subr.bf16.mxu0 %v3928
          %4071 = vmatpush2.bf16.msra.mxu0 %v3927
          %4072 = vmatprep.subr.bf16.mxu0 %v3924
          %4073 = vmatpush2.bf16.msra.mxu0 %v3923
          %4074 = vmatprep.subr.bf16.mxu0 %v3920
          %4075 = vmatpush2.bf16.msra.mxu0 %v3919
          %4076 = vmatprep.subr.bf16.mxu0 %v3916
          %4077 = vmatpush2.bf16.msra.mxu0 %v3915
          %4078 = vmatprep.subr.bf16.mxu0 %v3912
          %4079 = vmatpush2.bf16.msra.mxu0 %v3911
          %4080 = vmatprep.mubr.bf16.mxu0 %v3620
          %4081 = vmatmul.mubr.bf16.gmra.mxu0 %v3619
          %v4082 = vpop.f32.mrf.mxu0
          %v4083 = vadd.f32 0.0, %v4082
          %v4084 = vpop.f32.mrf.mxu0
          %v4085 = vadd.f32 0.0, %v4084
          %v4086 = vpop.f32.mrf.mxu0
          %v4087 = vadd.f32 0.0, %v4086
          %v4088 = vpop.f32.mrf.mxu0
          %v4089 = vadd.f32 0.0, %v4088
          %4090 = vdwg.mxu0
          %4091 = vst [vmem:[%s669] sm:$0xff] %v4040
          %4092 = vst [vmem:[%s669 + $0x8] sm:$0xff] %v4042
          %4093 = vst [vmem:[%s669 + $0x10] sm:$0xff] %v4083
          %4094 = vst [vmem:[%s669 + $0x18] sm:$0xff] %v4085
          %4095 = vst [vmem:[%s669 + $0x20] sm:$0xff] %v4044
          %4096 = vst [vmem:[%s669 + $0x28] sm:$0xff] %v4046
          %4097 = vst [vmem:[%s669 + $0x30] sm:$0xff] %v4087
          %4098 = vst [vmem:[%s669 + $0x38] sm:$0xff] %v4089
        $region92: #{first_vicuna_forward.1} parent=63 // pred_fallthru
          _
        %p4099 = scmp.lt.s32.totalorder %s41, 1
        %s4100 = scalar_select %p4099, %s41, 1
        %p4101 = scmp.lt.s32.totalorder %s42, 1
        %s4102 = scalar_select %p4101, %s42, 1
        %s4103 = smul.addr %s4102, 4
        %s4104 = smul.addr %s4100, 8
        %s4105 = sadd.s32 %s4103, %s4104
        %s4106 = smul.addr %s4105, 4
        %s4107 = scalar_lea.vmem %s11, %s4106
        %p4108 = scmp.lt.s32.totalorder %s41, 1
        %s4109 = scalar_select %p4108, %s41, 1
        %p4110 = scmp.lt.s32.totalorder %s42, 1
        %s4111 = scalar_select %p4110, %s42, 1
        %s4112 = smul.addr %s4111, 4
        %s4113 = smul.addr %s4109, 8
        %s4114 = sadd.s32 %s4112, %s4113
        %s4115 = smul.addr %s4114, 4
        %s4116 = scalar_lea.vmem %s12, %s4115
        %s4117 = sand.u32 %s379, 1
        %s4118 = scalar_lea.sflag [#allocation5], %s4117
        %s4119 = sand.u32 %s379, 1
        %s4120 = smul.addr %s4119, 64
        %s4121 = scalar_lea.vmem [#allocation12], %s4120
        // Predicated region
        $region93: #{first_vicuna_forward.1} parent=63 // pred_check
          %p4122 = pneg %p335
        $region94: #{first_vicuna_forward.1} parent=63 // pred_check_branch
          %4124 = sbr.rel (%p4122) target = $region96
        $region95: #{first_vicuna_forward.1} parent=63 // pred_region
          _
        $region96: #{first_vicuna_forward.1} parent=63 // pred_fallthru
          _
        // Predicated region
        $region97: #{first_vicuna_forward.1} parent=63 // pred_check
          %p4125 = pneg %p363
        $region98: #{first_vicuna_forward.1} parent=63 // pred_check_branch
          %4127 = sbr.rel (%p4125) target = $region100
        $region99: #{first_vicuna_forward.1} parent=63 // pred_region
          _
        $region100: #{first_vicuna_forward.1} parent=63 // pred_fallthru
          _
        // Predicated region
        $region101: #{first_vicuna_forward.1} parent=63 // pred_check
          %p4128 = pneg %p389
        $region102: #{first_vicuna_forward.1} parent=63 // pred_check_branch
          %4130 = sbr.rel (%p4128) target = $region104
        $region103: #{first_vicuna_forward.1} parent=63 // pred_region
          %s4132 = ssub.s32 1024, 1024
          %4133 = vsyncadd %s4118, %s4132
          %s4134 = smul.addr %s41, 8
          %s4135 = smul.addr %s4134, 128
          %s4136 = scalar_lea.hbm %s13, %s4135
          %s4137 = sshll.u32 %s4121, 4
          %s4138 = int_to_ptr.vmem [resolvable:$true] %s4137
          %4143 = dma.vmem_to_hbm [thread:$0]  %s4138, 1024, %s4136, %s4118, 512, 512, 32
        $region104: #{first_vicuna_forward.1} parent=63 // pred_fallthru
          _
      $region64: #{first_vicuna_forward.1} parent=5 // pred_fallthru
        _
      %p4144 = scmp.le.s32.totalorder 2, %s32
      // Predicated region
      $region105: #{first_vicuna_forward.1} parent=5 // pred_check
        %p4145 = pneg %p4144
      $region106: #{first_vicuna_forward.1} parent=5 // pred_check_branch
        %4147 = sbr.rel (%p4145) target = $region108
      $region107: #{first_vicuna_forward.1} parent=5 // pred_region
        %s4148 = ssub.s32 %s32, 2
        // Predicated region
        $region109: #{first_vicuna_forward.1} parent=107 // pred_check
          %p4149 = pneg %p341
        $region110: #{first_vicuna_forward.1} parent=107 // pred_check_branch
          %4151 = sbr.rel (%p4149) target = $region112
        $region111: #{first_vicuna_forward.1} parent=107 // pred_region
          %p4152 = scmp.lt.s32.totalorder %s43, 1
          %s4153 = scalar_select %p4152, %s43, 1
          %p4154 = scmp.lt.s32.totalorder %s44, 1
          %s4155 = scalar_select %p4154, %s44, 1
          %s4156 = smul.addr %s4155, 4
          %s4157 = smul.addr %s4153, 8
          %s4158 = sadd.s32 %s4156, %s4157
          %s4159 = smul.addr %s4158, 4
          %s4160 = scalar_lea.vmem %s11, %s4159
        $region112: #{first_vicuna_forward.1} parent=107 // pred_fallthru
          _
        // Predicated region
        $region113: #{first_vicuna_forward.1} parent=107 // pred_check
          %p4161 = pneg %p369
        $region114: #{first_vicuna_forward.1} parent=107 // pred_check_branch
          %4163 = sbr.rel (%p4161) target = $region116
        $region115: #{first_vicuna_forward.1} parent=107 // pred_region
          %p4164 = scmp.lt.s32.totalorder %s43, 1
          %s4165 = scalar_select %p4164, %s43, 1
          %p4166 = scmp.lt.s32.totalorder %s44, 1
          %s4167 = scalar_select %p4166, %s44, 1
          %s4168 = smul.addr %s4167, 4
          %s4169 = smul.addr %s4165, 8
          %s4170 = sadd.s32 %s4168, %s4169
          %s4171 = smul.addr %s4170, 4
          %s4172 = scalar_lea.vmem %s12, %s4171
        $region116: #{first_vicuna_forward.1} parent=107 // pred_fallthru
          _
        // Predicated region
        $region117: #{first_vicuna_forward.1} parent=107 // pred_check
          %p4173 = pneg %p395
        $region118: #{first_vicuna_forward.1} parent=107 // pred_check_branch
          %4175 = sbr.rel (%p4173) target = $region120
        $region119: #{first_vicuna_forward.1} parent=107 // pred_region
          %s4176 = sand.u32 %s380, 1
          %s4177 = scalar_lea.sflag [#allocation5], %s4176
          %s4178 = sand.u32 %s380, 1
          %s4179 = smul.addr %s4178, 64
          %s4180 = scalar_lea.vmem [#allocation12], %s4179
          %4181 = dma.done %s4177, 1024
        $region120: #{first_vicuna_forward.1} parent=107 // pred_fallthru
          _
      $region108: #{first_vicuna_forward.1} parent=5 // pred_fallthru
        _
    $region6: #{first_vicuna_forward.1} parent=1 // loop_footer
      %s36 = sadd.s32 1, %s32
    $region7: #{first_vicuna_forward.1} parent=1 // loop_footer_branch
      %31 = sbr.rel target = $region3
    $region8: #{first_vicuna_forward.1} parent=1 // loop_exit
      _
    %4182 = vsyncpa [#allocation4], 1
    %s4183 = scalar_lea.sflag [#allocation4], 1
    %4184 = vsyncpa %s4183, 1
    %4185 = vsyncpa [#allocation7], 1
    %s4186 = scalar_lea.sflag [#allocation7], 1
    %4187 = vsyncpa %s4186, 1
    %4188 = vsyncpa [#allocation10], 1
    %s4189 = scalar_lea.sflag [#allocation10], 1
    %4190 = vsyncpa %s4189, 1
    %4191 = vsyncpa [#allocation5], 1
    %s4192 = scalar_lea.sflag [#allocation5], 1
    %4193 = vsyncpa %s4192, 1

</llo_original>
